<compile_context>
chip_gen: v5e
topology: v5e:2x2
jax: 0.10.0
libtpu: 0.0.40
codegen_flags: <defaults>
</compile_context>

<pallas_src>
import functools

import jax
import jax.numpy as jnp
import numpy as np
from jax import lax
from jax.experimental import pallas as pl
from jax.experimental.pallas import tpu as pltpu

# encoder: Conv1d(1,10,20,3)+ReLU ; Conv1d(10,15,20,3)+Tanh
# decoder: ConvT1d(15,10,20,3)+ReLU ; ConvT1d(10,1,27,3)+Tanh
K1, K2, K3, K4 = 20, 20, 20, 27
C1, C2, C3 = 10, 15, 10
S = 3
Q4 = K4 // S                                   # 9 taps per output phase of the last ConvT
NW = K1 + K2 * C1 + K3 * C2 + Q4 * C3          # 610 packed-weight columns
_CW1, _CW2, _CW3, _CW4 = 0, K1, K1 + K2 * C1, K1 + K2 * C1 + K3 * C2


# ------------------------- fused Pallas kernel -------------------------

def _ae_kernel(xcol_ref, w_ref, b_ref, o_ref,
               zs_ref, hp_ref, im2_ref, im3_ref, im4_ref,
               *, bt, lo1, lo2, lo3, offs):
    f32 = jnp.float32
    hi = lax.Precision.HIGHEST
    nph = lo3 + Q4 - 1                         # columns per output phase of layer 4
    lpad3 = zs_ref.shape[1] // bt
    lpad4 = hp_ref.shape[1] // bt

    def mm(w, v):
        return jnp.dot(w, v, preferred_element_type=f32, precision=hi)

    # packed lane-dense 2-D im2col weights / biases
    w1 = w_ref[0:C1, _CW1:_CW1 + K1]           # (10, 20)
    w2 = w_ref[0:C2, _CW2:_CW2 + K2 * C1]      # (15, 200)
    w3 = w_ref[0:C3, _CW3:_CW3 + K3 * C2]      # (10, 300)
    w4 = w_ref[0:S, _CW4:_CW4 + Q4 * C3]       # (3, 90)
    b1 = b_ref[0:C1, 0:1]
    b2 = b_ref[0:C2, 1:2]
    b3 = b_ref[0:C3, 2:3]
    b4 = b_ref[0:S, 3:4]

    # ---- encoder layer 1: host-built im2col (phase-grouped columns) -> one matmul
    h = jnp.maximum(mm(w1, xcol_ref[0]) + b1, 0.0)           # (10, bt*lo1)

    # ---- encoder layer 2: stride-3 folded into slice offsets of phase-grouped h
    for k in range(K2):
        q, p = k // S, k % S                                  # k = 3q + p
        for b in range(bt):
            src = b * lo1 + offs[p] + q
            im2_ref[k * C1:(k + 1) * C1, b * lo2:(b + 1) * lo2] = h[:, src:src + lo2]
    z = jnp.tanh(mm(w2, im2_ref[...]) + b2)                   # (15, bt*lo2)

    # ---- decoder layer 3: zero-stuff (lhs dilation 3 + full pad) then one matmul
    zs_ref[...] = jnp.zeros(zs_ref.shape, f32)
    for b in range(bt):
        for i in range(lo2):
            c = b * lpad3 + (K3 - 1) + S * i
            zs_ref[:, c:c + 1] = z[:, b * lo2 + i:b * lo2 + i + 1]
    for k in range(K3):
        for b in range(bt):
            im3_ref[k * C2:(k + 1) * C2, b * lo3:(b + 1) * lo3] = \
                zs_ref[:, b * lpad3 + k:b * lpad3 + k + lo3]
    h2 = jnp.maximum(mm(w3, im3_ref[...]) + b3, 0.0)          # (10, bt*lo3)

    # ---- decoder layer 4: output-phase decomposition (3 phase rows), one matmul
    hp_ref[...] = jnp.zeros(hp_ref.shape, f32)
    for b in range(bt):
        hp_ref[:, b * lpad4 + (Q4 - 1):b * lpad4 + (Q4 - 1) + lo3] = \
            h2[:, b * lo3:(b + 1) * lo3]
    for q in range(Q4):
        for b in range(bt):
            src = b * lpad4 + (Q4 - 1) - q
            im4_ref[q * C3:(q + 1) * C3, b * nph:(b + 1) * nph] = hp_ref[:, src:src + nph]
    y = jnp.tanh(mm(w4, im4_ref[...]) + b4)                   # (3, bt*nph); y[p,m]=out[3m+p]

    for b in range(bt):
        o_ref[b] = y[:, b * nph:(b + 1) * nph]


# ------------------------- host-side wrapper -------------------------

def _batch_tile(n):
    bt = 1
    while bt < 8 and 4 * bt <= n:              # keep >= 2 grid steps (v7x: 2 TCs)
        bt *= 2
    return bt


def ae_forward(x, params):
    n, cin, L = x.shape
    assert cin == 1
    lo1 = (L - K1) // S + 1
    lo2 = (lo1 - K2) // S + 1
    lo3 = (lo2 - 1) * S + K3
    lo4 = (lo3 - 1) * S + K4
    assert L >= K1 and lo1 >= K2, "input too short for the AE receptive field"
    nph = lo4 // S                             # = lo3 + Q4 - 1
    lpad3 = (lo2 - 1) * S + 1 + 2 * (K3 - 1)
    lpad4 = lo3 + 2 * (Q4 - 1)

    # phase-grouped ordering of conv1 outputs: j = 0,3,6,...  then 1,4,...  then 2,5,...
    phase_len = [len(range(p, lo1, S)) for p in range(S)]
    offs = (0, phase_len[0], phase_len[0] + phase_len[1])
    jorder = np.concatenate([np.arange(p, lo1, S) for p in range(S)])
    idx = (S * jorder)[None, :] + np.arange(K1)[:, None]      # (K1, lo1) gather indices

    bt = _batch_tile(n)
    n_pad = -(-n // bt) * bt
    g = n_pad // bt
    xp = x.astype(jnp.float32)
    if n_pad != n:
        xp = jnp.concatenate([xp, jnp.zeros((n_pad - n, 1, L), jnp.float32)], axis=0)

    # host-side layer-1 im2col (pure layout plumbing, ~3 KB/sample): columns ordered
    # [sample b | phase p | position m] so every later slice in the kernel is contiguous.
    xcol = xp[:, 0, :][:, idx]                                 # (n_pad, K1, lo1)
    xcol = xcol.reshape(g, bt, K1, lo1).transpose(0, 2, 1, 3).reshape(g, K1, bt * lo1)

    # lane-dense 2-D im2col weights, packed with the biases into two slabs
    w1 = params["enc_w1"][:, 0, :]                                     # (10, 20)
    w2 = params["enc_w2"].transpose(0, 2, 1).reshape(C2, K2 * C1)      # (15, 200)
    w3 = jnp.flip(params["dec_w1"], -1).transpose(1, 2, 0).reshape(C3, K3 * C2)   # (10, 300)
    w4 = (params["dec_w2"][:, 0, :].T.reshape(Q4, S, C3)
          .transpose(1, 0, 2).reshape(S, Q4 * C3))                     # (3, 90)
    wpack = jnp.zeros((C2, NW), jnp.float32)
    wpack = wpack.at[:C1, _CW1:_CW1 + K1].set(w1)
    wpack = wpack.at[:C2, _CW2:_CW2 + K2 * C1].set(w2)
    wpack = wpack.at[:C3, _CW3:_CW3 + K3 * C2].set(w3)
    wpack = wpack.at[:S, _CW4:_CW4 + Q4 * C3].set(w4)
    bpack = jnp.zeros((C2, 4), jnp.float32)
    bpack = bpack.at[:C1, 0].set(params["enc_b1"])
    bpack = bpack.at[:C2, 1].set(params["enc_b2"])
    bpack = bpack.at[:C3, 2].set(params["dec_b1"])
    bpack = bpack.at[:S, 3].set(jnp.broadcast_to(params["dec_b2"], (S,)))

    kernel = functools.partial(_ae_kernel, bt=bt, lo1=lo1, lo2=lo2, lo3=lo3, offs=offs)
    yph = pl.pallas_call(
        kernel,
        out_shape=jax.ShapeDtypeStruct((n_pad, S, nph), jnp.float32),
        grid=(g,),
        in_specs=[
            pl.BlockSpec((1, K1, bt * lo1), lambda i: (i, 0, 0)),
            pl.BlockSpec((C2, NW), lambda i: (0, 0)),
            pl.BlockSpec((C2, 4), lambda i: (0, 0)),
        ],
        out_specs=pl.BlockSpec((bt, S, nph), lambda i: (i, 0, 0)),
        scratch_shapes=[
            pltpu.VMEM((C2, bt * lpad3), jnp.float32),        # zero-stuffed z
            pltpu.VMEM((C3, bt * lpad4), jnp.float32),        # padded h2
            pltpu.VMEM((K2 * C1, bt * lo2), jnp.float32),     # im2col layer 2
            pltpu.VMEM((K3 * C2, bt * lo3), jnp.float32),     # im2col layer 3
            pltpu.VMEM((Q4 * C3, bt * nph), jnp.float32),     # im2col layer 4
        ],
        compiler_params=pltpu.CompilerParams(
            dimension_semantics=("parallel",)),
    )(xcol, wpack, bpack)

    # interleave the 3 output phases back to natural order (layout plumbing, host-side)
    y = yph.transpose(0, 2, 1).reshape(n_pad, 1, lo4)
    return y[:n]


def init_params(key):
    ks = jax.random.split(key, 8)

    def u(k, shape, fan_in):
        bound = 1.0 / jnp.sqrt(jnp.float32(fan_in))
        return jax.random.uniform(k, shape, jnp.float32, -bound, bound)

    return {
        "enc_w1": u(ks[0], (10, 1, 20), 1 * 20),
        "enc_b1": u(ks[1], (10,), 1 * 20),
        "enc_w2": u(ks[2], (15, 10, 20), 10 * 20),
        "enc_b2": u(ks[3], (15,), 10 * 20),
        "dec_w1": u(ks[4], (15, 10, 20), 10 * 20),   # (Cin, Cout, K)
        "dec_b1": u(ks[5], (10,), 10 * 20),
        "dec_w2": u(ks[6], (10, 1, 27), 1 * 27),     # (Cin, Cout, K)
        "dec_b2": u(ks[7], (1,), 1 * 27),
    }


# ------------------------- reference (XLA conv) for sanity check -------------------------

def _conv1d_ref(x, w, b, stride):
    y = lax.conv_general_dilated(x, w, window_strides=(stride,), padding="VALID",
                                 dimension_numbers=("NCH", "OIH", "NCH"),
                                 precision=lax.Precision.HIGHEST)
    return y + b[None, :, None]


def _conv_transpose1d_ref(x, w, b, stride):
    k = w.shape[-1]
    w_eff = jnp.flip(w, axis=-1).transpose(1, 0, 2)
    y = lax.conv_general_dilated(x, w_eff, window_strides=(1,), padding=[(k - 1, k - 1)],
                                 lhs_dilation=(stride,),
                                 dimension_numbers=("NCH", "OIH", "NCH"),
                                 precision=lax.Precision.HIGHEST)
    return y + b[None, :, None]


def ae_forward_ref(x, p):
    h = jnp.maximum(_conv1d_ref(x, p["enc_w1"], p["enc_b1"], 3), 0.0)
    z = jnp.tanh(_conv1d_ref(h, p["enc_w2"], p["enc_b2"], 3))
    h2 = jnp.maximum(_conv_transpose1d_ref(z, p["dec_w1"], p["dec_b1"], 3), 0.0)
    return jnp.tanh(_conv_transpose1d_ref(h2, p["dec_w2"], p["dec_b2"], 3))


if __name__ == "__main__":
    key = jax.random.PRNGKey(0)
    pkey, xkey = jax.random.split(key)
    params = init_params(pkey)

    N, L = 2, 128                      # encoder: 128 -> 37 -> 6 ; decoder: 6 -> 35 -> 129
    x = jax.random.normal(xkey, (N, 1, L), jnp.float32)

    out = jax.block_until_ready(jax.jit(ae_forward)(x, params))
    assert out.shape == (N, 1, 129), out.shape

    ref = jax.block_until_ready(jax.jit(ae_forward_ref)(x, params))
    max_err = float(jnp.max(jnp.abs(out - ref)))
    # all matmuls run at HIGHEST precision now -> expect ~1e-5; keep a safe gate
    assert max_err < 1e-2, f"max abs err vs reference: {max_err}"

    print("KERNEL_OK")
</pallas_src>

<mosaic_0001>
module attributes {stable_mosaic.version = 11 : i64} {
  func.func @_ae_kernel(%arg0: i32, %arg1: memref<1x20x37xf32, #tpu.memory_space<vmem>>, %arg2: memref<15x610xf32, #tpu.memory_space<vmem>>, %arg3: memref<15x4xf32, #tpu.memory_space<vmem>>, %arg4: memref<1x3x43xf32, #tpu.memory_space<vmem>>, %arg5: memref<15x54xf32, #tpu.memory_space<vmem>>, %arg6: memref<10x51xf32, #tpu.memory_space<vmem>>, %arg7: memref<200x6xf32, #tpu.memory_space<vmem>>, %arg8: memref<300x35xf32, #tpu.memory_space<vmem>>, %arg9: memref<90x43xf32, #tpu.memory_space<vmem>>) attributes {dimension_semantics = [#tpu.dimension_semantics<parallel>], iteration_bounds = array<i64: 2>, scalar_prefetch = 0 : i64, scratch_operands = 5 : i64, tpu.core_type = #tpu.core_type<tc>, window_params = [{transform_indices = @transform_0, window_bounds = array<i64: 1, 20, 37>}, {pipeline_mode = #tpu.pipeline_mode<synchronous>, transform_indices = @transform_1, window_bounds = array<i64: 15, 610>}, {pipeline_mode = #tpu.pipeline_mode<synchronous>, transform_indices = @transform_2, window_bounds = array<i64: 15, 4>}, {transform_indices = @transform_3, window_bounds = array<i64: 1, 3, 43>}]} {
    %c0 = arith.constant 0 : index
    %c0_0 = arith.constant 0 : index
    %0 = vector.load %arg2[%c0, %c0_0] : memref<15x610xf32, #tpu.memory_space<vmem>>, vector<10x20xf32>
    %c0_1 = arith.constant 0 : index
    %c20 = arith.constant 20 : index
    %1 = vector.load %arg2[%c0_1, %c20] : memref<15x610xf32, #tpu.memory_space<vmem>>, vector<15x200xf32>
    %c0_2 = arith.constant 0 : index
    %c220 = arith.constant 220 : index
    %2 = vector.load %arg2[%c0_2, %c220] : memref<15x610xf32, #tpu.memory_space<vmem>>, vector<10x300xf32>
    %c0_3 = arith.constant 0 : index
    %c520 = arith.constant 520 : index
    %3 = vector.load %arg2[%c0_3, %c520] : memref<15x610xf32, #tpu.memory_space<vmem>>, vector<3x90xf32>
    %c0_4 = arith.constant 0 : index
    %c0_5 = arith.constant 0 : index
    %4 = vector.load %arg3[%c0_4, %c0_5] : memref<15x4xf32, #tpu.memory_space<vmem>>, vector<10x1xf32>
    %c0_6 = arith.constant 0 : index
    %c1 = arith.constant 1 : index
    %5 = vector.load %arg3[%c0_6, %c1] : memref<15x4xf32, #tpu.memory_space<vmem>>, vector<15x1xf32>
    %c0_7 = arith.constant 0 : index
    %c2 = arith.constant 2 : index
    %6 = vector.load %arg3[%c0_7, %c2] : memref<15x4xf32, #tpu.memory_space<vmem>>, vector<10x1xf32>
    %c0_8 = arith.constant 0 : index
    %c3 = arith.constant 3 : index
    %7 = vector.load %arg3[%c0_8, %c3] : memref<15x4xf32, #tpu.memory_space<vmem>>, vector<3x1xf32>
    %c0_9 = arith.constant 0 : index
    %c0_10 = arith.constant 0 : index
    %c0_11 = arith.constant 0 : index
    %8 = vector.load %arg1[%c0_9, %c0_10, %c0_11] : memref<1x20x37xf32, #tpu.memory_space<vmem>>, vector<1x20x37xf32>
    %9 = vector.shape_cast %8 : vector<1x20x37xf32> to vector<20x37xf32>
    %cst = arith.constant dense<0.000000e+00> : vector<10x37xf32>
    %10 = tpu.matmul %0, %9, %cst {dimension_numbers = #tpu.dot_dimension_numbers<[1], [0], [0], [1], [0, 0, 1, 1], [], []>, precision = #tpu.contract_precision<fp32>} : vector<10x20xf32>, vector<20x37xf32>, vector<10x37xf32> -> vector<10x37xf32>
    %11 = vector.broadcast %4 : vector<10x1xf32> to vector<10x37xf32>
    %12 = arith.addf %10, %11 : vector<10x37xf32>
    %cst_12 = arith.constant 0.000000e+00 : f32
    %13 = vector.broadcast %cst_12 : f32 to vector<10x37xf32>
    %14 = arith.maximumf %12, %13 : vector<10x37xf32>
    %15 = vector.extract_strided_slice %14 {offsets = [0, 0], sizes = [10, 6], strides = [1, 1]} : vector<10x37xf32> to vector<10x6xf32>
    %c0_13 = arith.constant 0 : index
    %c0_14 = arith.constant 0 : index
    %16 = vector.load %arg7[%c0_13, %c0_14] : memref<200x6xf32, #tpu.memory_space<vmem>>, vector<10x6xf32>
    tpu.vector_store %arg7[%c0_13, %c0_14], %15 {strides = array<i32>} : memref<200x6xf32, #tpu.memory_space<vmem>>, vector<10x6xf32>,
    %17 = vector.extract_strided_slice %14 {offsets = [0, 13], sizes = [10, 6], strides = [1, 1]} : vector<10x37xf32> to vector<10x6xf32>
    %c10 = arith.constant 10 : index
    %c0_15 = arith.constant 0 : index
    %18 = vector.load %arg7[%c10, %c0_15] : memref<200x6xf32, #tpu.memory_space<vmem>>, vector<10x6xf32>
    tpu.vector_store %arg7[%c10, %c0_15], %17 {strides = array<i32>} : memref<200x6xf32, #tpu.memory_space<vmem>>, vector<10x6xf32>,
    %19 = vector.extract_strided_slice %14 {offsets = [0, 25], sizes = [10, 6], strides = [1, 1]} : vector<10x37xf32> to vector<10x6xf32>
    %c20_16 = arith.constant 20 : index
    %c0_17 = arith.constant 0 : index
    %20 = vector.load %arg7[%c20_16, %c0_17] : memref<200x6xf32, #tpu.memory_space<vmem>>, vector<10x6xf32>
    tpu.vector_store %arg7[%c20_16, %c0_17], %19 {strides = array<i32>} : memref<200x6xf32, #tpu.memory_space<vmem>>, vector<10x6xf32>,
    %21 = vector.extract_strided_slice %14 {offsets = [0, 1], sizes = [10, 6], strides = [1, 1]} : vector<10x37xf32> to vector<10x6xf32>
    %c30 = arith.constant 30 : index
    %c0_18 = arith.constant 0 : index
    %22 = vector.load %arg7[%c30, %c0_18] : memref<200x6xf32, #tpu.memory_space<vmem>>, vector<10x6xf32>
    tpu.vector_store %arg7[%c30, %c0_18], %21 {strides = array<i32>} : memref<200x6xf32, #tpu.memory_space<vmem>>, vector<10x6xf32>,
    %23 = vector.extract_strided_slice %14 {offsets = [0, 14], sizes = [10, 6], strides = [1, 1]} : vector<10x37xf32> to vector<10x6xf32>
    %c40 = arith.constant 40 : index
    %c0_19 = arith.constant 0 : index
    %24 = vector.load %arg7[%c40, %c0_19] : memref<200x6xf32, #tpu.memory_space<vmem>>, vector<10x6xf32>
    tpu.vector_store %arg7[%c40, %c0_19], %23 {strides = array<i32>} : memref<200x6xf32, #tpu.memory_space<vmem>>, vector<10x6xf32>,
    %25 = vector.extract_strided_slice %14 {offsets = [0, 26], sizes = [10, 6], strides = [1, 1]} : vector<10x37xf32> to vector<10x6xf32>
    %c50 = arith.constant 50 : index
    %c0_20 = arith.constant 0 : index
    %26 = vector.load %arg7[%c50, %c0_20] : memref<200x6xf32, #tpu.memory_space<vmem>>, vector<10x6xf32>
    tpu.vector_store %arg7[%c50, %c0_20], %25 {strides = array<i32>} : memref<200x6xf32, #tpu.memory_space<vmem>>, vector<10x6xf32>,
    %27 = vector.extract_strided_slice %14 {offsets = [0, 2], sizes = [10, 6], strides = [1, 1]} : vector<10x37xf32> to vector<10x6xf32>
    %c60 = arith.constant 60 : index
    %c0_21 = arith.constant 0 : index
    %28 = vector.load %arg7[%c60, %c0_21] : memref<200x6xf32, #tpu.memory_space<vmem>>, vector<10x6xf32>
    tpu.vector_store %arg7[%c60, %c0_21], %27 {strides = array<i32>} : memref<200x6xf32, #tpu.memory_space<vmem>>, vector<10x6xf32>,
    %29 = vector.extract_strided_slice %14 {offsets = [0, 15], sizes = [10, 6], strides = [1, 1]} : vector<10x37xf32> to vector<10x6xf32>
    %c70 = arith.constant 70 : index
    %c0_22 = arith.constant 0 : index
    %30 = vector.load %arg7[%c70, %c0_22] : memref<200x6xf32, #tpu.memory_space<vmem>>, vector<10x6xf32>
    tpu.vector_store %arg7[%c70, %c0_22], %29 {strides = array<i32>} : memref<200x6xf32, #tpu.memory_space<vmem>>, vector<10x6xf32>,
    %31 = vector.extract_strided_slice %14 {offsets = [0, 27], sizes = [10, 6], strides = [1, 1]} : vector<10x37xf32> to vector<10x6xf32>
    %c80 = arith.constant 80 : index
    %c0_23 = arith.constant 0 : index
    %32 = vector.load %arg7[%c80, %c0_23] : memref<200x6xf32, #tpu.memory_space<vmem>>, vector<10x6xf32>
    tpu.vector_store %arg7[%c80, %c0_23], %31 {strides = array<i32>} : memref<200x6xf32, #tpu.memory_space<vmem>>, vector<10x6xf32>,
    %33 = vector.extract_strided_slice %14 {offsets = [0, 3], sizes = [10, 6], strides = [1, 1]} : vector<10x37xf32> to vector<10x6xf32>
    %c90 = arith.constant 90 : index
    %c0_24 = arith.constant 0 : index
    %34 = vector.load %arg7[%c90, %c0_24] : memref<200x6xf32, #tpu.memory_space<vmem>>, vector<10x6xf32>
    tpu.vector_store %arg7[%c90, %c0_24], %33 {strides = array<i32>} : memref<200x6xf32, #tpu.memory_space<vmem>>, vector<10x6xf32>,
    %35 = vector.extract_strided_slice %14 {offsets = [0, 16], sizes = [10, 6], strides = [1, 1]} : vector<10x37xf32> to vector<10x6xf32>
    %c100 = arith.constant 100 : index
    %c0_25 = arith.constant 0 : index
    %36 = vector.load %arg7[%c100, %c0_25] : memref<200x6xf32, #tpu.memory_space<vmem>>, vector<10x6xf32>
    tpu.vector_store %arg7[%c100, %c0_25], %35 {strides = array<i32>} : memref<200x6xf32, #tpu.memory_space<vmem>>, vector<10x6xf32>,
    %37 = vector.extract_strided_slice %14 {offsets = [0, 28], sizes = [10, 6], strides = [1, 1]} : vector<10x37xf32> to vector<10x6xf32>
    %c110 = arith.constant 110 : index
    %c0_26 = arith.constant 0 : index
    %38 = vector.load %arg7[%c110, %c0_26] : memref<200x6xf32, #tpu.memory_space<vmem>>, vector<10x6xf32>
    tpu.vector_store %arg7[%c110, %c0_26], %37 {strides = array<i32>} : memref<200x6xf32, #tpu.memory_space<vmem>>, vector<10x6xf32>,
    %39 = vector.extract_strided_slice %14 {offsets = [0, 4], sizes = [10, 6], strides = [1, 1]} : vector<10x37xf32> to vector<10x6xf32>
    %c120 = arith.constant 120 : index
    %c0_27 = arith.constant 0 : index
    %40 = vector.load %arg7[%c120, %c0_27] : memref<200x6xf32, #tpu.memory_space<vmem>>, vector<10x6xf32>
    tpu.vector_store %arg7[%c120, %c0_27], %39 {strides = array<i32>} : memref<200x6xf32, #tpu.memory_space<vmem>>, vector<10x6xf32>,
    %41 = vector.extract_strided_slice %14 {offsets = [0, 17], sizes = [10, 6], strides = [1, 1]} : vector<10x37xf32> to vector<10x6xf32>
    %c130 = arith.constant 130 : index
    %c0_28 = arith.constant 0 : index
    %42 = vector.load %arg7[%c130, %c0_28] : memref<200x6xf32, #tpu.memory_space<vmem>>, vector<10x6xf32>
    tpu.vector_store %arg7[%c130, %c0_28], %41 {strides = array<i32>} : memref<200x6xf32, #tpu.memory_space<vmem>>, vector<10x6xf32>,
    %43 = vector.extract_strided_slice %14 {offsets = [0, 29], sizes = [10, 6], strides = [1, 1]} : vector<10x37xf32> to vector<10x6xf32>
    %c140 = arith.constant 140 : index
    %c0_29 = arith.constant 0 : index
    %44 = vector.load %arg7[%c140, %c0_29] : memref<200x6xf32, #tpu.memory_space<vmem>>, vector<10x6xf32>
    tpu.vector_store %arg7[%c140, %c0_29], %43 {strides = array<i32>} : memref<200x6xf32, #tpu.memory_space<vmem>>, vector<10x6xf32>,
    %45 = vector.extract_strided_slice %14 {offsets = [0, 5], sizes = [10, 6], strides = [1, 1]} : vector<10x37xf32> to vector<10x6xf32>
    %c150 = arith.constant 150 : index
    %c0_30 = arith.constant 0 : index
    %46 = vector.load %arg7[%c150, %c0_30] : memref<200x6xf32, #tpu.memory_space<vmem>>, vector<10x6xf32>
    tpu.vector_store %arg7[%c150, %c0_30], %45 {strides = array<i32>} : memref<200x6xf32, #tpu.memory_space<vmem>>, vector<10x6xf32>,
    %47 = vector.extract_strided_slice %14 {offsets = [0, 18], sizes = [10, 6], strides = [1, 1]} : vector<10x37xf32> to vector<10x6xf32>
    %c160 = arith.constant 160 : index
    %c0_31 = arith.constant 0 : index
    %48 = vector.load %arg7[%c160, %c0_31] : memref<200x6xf32, #tpu.memory_space<vmem>>, vector<10x6xf32>
    tpu.vector_store %arg7[%c160, %c0_31], %47 {strides = array<i32>} : memref<200x6xf32, #tpu.memory_space<vmem>>, vector<10x6xf32>,
    %49 = vector.extract_strided_slice %14 {offsets = [0, 30], sizes = [10, 6], strides = [1, 1]} : vector<10x37xf32> to vector<10x6xf32>
    %c170 = arith.constant 170 : index
    %c0_32 = arith.constant 0 : index
    %50 = vector.load %arg7[%c170, %c0_32] : memref<200x6xf32, #tpu.memory_space<vmem>>, vector<10x6xf32>
    tpu.vector_store %arg7[%c170, %c0_32], %49 {strides = array<i32>} : memref<200x6xf32, #tpu.memory_space<vmem>>, vector<10x6xf32>,
    %51 = vector.extract_strided_slice %14 {offsets = [0, 6], sizes = [10, 6], strides = [1, 1]} : vector<10x37xf32> to vector<10x6xf32>
    %c180 = arith.constant 180 : index
    %c0_33 = arith.constant 0 : index
    %52 = vector.load %arg7[%c180, %c0_33] : memref<200x6xf32, #tpu.memory_space<vmem>>, vector<10x6xf32>
    tpu.vector_store %arg7[%c180, %c0_33], %51 {strides = array<i32>} : memref<200x6xf32, #tpu.memory_space<vmem>>, vector<10x6xf32>,
    %53 = vector.extract_strided_slice %14 {offsets = [0, 19], sizes = [10, 6], strides = [1, 1]} : vector<10x37xf32> to vector<10x6xf32>
    %c190 = arith.constant 190 : index
    %c0_34 = arith.constant 0 : index
    %54 = vector.load %arg7[%c190, %c0_34] : memref<200x6xf32, #tpu.memory_space<vmem>>, vector<10x6xf32>
    tpu.vector_store %arg7[%c190, %c0_34], %53 {strides = array<i32>} : memref<200x6xf32, #tpu.memory_space<vmem>>, vector<10x6xf32>,
    %c0_35 = arith.constant 0 : index
    %c0_36 = arith.constant 0 : index
    %55 = vector.load %arg7[%c0_35, %c0_36] : memref<200x6xf32, #tpu.memory_space<vmem>>, vector<200x6xf32>
    %cst_37 = arith.constant dense<0.000000e+00> : vector<15x6xf32>
    %56 = tpu.matmul %1, %55, %cst_37 {dimension_numbers = #tpu.dot_dimension_numbers<[1], [0], [0], [1], [0, 0, 1, 1], [], []>, precision = #tpu.contract_precision<fp32>} : vector<15x200xf32>, vector<200x6xf32>, vector<15x6xf32> -> vector<15x6xf32>
    %57 = vector.broadcast %5 : vector<15x1xf32> to vector<15x6xf32>
    %58 = arith.addf %56, %57 : vector<15x6xf32>
    %59 = math.tanh %58 : vector<15x6xf32>
    %cst_38 = arith.constant 0.000000e+00 : f32
    %60 = vector.broadcast %cst_38 : f32 to vector<15x54xf32>
    %c0_39 = arith.constant 0 : index
    %c0_40 = arith.constant 0 : index
    %61 = vector.load %arg5[%c0_39, %c0_40] : memref<15x54xf32, #tpu.memory_space<vmem>>, vector<15x54xf32>
    tpu.vector_store %arg5[%c0_39, %c0_40], %60 {strides = array<i32>} : memref<15x54xf32, #tpu.memory_space<vmem>>, vector<15x54xf32>,
    %62 = vector.extract_strided_slice %59 {offsets = [0, 0], sizes = [15, 1], strides = [1, 1]} : vector<15x6xf32> to vector<15x1xf32>
    %c0_41 = arith.constant 0 : index
    %c19 = arith.constant 19 : index
    %63 = vector.load %arg5[%c0_41, %c19] : memref<15x54xf32, #tpu.memory_space<vmem>>, vector<15x1xf32>
    tpu.vector_store %arg5[%c0_41, %c19], %62 {strides = array<i32>} : memref<15x54xf32, #tpu.memory_space<vmem>>, vector<15x1xf32>,
    %64 = vector.extract_strided_slice %59 {offsets = [0, 1], sizes = [15, 1], strides = [1, 1]} : vector<15x6xf32> to vector<15x1xf32>
    %c0_42 = arith.constant 0 : index
    %c22 = arith.constant 22 : index
    %65 = vector.load %arg5[%c0_42, %c22] : memref<15x54xf32, #tpu.memory_space<vmem>>, vector<15x1xf32>
    tpu.vector_store %arg5[%c0_42, %c22], %64 {strides = array<i32>} : memref<15x54xf32, #tpu.memory_space<vmem>>, vector<15x1xf32>,
    %66 = vector.extract_strided_slice %59 {offsets = [0, 2], sizes = [15, 1], strides = [1, 1]} : vector<15x6xf32> to vector<15x1xf32>
    %c0_43 = arith.constant 0 : index
    %c25 = arith.constant 25 : index
    %67 = vector.load %arg5[%c0_43, %c25] : memref<15x54xf32, #tpu.memory_space<vmem>>, vector<15x1xf32>
    tpu.vector_store %arg5[%c0_43, %c25], %66 {strides = array<i32>} : memref<15x54xf32, #tpu.memory_space<vmem>>, vector<15x1xf32>,
    %68 = vector.extract_strided_slice %59 {offsets = [0, 3], sizes = [15, 1], strides = [1, 1]} : vector<15x6xf32> to vector<15x1xf32>
    %c0_44 = arith.constant 0 : index
    %c28 = arith.constant 28 : index
    %69 = vector.load %arg5[%c0_44, %c28] : memref<15x54xf32, #tpu.memory_space<vmem>>, vector<15x1xf32>
    tpu.vector_store %arg5[%c0_44, %c28], %68 {strides = array<i32>} : memref<15x54xf32, #tpu.memory_space<vmem>>, vector<15x1xf32>,
    %70 = vector.extract_strided_slice %59 {offsets = [0, 4], sizes = [15, 1], strides = [1, 1]} : vector<15x6xf32> to vector<15x1xf32>
    %c0_45 = arith.constant 0 : index
    %c31 = arith.constant 31 : index
    %71 = vector.load %arg5[%c0_45, %c31] : memref<15x54xf32, #tpu.memory_space<vmem>>, vector<15x1xf32>
    tpu.vector_store %arg5[%c0_45, %c31], %70 {strides = array<i32>} : memref<15x54xf32, #tpu.memory_space<vmem>>, vector<15x1xf32>,
    %72 = vector.extract_strided_slice %59 {offsets = [0, 5], sizes = [15, 1], strides = [1, 1]} : vector<15x6xf32> to vector<15x1xf32>
    %c0_46 = arith.constant 0 : index
    %c34 = arith.constant 34 : index
    %73 = vector.load %arg5[%c0_46, %c34] : memref<15x54xf32, #tpu.memory_space<vmem>>, vector<15x1xf32>
    tpu.vector_store %arg5[%c0_46, %c34], %72 {strides = array<i32>} : memref<15x54xf32, #tpu.memory_space<vmem>>, vector<15x1xf32>,
    %c0_47 = arith.constant 0 : index
    %c0_48 = arith.constant 0 : index
    %74 = vector.load %arg5[%c0_47, %c0_48] : memref<15x54xf32, #tpu.memory_space<vmem>>, vector<15x35xf32>
    %c0_49 = arith.constant 0 : index
    %c0_50 = arith.constant 0 : index
    %75 = vector.load %arg8[%c0_49, %c0_50] : memref<300x35xf32, #tpu.memory_space<vmem>>, vector<15x35xf32>
    tpu.vector_store %arg8[%c0_49, %c0_50], %74 {strides = array<i32>} : memref<300x35xf32, #tpu.memory_space<vmem>>, vector<15x35xf32>,
    %c0_51 = arith.constant 0 : index
    %c1_52 = arith.constant 1 : index
    %76 = vector.load %arg5[%c0_51, %c1_52] : memref<15x54xf32, #tpu.memory_space<vmem>>, vector<15x35xf32>
    %c15 = arith.constant 15 : index
    %c0_53 = arith.constant 0 : index
    %77 = vector.load %arg8[%c15, %c0_53] : memref<300x35xf32, #tpu.memory_space<vmem>>, vector<15x35xf32>
    tpu.vector_store %arg8[%c15, %c0_53], %76 {strides = array<i32>} : memref<300x35xf32, #tpu.memory_space<vmem>>, vector<15x35xf32>,
    %c0_54 = arith.constant 0 : index
    %c2_55 = arith.constant 2 : index
    %78 = vector.load %arg5[%c0_54, %c2_55] : memref<15x54xf32, #tpu.memory_space<vmem>>, vector<15x35xf32>
    %c30_56 = arith.constant 30 : index
    %c0_57 = arith.constant 0 : index
    %79 = vector.load %arg8[%c30_56, %c0_57] : memref<300x35xf32, #tpu.memory_space<vmem>>, vector<15x35xf32>
    tpu.vector_store %arg8[%c30_56, %c0_57], %78 {strides = array<i32>} : memref<300x35xf32, #tpu.memory_space<vmem>>, vector<15x35xf32>,
    %c0_58 = arith.constant 0 : index
    %c3_59 = arith.constant 3 : index
    %80 = vector.load %arg5[%c0_58, %c3_59] : memref<15x54xf32, #tpu.memory_space<vmem>>, vector<15x35xf32>
    %c45 = arith.constant 45 : index
    %c0_60 = arith.constant 0 : index
    %81 = vector.load %arg8[%c45, %c0_60] : memref<300x35xf32, #tpu.memory_space<vmem>>, vector<15x35xf32>
    tpu.vector_store %arg8[%c45, %c0_60], %80 {strides = array<i32>} : memref<300x35xf32, #tpu.memory_space<vmem>>, vector<15x35xf32>,
    %c0_61 = arith.constant 0 : index
    %c4 = arith.constant 4 : index
    %82 = vector.load %arg5[%c0_61, %c4] : memref<15x54xf32, #tpu.memory_space<vmem>>, vector<15x35xf32>
    %c60_62 = arith.constant 60 : index
    %c0_63 = arith.constant 0 : index
    %83 = vector.load %arg8[%c60_62, %c0_63] : memref<300x35xf32, #tpu.memory_space<vmem>>, vector<15x35xf32>
    tpu.vector_store %arg8[%c60_62, %c0_63], %82 {strides = array<i32>} : memref<300x35xf32, #tpu.memory_space<vmem>>, vector<15x35xf32>,
    %c0_64 = arith.constant 0 : index
    %c5 = arith.constant 5 : index
    %84 = vector.load %arg5[%c0_64, %c5] : memref<15x54xf32, #tpu.memory_space<vmem>>, vector<15x35xf32>
    %c75 = arith.constant 75 : index
    %c0_65 = arith.constant 0 : index
    %85 = vector.load %arg8[%c75, %c0_65] : memref<300x35xf32, #tpu.memory_space<vmem>>, vector<15x35xf32>
    tpu.vector_store %arg8[%c75, %c0_65], %84 {strides = array<i32>} : memref<300x35xf32, #tpu.memory_space<vmem>>, vector<15x35xf32>,
    %c0_66 = arith.constant 0 : index
    %c6 = arith.constant 6 : index
    %86 = vector.load %arg5[%c0_66, %c6] : memref<15x54xf32, #tpu.memory_space<vmem>>, vector<15x35xf32>
    %c90_67 = arith.constant 90 : index
    %c0_68 = arith.constant 0 : index
    %87 = vector.load %arg8[%c90_67, %c0_68] : memref<300x35xf32, #tpu.memory_space<vmem>>, vector<15x35xf32>
    tpu.vector_store %arg8[%c90_67, %c0_68], %86 {strides = array<i32>} : memref<300x35xf32, #tpu.memory_space<vmem>>, vector<15x35xf32>,
    %c0_69 = arith.constant 0 : index
    %c7 = arith.constant 7 : index
    %88 = vector.load %arg5[%c0_69, %c7] : memref<15x54xf32, #tpu.memory_space<vmem>>, vector<15x35xf32>
    %c105 = arith.constant 105 : index
    %c0_70 = arith.constant 0 : index
    %89 = vector.load %arg8[%c105, %c0_70] : memref<300x35xf32, #tpu.memory_space<vmem>>, vector<15x35xf32>
    tpu.vector_store %arg8[%c105, %c0_70], %88 {strides = array<i32>} : memref<300x35xf32, #tpu.memory_space<vmem>>, vector<15x35xf32>,
    %c0_71 = arith.constant 0 : index
    %c8 = arith.constant 8 : index
    %90 = vector.load %arg5[%c0_71, %c8] : memref<15x54xf32, #tpu.memory_space<vmem>>, vector<15x35xf32>
    %c120_72 = arith.constant 120 : index
    %c0_73 = arith.constant 0 : index
    %91 = vector.load %arg8[%c120_72, %c0_73] : memref<300x35xf32, #tpu.memory_space<vmem>>, vector<15x35xf32>
    tpu.vector_store %arg8[%c120_72, %c0_73], %90 {strides = array<i32>} : memref<300x35xf32, #tpu.memory_space<vmem>>, vector<15x35xf32>,
    %c0_74 = arith.constant 0 : index
    %c9 = arith.constant 9 : index
    %92 = vector.load %arg5[%c0_74, %c9] : memref<15x54xf32, #tpu.memory_space<vmem>>, vector<15x35xf32>
    %c135 = arith.constant 135 : index
    %c0_75 = arith.constant 0 : index
    %93 = vector.load %arg8[%c135, %c0_75] : memref<300x35xf32, #tpu.memory_space<vmem>>, vector<15x35xf32>
    tpu.vector_store %arg8[%c135, %c0_75], %92 {strides = array<i32>} : memref<300x35xf32, #tpu.memory_space<vmem>>, vector<15x35xf32>,
    %c0_76 = arith.constant 0 : index
    %c10_77 = arith.constant 10 : index
    %94 = vector.load %arg5[%c0_76, %c10_77] : memref<15x54xf32, #tpu.memory_space<vmem>>, vector<15x35xf32>
    %c150_78 = arith.constant 150 : index
    %c0_79 = arith.constant 0 : index
    %95 = vector.load %arg8[%c150_78, %c0_79] : memref<300x35xf32, #tpu.memory_space<vmem>>, vector<15x35xf32>
    tpu.vector_store %arg8[%c150_78, %c0_79], %94 {strides = array<i32>} : memref<300x35xf32, #tpu.memory_space<vmem>>, vector<15x35xf32>,
    %c0_80 = arith.constant 0 : index
    %c11 = arith.constant 11 : index
    %96 = vector.load %arg5[%c0_80, %c11] : memref<15x54xf32, #tpu.memory_space<vmem>>, vector<15x35xf32>
    %c165 = arith.constant 165 : index
    %c0_81 = arith.constant 0 : index
    %97 = vector.load %arg8[%c165, %c0_81] : memref<300x35xf32, #tpu.memory_space<vmem>>, vector<15x35xf32>
    tpu.vector_store %arg8[%c165, %c0_81], %96 {strides = array<i32>} : memref<300x35xf32, #tpu.memory_space<vmem>>, vector<15x35xf32>,
    %c0_82 = arith.constant 0 : index
    %c12 = arith.constant 12 : index
    %98 = vector.load %arg5[%c0_82, %c12] : memref<15x54xf32, #tpu.memory_space<vmem>>, vector<15x35xf32>
    %c180_83 = arith.constant 180 : index
    %c0_84 = arith.constant 0 : index
    %99 = vector.load %arg8[%c180_83, %c0_84] : memref<300x35xf32, #tpu.memory_space<vmem>>, vector<15x35xf32>
    tpu.vector_store %arg8[%c180_83, %c0_84], %98 {strides = array<i32>} : memref<300x35xf32, #tpu.memory_space<vmem>>, vector<15x35xf32>,
    %c0_85 = arith.constant 0 : index
    %c13 = arith.constant 13 : index
    %100 = vector.load %arg5[%c0_85, %c13] : memref<15x54xf32, #tpu.memory_space<vmem>>, vector<15x35xf32>
    %c195 = arith.constant 195 : index
    %c0_86 = arith.constant 0 : index
    %101 = vector.load %arg8[%c195, %c0_86] : memref<300x35xf32, #tpu.memory_space<vmem>>, vector<15x35xf32>
    tpu.vector_store %arg8[%c195, %c0_86], %100 {strides = array<i32>} : memref<300x35xf32, #tpu.memory_space<vmem>>, vector<15x35xf32>,
    %c0_87 = arith.constant 0 : index
    %c14 = arith.constant 14 : index
    %102 = vector.load %arg5[%c0_87, %c14] : memref<15x54xf32, #tpu.memory_space<vmem>>, vector<15x35xf32>
    %c210 = arith.constant 210 : index
    %c0_88 = arith.constant 0 : index
    %103 = vector.load %arg8[%c210, %c0_88] : memref<300x35xf32, #tpu.memory_space<vmem>>, vector<15x35xf32>
    tpu.vector_store %arg8[%c210, %c0_88], %102 {strides = array<i32>} : memref<300x35xf32, #tpu.memory_space<vmem>>, vector<15x35xf32>,
    %c0_89 = arith.constant 0 : index
    %c15_90 = arith.constant 15 : index
    %104 = vector.load %arg5[%c0_89, %c15_90] : memref<15x54xf32, #tpu.memory_space<vmem>>, vector<15x35xf32>
    %c225 = arith.constant 225 : index
    %c0_91 = arith.constant 0 : index
    %105 = vector.load %arg8[%c225, %c0_91] : memref<300x35xf32, #tpu.memory_space<vmem>>, vector<15x35xf32>
    tpu.vector_store %arg8[%c225, %c0_91], %104 {strides = array<i32>} : memref<300x35xf32, #tpu.memory_space<vmem>>, vector<15x35xf32>,
    %c0_92 = arith.constant 0 : index
    %c16 = arith.constant 16 : index
    %106 = vector.load %arg5[%c0_92, %c16] : memref<15x54xf32, #tpu.memory_space<vmem>>, vector<15x35xf32>
    %c240 = arith.constant 240 : index
    %c0_93 = arith.constant 0 : index
    %107 = vector.load %arg8[%c240, %c0_93] : memref<300x35xf32, #tpu.memory_space<vmem>>, vector<15x35xf32>
    tpu.vector_store %arg8[%c240, %c0_93], %106 {strides = array<i32>} : memref<300x35xf32, #tpu.memory_space<vmem>>, vector<15x35xf32>,
    %c0_94 = arith.constant 0 : index
    %c17 = arith.constant 17 : index
    %108 = vector.load %arg5[%c0_94, %c17] : memref<15x54xf32, #tpu.memory_space<vmem>>, vector<15x35xf32>
    %c255 = arith.constant 255 : index
    %c0_95 = arith.constant 0 : index
    %109 = vector.load %arg8[%c255, %c0_95] : memref<300x35xf32, #tpu.memory_space<vmem>>, vector<15x35xf32>
    tpu.vector_store %arg8[%c255, %c0_95], %108 {strides = array<i32>} : memref<300x35xf32, #tpu.memory_space<vmem>>, vector<15x35xf32>,
    %c0_96 = arith.constant 0 : index
    %c18 = arith.constant 18 : index
    %110 = vector.load %arg5[%c0_96, %c18] : memref<15x54xf32, #tpu.memory_space<vmem>>, vector<15x35xf32>
    %c270 = arith.constant 270 : index
    %c0_97 = arith.constant 0 : index
    %111 = vector.load %arg8[%c270, %c0_97] : memref<300x35xf32, #tpu.memory_space<vmem>>, vector<15x35xf32>
    tpu.vector_store %arg8[%c270, %c0_97], %110 {strides = array<i32>} : memref<300x35xf32, #tpu.memory_space<vmem>>, vector<15x35xf32>,
    %c0_98 = arith.constant 0 : index
    %c19_99 = arith.constant 19 : index
    %112 = vector.load %arg5[%c0_98, %c19_99] : memref<15x54xf32, #tpu.memory_space<vmem>>, vector<15x35xf32>
    %c285 = arith.constant 285 : index
    %c0_100 = arith.constant 0 : index
    %113 = vector.load %arg8[%c285, %c0_100] : memref<300x35xf32, #tpu.memory_space<vmem>>, vector<15x35xf32>
    tpu.vector_store %arg8[%c285, %c0_100], %112 {strides = array<i32>} : memref<300x35xf32, #tpu.memory_space<vmem>>, vector<15x35xf32>,
    %c0_101 = arith.constant 0 : index
    %c0_102 = arith.constant 0 : index
    %114 = vector.load %arg8[%c0_101, %c0_102] : memref<300x35xf32, #tpu.memory_space<vmem>>, vector<300x35xf32>
    %cst_103 = arith.constant dense<0.000000e+00> : vector<10x35xf32>
    %115 = tpu.matmul %2, %114, %cst_103 {dimension_numbers = #tpu.dot_dimension_numbers<[1], [0], [0], [1], [0, 0, 1, 1], [], []>, precision = #tpu.contract_precision<fp32>} : vector<10x300xf32>, vector<300x35xf32>, vector<10x35xf32> -> vector<10x35xf32>
    %116 = vector.broadcast %6 : vector<10x1xf32> to vector<10x35xf32>
    %117 = arith.addf %115, %116 : vector<10x35xf32>
    %cst_104 = arith.constant 0.000000e+00 : f32
    %118 = vector.broadcast %cst_104 : f32 to vector<10x35xf32>
    %119 = arith.maximumf %117, %118 : vector<10x35xf32>
    %cst_105 = arith.constant 0.000000e+00 : f32
    %120 = vector.broadcast %cst_105 : f32 to vector<10x51xf32>
    %c0_106 = arith.constant 0 : index
    %c0_107 = arith.constant 0 : index
    %121 = vector.load %arg6[%c0_106, %c0_107] : memref<10x51xf32, #tpu.memory_space<vmem>>, vector<10x51xf32>
    tpu.vector_store %arg6[%c0_106, %c0_107], %120 {strides = array<i32>} : memref<10x51xf32, #tpu.memory_space<vmem>>, vector<10x51xf32>,
    %c0_108 = arith.constant 0 : index
    %c8_109 = arith.constant 8 : index
    %122 = vector.load %arg6[%c0_108, %c8_109] : memref<10x51xf32, #tpu.memory_space<vmem>>, vector<10x35xf32>
    tpu.vector_store %arg6[%c0_108, %c8_109], %119 {strides = array<i32>} : memref<10x51xf32, #tpu.memory_space<vmem>>, vector<10x35xf32>,
    %c0_110 = arith.constant 0 : index
    %c8_111 = arith.constant 8 : index
    %123 = vector.load %arg6[%c0_110, %c8_111] : memref<10x51xf32, #tpu.memory_space<vmem>>, vector<10x43xf32>
    %c0_112 = arith.constant 0 : index
    %c0_113 = arith.constant 0 : index
    %124 = vector.load %arg9[%c0_112, %c0_113] : memref<90x43xf32, #tpu.memory_space<vmem>>, vector<10x43xf32>
    tpu.vector_store %arg9[%c0_112, %c0_113], %123 {strides = array<i32>} : memref<90x43xf32, #tpu.memory_space<vmem>>, vector<10x43xf32>,
    %c0_114 = arith.constant 0 : index
    %c7_115 = arith.constant 7 : index
    %125 = vector.load %arg6[%c0_114, %c7_115] : memref<10x51xf32, #tpu.memory_space<vmem>>, vector<10x43xf32>
    %c10_116 = arith.constant 10 : index
    %c0_117 = arith.constant 0 : index
    %126 = vector.load %arg9[%c10_116, %c0_117] : memref<90x43xf32, #tpu.memory_space<vmem>>, vector<10x43xf32>
    tpu.vector_store %arg9[%c10_116, %c0_117], %125 {strides = array<i32>} : memref<90x43xf32, #tpu.memory_space<vmem>>, vector<10x43xf32>,
    %c0_118 = arith.constant 0 : index
    %c6_119 = arith.constant 6 : index
    %127 = vector.load %arg6[%c0_118, %c6_119] : memref<10x51xf32, #tpu.memory_space<vmem>>, vector<10x43xf32>
    %c20_120 = arith.constant 20 : index
    %c0_121 = arith.constant 0 : index
    %128 = vector.load %arg9[%c20_120, %c0_121] : memref<90x43xf32, #tpu.memory_space<vmem>>, vector<10x43xf32>
    tpu.vector_store %arg9[%c20_120, %c0_121], %127 {strides = array<i32>} : memref<90x43xf32, #tpu.memory_space<vmem>>, vector<10x43xf32>,
    %c0_122 = arith.constant 0 : index
    %c5_123 = arith.constant 5 : index
    %129 = vector.load %arg6[%c0_122, %c5_123] : memref<10x51xf32, #tpu.memory_space<vmem>>, vector<10x43xf32>
    %c30_124 = arith.constant 30 : index
    %c0_125 = arith.constant 0 : index
    %130 = vector.load %arg9[%c30_124, %c0_125] : memref<90x43xf32, #tpu.memory_space<vmem>>, vector<10x43xf32>
    tpu.vector_store %arg9[%c30_124, %c0_125], %129 {strides = array<i32>} : memref<90x43xf32, #tpu.memory_space<vmem>>, vector<10x43xf32>,
    %c0_126 = arith.constant 0 : index
    %c4_127 = arith.constant 4 : index
    %131 = vector.load %arg6[%c0_126, %c4_127] : memref<10x51xf32, #tpu.memory_space<vmem>>, vector<10x43xf32>
    %c40_128 = arith.constant 40 : index
    %c0_129 = arith.constant 0 : index
    %132 = vector.load %arg9[%c40_128, %c0_129] : memref<90x43xf32, #tpu.memory_space<vmem>>, vector<10x43xf32>
    tpu.vector_store %arg9[%c40_128, %c0_129], %131 {strides = array<i32>} : memref<90x43xf32, #tpu.memory_space<vmem>>, vector<10x43xf32>,
    %c0_130 = arith.constant 0 : index
    %c3_131 = arith.constant 3 : index
    %133 = vector.load %arg6[%c0_130, %c3_131] : memref<10x51xf32, #tpu.memory_space<vmem>>, vector<10x43xf32>
    %c50_132 = arith.constant 50 : index
    %c0_133 = arith.constant 0 : index
    %134 = vector.load %arg9[%c50_132, %c0_133] : memref<90x43xf32, #tpu.memory_space<vmem>>, vector<10x43xf32>
    tpu.vector_store %arg9[%c50_132, %c0_133], %133 {strides = array<i32>} : memref<90x43xf32, #tpu.memory_space<vmem>>, vector<10x43xf32>,
    %c0_134 = arith.constant 0 : index
    %c2_135 = arith.constant 2 : index
    %135 = vector.load %arg6[%c0_134, %c2_135] : memref<10x51xf32, #tpu.memory_space<vmem>>, vector<10x43xf32>
    %c60_136 = arith.constant 60 : index
    %c0_137 = arith.constant 0 : index
    %136 = vector.load %arg9[%c60_136, %c0_137] : memref<90x43xf32, #tpu.memory_space<vmem>>, vector<10x43xf32>
    tpu.vector_store %arg9[%c60_136, %c0_137], %135 {strides = array<i32>} : memref<90x43xf32, #tpu.memory_space<vmem>>, vector<10x43xf32>,
    %c0_138 = arith.constant 0 : index
    %c1_139 = arith.constant 1 : index
    %137 = vector.load %arg6[%c0_138, %c1_139] : memref<10x51xf32, #tpu.memory_space<vmem>>, vector<10x43xf32>
    %c70_140 = arith.constant 70 : index
    %c0_141 = arith.constant 0 : index
    %138 = vector.load %arg9[%c70_140, %c0_141] : memref<90x43xf32, #tpu.memory_space<vmem>>, vector<10x43xf32>
    tpu.vector_store %arg9[%c70_140, %c0_141], %137 {strides = array<i32>} : memref<90x43xf32, #tpu.memory_space<vmem>>, vector<10x43xf32>,
    %c0_142 = arith.constant 0 : index
    %c0_143 = arith.constant 0 : index
    %139 = vector.load %arg6[%c0_142, %c0_143] : memref<10x51xf32, #tpu.memory_space<vmem>>, vector<10x43xf32>
    %c80_144 = arith.constant 80 : index
    %c0_145 = arith.constant 0 : index
    %140 = vector.load %arg9[%c80_144, %c0_145] : memref<90x43xf32, #tpu.memory_space<vmem>>, vector<10x43xf32>
    tpu.vector_store %arg9[%c80_144, %c0_145], %139 {strides = array<i32>} : memref<90x43xf32, #tpu.memory_space<vmem>>, vector<10x43xf32>,
    %c0_146 = arith.constant 0 : index
    %c0_147 = arith.constant 0 : index
    %141 = vector.load %arg9[%c0_146, %c0_147] : memref<90x43xf32, #tpu.memory_space<vmem>>, vector<90x43xf32>
    %cst_148 = arith.constant dense<0.000000e+00> : vector<3x43xf32>
    %142 = tpu.matmul %3, %141, %cst_148 {dimension_numbers = #tpu.dot_dimension_numbers<[1], [0], [0], [1], [0, 0, 1, 1], [], []>, precision = #tpu.contract_precision<fp32>} : vector<3x90xf32>, vector<90x43xf32>, vector<3x43xf32> -> vector<3x43xf32>
    %143 = vector.broadcast %7 : vector<3x1xf32> to vector<3x43xf32>
    %144 = arith.addf %142, %143 : vector<3x43xf32>
    %145 = math.tanh %144 : vector<3x43xf32>
    %c0_149 = arith.constant 0 : index
    %c0_150 = arith.constant 0 : index
    %c0_151 = arith.constant 0 : index
    %146 = vector.load %arg4[%c0_149, %c0_150, %c0_151] : memref<1x3x43xf32, #tpu.memory_space<vmem>>, vector<1x3x43xf32>
    %147 = vector.shape_cast %146 : vector<1x3x43xf32> to vector<3x43xf32>
    %148 = vector.shape_cast %145 : vector<3x43xf32> to vector<1x3x43xf32>
    tpu.vector_store %arg4[%c0_149, %c0_150, %c0_151], %148 {strides = array<i32>} : memref<1x3x43xf32, #tpu.memory_space<vmem>>, vector<1x3x43xf32>,
    return
  }
  func.func @transform_0(%arg0: i32) -> (i32, i32, i32) {
    %c0_i32 = arith.constant 0 : i32
    %c0_i32_0 = arith.constant 0 : i32
    %c0_i32_1 = arith.constant 0 : i32
    return %arg0, %c0_i32, %c0_i32_0 : i32, i32, i32
  }
  func.func @transform_1(%arg0: i32) -> (i32, i32) {
    %c0_i32 = arith.constant 0 : i32
    %c0_i32_0 = arith.constant 0 : i32
    %c0_i32_1 = arith.constant 0 : i32
    return %c0_i32, %c0_i32_0 : i32, i32
  }
  func.func @transform_2(%arg0: i32) -> (i32, i32) {
    %c0_i32 = arith.constant 0 : i32
    %c0_i32_0 = arith.constant 0 : i32
    %c0_i32_1 = arith.constant 0 : i32
    return %c0_i32, %c0_i32_0 : i32, i32
  }
  func.func @transform_3(%arg0: i32) -> (i32, i32, i32) {
    %c0_i32 = arith.constant 0 : i32
    %c0_i32_0 = arith.constant 0 : i32
    %c0_i32_1 = arith.constant 0 : i32
    return %arg0, %c0_i32, %c0_i32_0 : i32, i32, i32
  }
}

</mosaic_0001>

<llo_original>
// kernel: ae_forward.1
$region0: #{ae_forward.1}
  #allocation0 [shape = 'u32[]', space=smem, size = 0x4, offset = 0x4, fixed_abs, tag = 'smem constant byte address 0x4 - core index']
  #allocation1 [shape = 'u32[72,128]{1,0:T(1,128)}', space=vmem, size = 0x9000, scoped, tag = 'internal scratch']
  #allocation2 [shape = 'f32[15,54]{1,0:T(8,128)}', space=vmem, size = 0x2000, scoped, tag = 'scratch operand']
  #allocation3 [shape = 'f32[10,51]{1,0:T(8,128)}', space=vmem, size = 0x2000, scoped, tag = 'scratch operand']
  #allocation4 [shape = 'f32[200,6]{1,0:T(8,128)}', space=vmem, size = 0x19000, scoped, tag = 'scratch operand']
  #allocation5 [shape = 'f32[300,35]{1,0:T(8,128)}', space=vmem, size = 0x26000, scoped, tag = 'scratch operand']
  #allocation6 [shape = 'f32[90,43]{1,0:T(8,128)}', space=vmem, size = 0xc000, scoped, tag = 'scratch operand']
  %s0 = inlined_call_operand.vmem [shape: f32[2,20,37], index: 0, kind: input, shape index: {}]
  %s1 = inlined_call_operand.vmem [shape: f32[15,610], index: 1, kind: input, shape index: {}]
  %s2 = inlined_call_operand.vmem [shape: f32[15,4], index: 2, kind: input, shape index: {}]
  %s3 = inlined_call_operand.vmem [shape: f32[2,3,43], index: 3, kind: output, shape index: {}]
  %s4 = sld [smem:[#allocation0]]
  $region45: #{ae_forward.1} parent=0
    _
  %s6 = ssub.s32 1, %s4
  %s7 = scalar_select 0, %s6, %s4
  loop: start=0, step=1, limit=4
  $region2: #{ae_forward.1} parent=0 // loop_pre_header
    _
  $region3: #{ae_forward.1} parent=0 // loop_header
    %s9 = sphi 0, %s13
    %p10 = scmp.ge.s32.totalorder %s9, 4
    %s19 = sphi 0, %s21
    %s22 = sphi 0, %s19
    %s23 = sphi 0, %s22
    %s39 = sphi 0, %s23
    %s43 = sphi 0, %s43
    %s45 = sphi 0, %s43
    %s46 = sphi 0, %s45
    %s60 = sphi 0, %s46
    %s64 = sphi 0, %s64
    %s66 = sphi 0, %s64
    %s67 = sphi 0, %s66
    %s81 = sphi 0, %s67
    %s87 = sphi 0, %s89
    %s90 = sphi 0, %s87
    %s91 = sphi 0, %s90
    %s107 = sphi 0, %s91
  $region4: #{ae_forward.1} parent=0 // loop_header_branch
    %12 = sbr.rel (%p10) target = $region8
  $region5: #{ae_forward.1} parent=0 // loop_body
    %s14 = ssub.s32 %s9, 1
    %s15 = ssub.s32 %s9, 2
    %s16 = sadd.s32 %s9, 1
    %s17 = ssub.s32 %s9, %s16
    %p18 = scmp.eq.s32.totalorder %s17, 0
    %s20 = sadd.s32 %s19, 1
    %s21 = scalar_select %p18, %s19, %s20
    %p24 = pneg %p18
    %p25 = scmp.eq.s32.totalorder %s9, 1
    %p26 = por %p24, %p25
    %p27 = scmp.ne.s32.totalorder %s19, %s22
    %p28 = scmp.eq.s32.totalorder %s9, 0
    %p29 = por %p27, %p28
    %p30 = scmp.ne.s32.totalorder %s19, %s22
    %p31 = scmp.eq.s32.totalorder %s14, 1
    %p32 = por %p30, %p31
    %p33 = scmp.ne.s32.totalorder %s22, %s23
    %p34 = scmp.eq.s32.totalorder %s14, 0
    %p35 = por %p33, %p34
    %p36 = scmp.ne.s32.totalorder %s22, %s23
    %p37 = scmp.eq.s32.totalorder %s15, 1
    %p38 = por %p36, %p37
    %p40 = scmp.ne.s32.totalorder %s23, %s39
    %p41 = scmp.eq.s32.totalorder %s15, 0
    %p42 = por %p40, %p41
    %s44 = sadd.s32 %s43, 1
    %p47 = scmp.eq.s32.totalorder %s9, 1
    %p48 = scmp.ne.s32.totalorder %s43, %s45
    %p49 = scmp.eq.s32.totalorder %s9, 0
    %p50 = por %p48, %p49
    %p51 = scmp.ne.s32.totalorder %s43, %s45
    %p52 = scmp.eq.s32.totalorder %s14, 1
    %p53 = por %p51, %p52
    %p54 = scmp.ne.s32.totalorder %s45, %s46
    %p55 = scmp.eq.s32.totalorder %s14, 0
    %p56 = por %p54, %p55
    %p57 = scmp.ne.s32.totalorder %s45, %s46
    %p58 = scmp.eq.s32.totalorder %s15, 1
    %p59 = por %p57, %p58
    %p61 = scmp.ne.s32.totalorder %s46, %s60
    %p62 = scmp.eq.s32.totalorder %s15, 0
    %p63 = por %p61, %p62
    %s65 = sadd.s32 %s64, 1
    %p68 = scmp.eq.s32.totalorder %s9, 1
    %p69 = scmp.ne.s32.totalorder %s64, %s66
    %p70 = scmp.eq.s32.totalorder %s9, 0
    %p71 = por %p69, %p70
    %p72 = scmp.ne.s32.totalorder %s64, %s66
    %p73 = scmp.eq.s32.totalorder %s14, 1
    %p74 = por %p72, %p73
    %p75 = scmp.ne.s32.totalorder %s66, %s67
    %p76 = scmp.eq.s32.totalorder %s14, 0
    %p77 = por %p75, %p76
    %p78 = scmp.ne.s32.totalorder %s66, %s67
    %p79 = scmp.eq.s32.totalorder %s15, 1
    %p80 = por %p78, %p79
    %p82 = scmp.ne.s32.totalorder %s67, %s81
    %p83 = scmp.eq.s32.totalorder %s15, 0
    %p84 = por %p82, %p83
    %s85 = ssub.s32 %s9, %s16
    %p86 = scmp.eq.s32.totalorder %s85, 0
    %s88 = sadd.s32 %s87, 1
    %s89 = scalar_select %p86, %s87, %s88
    %p92 = pneg %p86
    %p93 = scmp.eq.s32.totalorder %s9, 1
    %p94 = por %p92, %p93
    %p95 = scmp.ne.s32.totalorder %s87, %s90
    %p96 = scmp.eq.s32.totalorder %s9, 0
    %p97 = por %p95, %p96
    %p98 = scmp.ne.s32.totalorder %s87, %s90
    %p99 = scmp.eq.s32.totalorder %s14, 1
    %p100 = por %p98, %p99
    %p101 = scmp.ne.s32.totalorder %s90, %s91
    %p102 = scmp.eq.s32.totalorder %s14, 0
    %p103 = por %p101, %p102
    %p104 = scmp.ne.s32.totalorder %s90, %s91
    %p105 = scmp.eq.s32.totalorder %s15, 1
    %p106 = por %p104, %p105
    %p108 = scmp.ne.s32.totalorder %s91, %s107
    %p109 = scmp.eq.s32.totalorder %s15, 0
    %p110 = por %p108, %p109
    %p111 = scmp.le.s32.totalorder 1, %s9
    %p112 = scmp.lt.s32.totalorder %s9, 3
    %p113 = pnand %p111, %p112
    %p114 = pneg %p113
    // Predicated region
    $region9: #{ae_forward.1} parent=5 // pred_check
      _
    $region10: #{ae_forward.1} parent=5 // pred_check_branch
      %116 = sbr.rel (%p113) target = $region12
    $region11: #{ae_forward.1} parent=5 // pred_region
      %s117 = ssub.s32 %s9, 1
      // Predicated region
      $region13: #{ae_forward.1} parent=11 // pred_check
        %p118 = pneg %p56
      $region14: #{ae_forward.1} parent=11 // pred_check_branch
        %120 = sbr.rel (%p118) target = $region16
      $region15: #{ae_forward.1} parent=11 // pred_region
        _
      $region16: #{ae_forward.1} parent=11 // pred_fallthru
        _
      // Predicated region
      $region17: #{ae_forward.1} parent=11 // pred_check
        %p121 = pneg %p77
      $region18: #{ae_forward.1} parent=11 // pred_check_branch
        %123 = sbr.rel (%p121) target = $region20
      $region19: #{ae_forward.1} parent=11 // pred_region
        _
      $region20: #{ae_forward.1} parent=11 // pred_fallthru
        _
    $region12: #{ae_forward.1} parent=5 // pred_fallthru
      _
    %p124 = scmp.lt.s32.totalorder %s9, 2
    // Predicated region
    $region21: #{ae_forward.1} parent=5 // pred_check
      %p125 = pneg %p124
    $region22: #{ae_forward.1} parent=5 // pred_check_branch
      %127 = sbr.rel (%p125) target = $region24
    $region23: #{ae_forward.1} parent=5 // pred_region
      // Predicated region
      $region25: #{ae_forward.1} parent=23 // pred_check
        %p128 = pneg %p29
      $region26: #{ae_forward.1} parent=23 // pred_check_branch
        %130 = sbr.rel (%p128) target = $region28
      $region27: #{ae_forward.1} parent=23 // pred_region
        %p131 = scmp.lt.s32.totalorder %s9, 1
        %s132 = scalar_select %p131, %s9, 1
        %s133 = smul.addr %s132, 3
        %s134 = smul.addr %s133, 8
        %s135 = scalar_lea.vmem %s0, %s134
      $region28: #{ae_forward.1} parent=23 // pred_fallthru
        _
    $region24: #{ae_forward.1} parent=5 // pred_fallthru
      _
    %p136 = scmp.le.s32.totalorder 1, %s9
    %p137 = scmp.lt.s32.totalorder %s9, 3
    %p138 = pnand %p136, %p137
    %p139 = pneg %p138
    // Predicated region
    $region29: #{ae_forward.1} parent=5 // pred_check
      _
    $region30: #{ae_forward.1} parent=5 // pred_check_branch
      %141 = sbr.rel (%p138) target = $region32
    $region31: #{ae_forward.1} parent=5 // pred_region
      %s142 = ssub.s32 %s9, 1
      %p143 = scmp.lt.s32.totalorder %s14, 1
      %s144 = scalar_select %p143, %s14, 1
      %s145 = smul.addr %s144, 3
      %s146 = smul.addr %s145, 8
      %s147 = scalar_lea.vmem %s0, %s146
      %p148 = pneg %p35
      %p149 = pneg %p32
      %p150 = pneg %p56
      %p151 = pneg %p53
      %p152 = pneg %p77
      %p153 = pneg %p74
      %p154 = pneg %p103
      %p155 = pneg %p100
      %p156 = scmp.lt.s32.totalorder %s14, 1
      %s157 = scalar_select %p156, %s14, 1
      %s158 = smul.addr %s157, 4
      %s159 = scalar_lea.vmem %s3, %s158
      %p160 = scmp.lt.s32.totalorder %s14, 1
      %s161 = scalar_select %p160, %s14, 1
      %s162 = smul.addr %s161, 3
      %s163 = smul.addr %s162, 8
      %s164 = scalar_lea.vmem %s0, %s163
      %p165 = scmp.lt.s32.totalorder %s14, 1
      %s166 = scalar_select %p165, %s14, 1
      %s167 = smul.addr %s166, 4
      %s168 = scalar_lea.vmem %s3, %s167
      %v169 = vld [vmem:[%s1] sm:$0xff]
      %v170 = vld [vmem:[%s1 + $0x28] sm:$0x3]
      %v171 = vld [vmem:[%s1 + $0x8] sm:$0xff]
      %v172 = vld [vmem:[%s1 + $0x28] sm:$0x7f]
      %v173 = vld [vmem:[%s1 + $0x30] sm:$0x7f]
      %v174 = vld [vmem:[%s1 + $0x10] sm:$0xff]
      %v175 = vld [vmem:[%s1 + $0x18] sm:$0xff]
      %v176 = vld [vmem:[%s1 + $0x20] sm:$0xff]
      %v177 = vld [vmem:[%s1 + $0x30] sm:$0x3]
      %v178 = vld [vmem:[%s1 + $0x38] sm:$0x3]
      %v179 = vld [vmem:[%s1 + $0x40] sm:$0x3]
      %v180 = vld [vmem:[%s1 + $0x48] sm:$0x3]
      %v181 = vld [vmem:[%s1 + $0x20] sm:$0x7]
      %v182 = vld [vmem:[%s2] sm:$0xff]
      %v183 = vld [vmem:[%s2 + $0x8] sm:$0x3]
      %v184 = vld [vmem:[%s2 + $0x8] sm:$0x7f]
      %v185 = vld [vmem:[%s2] sm:$0x7]
      %v186 = vld [vmem:[%s164] sm:$0xff]
      %v187 = vld [vmem:[%s164 + $0x8] sm:$0xff]
      %v188 = vld [vmem:[%s164 + $0x10] sm:$0xf]
      %190 = vset.pattern.permute.xlu0 0
      %191 = vperm.xlu0 %190, %v182
      %v192 = vpop.permute.xlu0 %191
      %195 = vset.pattern.permute.xlu0 0
      %196 = vperm.xlu0 %195, %v183
      %v197 = vpop.permute.xlu0 %196
      %vm199 = vcmask 162816
      %v201 = vsel %vm199, %v169, 0
      %v204 = vsel %vm199, %v170, 0
      %vm206 = vcmask 1043456
      %v208 = vsel %vm206, %v188, 0
      %210 = vmatpush.msra.mxu0 0.0
      %211 = vmatpush.msra.mxu0 0.0
      %212 = vmatpush.msra.mxu0 0.0
      %213 = vmatpush.msra.mxu0 0.0
      %214 = vmatpush.msra.mxu0 0.0
      %215 = vmatpush.msra.mxu0 0.0
      %216 = vmatpush.msra.mxu0 0.0
      %217 = vmatpush.msra.mxu0 0.0
      %218 = vmatpush.msra.mxu0 0.0
      %219 = vmatpush.msra.mxu0 0.0
      %220 = vmatpush.msra.mxu0 0.0
      %221 = vmatpush.msra.mxu0 0.0
      %222 = vmatpush.msra.mxu0 0.0
      %v223 = vand.u32 %v208, 4294901760
      %224 = vmatpush.msra.mxu0 %v223
      %v225 = vand.u32 %v187, 4294901760
      %226 = vmatpush.msra.mxu0 %v225
      %v227 = vand.u32 %v186, 4294901760
      %228 = vmatpush.msra.mxu0 %v227
      %v229 = vand.u32 %v201, 4294901760
      %v230 = vsub.f32 %v201, %v229
      %v231 = vand.u32 %v230, 4294901760
      %v232 = vsub.f32 %v230, %v231
      %v233 = vand.u32 %v232, 4294901760
      %234 = vmatmul.f32.gmra.mxu0 %v233
      %v235 = vpop.f32.mrf.mxu0
      %v236 = vadd.f32 %v192, %v235
      %v237 = vand.u32 %v204, 4294901760
      %v238 = vsub.f32 %v204, %v237
      %v239 = vand.u32 %v238, 4294901760
      %v240 = vsub.f32 %v238, %v239
      %v241 = vand.u32 %v240, 4294901760
      %242 = vmatmul.f32.gmra.mxu0 %v241
      %v243 = vpop.f32.mrf.mxu0
      %v244 = vadd.f32 %v197, %v243
      %245 = vdwg.mxu0
      %246 = vmatpush.msra.mxu0 0.0
      %247 = vmatpush.msra.mxu0 0.0
      %248 = vmatpush.msra.mxu0 0.0
      %249 = vmatpush.msra.mxu0 0.0
      %250 = vmatpush.msra.mxu0 0.0
      %251 = vmatpush.msra.mxu0 0.0
      %252 = vmatpush.msra.mxu0 0.0
      %253 = vmatpush.msra.mxu0 0.0
      %254 = vmatpush.msra.mxu0 0.0
      %255 = vmatpush.msra.mxu0 0.0
      %256 = vmatpush.msra.mxu0 0.0
      %257 = vmatpush.msra.mxu0 0.0
      %258 = vmatpush.msra.mxu0 0.0
      %v259 = vand.u32 %v208, 4294901760
      %v260 = vsub.f32 %v208, %v259
      %v261 = vand.u32 %v260, 4294901760
      %v262 = vsub.f32 %v260, %v261
      %v263 = vand.u32 %v262, 4294901760
      %264 = vmatpush.msra.mxu0 %v263
      %v265 = vand.u32 %v187, 4294901760
      %v266 = vsub.f32 %v187, %v265
      %v267 = vand.u32 %v266, 4294901760
      %v268 = vsub.f32 %v266, %v267
      %v269 = vand.u32 %v268, 4294901760
      %270 = vmatpush.msra.mxu0 %v269
      %v271 = vand.u32 %v186, 4294901760
      %v272 = vsub.f32 %v186, %v271
      %v273 = vand.u32 %v272, 4294901760
      %v274 = vsub.f32 %v272, %v273
      %v275 = vand.u32 %v274, 4294901760
      %276 = vmatpush.msra.mxu0 %v275
      %v277 = vand.u32 %v201, 4294901760
      %278 = vmatmul.f32.gmra.mxu0 %v277
      %v279 = vpop.f32.mrf.mxu0
      %v280 = vadd.f32 %v236, %v279
      %v281 = vand.u32 %v204, 4294901760
      %282 = vmatmul.f32.gmra.mxu0 %v281
      %v283 = vpop.f32.mrf.mxu0
      %v284 = vadd.f32 %v244, %v283
      %285 = vdwg.mxu0
      %286 = vmatpush.msra.mxu0 0.0
      %287 = vmatpush.msra.mxu0 0.0
      %288 = vmatpush.msra.mxu0 0.0
      %289 = vmatpush.msra.mxu0 0.0
      %290 = vmatpush.msra.mxu0 0.0
      %291 = vmatpush.msra.mxu0 0.0
      %292 = vmatpush.msra.mxu0 0.0
      %293 = vmatpush.msra.mxu0 0.0
      %294 = vmatpush.msra.mxu0 0.0
      %295 = vmatpush.msra.mxu0 0.0
      %296 = vmatpush.msra.mxu0 0.0
      %297 = vmatpush.msra.mxu0 0.0
      %298 = vmatpush.msra.mxu0 0.0
      %v299 = vand.u32 %v208, 4294901760
      %v300 = vsub.f32 %v208, %v299
      %301 = vmatpush.msra.mxu0 %v300
      %v302 = vand.u32 %v187, 4294901760
      %v303 = vsub.f32 %v187, %v302
      %304 = vmatpush.msra.mxu0 %v303
      %v305 = vand.u32 %v186, 4294901760
      %v306 = vsub.f32 %v186, %v305
      %307 = vmatpush.msra.mxu0 %v306
      %v308 = vand.u32 %v201, 4294901760
      %v309 = vsub.f32 %v201, %v308
      %310 = vmatmul.f32.gmra.mxu0 %v309
      %v311 = vpop.f32.mrf.mxu0
      %v312 = vadd.f32 %v280, %v311
      %v313 = vand.u32 %v204, 4294901760
      %v314 = vsub.f32 %v204, %v313
      %315 = vmatmul.f32.gmra.mxu0 %v314
      %v316 = vpop.f32.mrf.mxu0
      %v317 = vadd.f32 %v284, %v316
      %318 = vdwg.mxu0
      %319 = vmatpush.msra.mxu0 0.0
      %320 = vmatpush.msra.mxu0 0.0
      %321 = vmatpush.msra.mxu0 0.0
      %322 = vmatpush.msra.mxu0 0.0
      %323 = vmatpush.msra.mxu0 0.0
      %324 = vmatpush.msra.mxu0 0.0
      %325 = vmatpush.msra.mxu0 0.0
      %326 = vmatpush.msra.mxu0 0.0
      %327 = vmatpush.msra.mxu0 0.0
      %328 = vmatpush.msra.mxu0 0.0
      %329 = vmatpush.msra.mxu0 0.0
      %330 = vmatpush.msra.mxu0 0.0
      %331 = vmatpush.msra.mxu0 0.0
      %v332 = vand.u32 %v208, 4294901760
      %333 = vmatpush.msra.mxu0 %v332
      %v334 = vand.u32 %v187, 4294901760
      %335 = vmatpush.msra.mxu0 %v334
      %v336 = vand.u32 %v186, 4294901760
      %337 = vmatpush.msra.mxu0 %v336
      %v338 = vand.u32 %v201, 4294901760
      %v339 = vsub.f32 %v201, %v338
      %v340 = vand.u32 %v339, 4294901760
      %341 = vmatmul.f32.gmra.mxu0 %v340
      %v342 = vpop.f32.mrf.mxu0
      %v343 = vadd.f32 %v312, %v342
      %v344 = vand.u32 %v204, 4294901760
      %v345 = vsub.f32 %v204, %v344
      %v346 = vand.u32 %v345, 4294901760
      %347 = vmatmul.f32.gmra.mxu0 %v346
      %v348 = vpop.f32.mrf.mxu0
      %v349 = vadd.f32 %v317, %v348
      %350 = vdwg.mxu0
      %351 = vmatpush.msra.mxu0 0.0
      %352 = vmatpush.msra.mxu0 0.0
      %353 = vmatpush.msra.mxu0 0.0
      %354 = vmatpush.msra.mxu0 0.0
      %355 = vmatpush.msra.mxu0 0.0
      %356 = vmatpush.msra.mxu0 0.0
      %357 = vmatpush.msra.mxu0 0.0
      %358 = vmatpush.msra.mxu0 0.0
      %359 = vmatpush.msra.mxu0 0.0
      %360 = vmatpush.msra.mxu0 0.0
      %361 = vmatpush.msra.mxu0 0.0
      %362 = vmatpush.msra.mxu0 0.0
      %363 = vmatpush.msra.mxu0 0.0
      %v364 = vand.u32 %v208, 4294901760
      %v365 = vsub.f32 %v208, %v364
      %v366 = vand.u32 %v365, 4294901760
      %367 = vmatpush.msra.mxu0 %v366
      %v368 = vand.u32 %v187, 4294901760
      %v369 = vsub.f32 %v187, %v368
      %v370 = vand.u32 %v369, 4294901760
      %371 = vmatpush.msra.mxu0 %v370
      %v372 = vand.u32 %v186, 4294901760
      %v373 = vsub.f32 %v186, %v372
      %v374 = vand.u32 %v373, 4294901760
      %375 = vmatpush.msra.mxu0 %v374
      %v376 = vand.u32 %v201, 4294901760
      %377 = vmatmul.f32.gmra.mxu0 %v376
      %v378 = vpop.f32.mrf.mxu0
      %v379 = vadd.f32 %v343, %v378
      %v380 = vand.u32 %v204, 4294901760
      %381 = vmatmul.f32.gmra.mxu0 %v380
      %v382 = vpop.f32.mrf.mxu0
      %v383 = vadd.f32 %v349, %v382
      %384 = vdwg.mxu0
      %385 = vmatpush.msra.mxu0 0.0
      %386 = vmatpush.msra.mxu0 0.0
      %387 = vmatpush.msra.mxu0 0.0
      %388 = vmatpush.msra.mxu0 0.0
      %389 = vmatpush.msra.mxu0 0.0
      %390 = vmatpush.msra.mxu0 0.0
      %391 = vmatpush.msra.mxu0 0.0
      %392 = vmatpush.msra.mxu0 0.0
      %393 = vmatpush.msra.mxu0 0.0
      %394 = vmatpush.msra.mxu0 0.0
      %395 = vmatpush.msra.mxu0 0.0
      %396 = vmatpush.msra.mxu0 0.0
      %397 = vmatpush.msra.mxu0 0.0
      %v398 = vand.u32 %v208, 4294901760
      %399 = vmatpush.msra.mxu0 %v398
      %v400 = vand.u32 %v187, 4294901760
      %401 = vmatpush.msra.mxu0 %v400
      %v402 = vand.u32 %v186, 4294901760
      %403 = vmatpush.msra.mxu0 %v402
      %v404 = vand.u32 %v201, 4294901760
      %405 = vmatmul.f32.gmra.mxu0 %v404
      %v406 = vpop.f32.mrf.mxu0
      %v407 = vadd.f32 %v379, %v406
      %v408 = vand.u32 %v204, 4294901760
      %409 = vmatmul.f32.gmra.mxu0 %v408
      %v410 = vpop.f32.mrf.mxu0
      %v411 = vadd.f32 %v383, %v410
      %412 = vdwg.mxu0
      %v413 = vmax.f32 %v407, 0.0
      %v414 = vmax.f32 %v411, 0.0
      %vm415 = vcmask 48128
      %416 = vst.msk [vmem:[#allocation4] sm:$0xff] %vm415, %v413
      %vm417 = vcmask 41984
      %418 = vst.msk [vmem:[#allocation4 + $0x8] sm:$0x3] %vm417, %v414
      %421 = vrot.lane.b32.xlu0 %v413, 115
      %v422 = vpop.permute.xlu0 %421
      %423 = vrot.lane.b32.xlu0 %v414, 115
      %v424 = vpop.permute.xlu0 %423
      %427 = vst.msk [vmem:[#allocation4 + $0xa] sm:$0xff] %vm415, %v422
      %428 = vst.msk [vmem:[#allocation4 + $0x12] sm:$0x3] %vm417, %v424
      %429 = vrot.lane.b32.xlu0 %v413, 103
      %v430 = vpop.permute.xlu0 %429
      %431 = vrot.lane.b32.xlu0 %v414, 103
      %v432 = vpop.permute.xlu0 %431
      %435 = vst.msk [vmem:[#allocation4 + $0x14] sm:$0xff] %vm415, %v430
      %436 = vst.msk [vmem:[#allocation4 + $0x1c] sm:$0x3] %vm417, %v432
      %437 = vrot.lane.b32.xlu0 %v413, 127
      %v438 = vpop.permute.xlu0 %437
      %439 = vrot.lane.b32.xlu0 %v414, 127
      %v440 = vpop.permute.xlu0 %439
      %443 = vst.msk [vmem:[#allocation4 + $0x1e] sm:$0xff] %vm415, %v438
      %444 = vst.msk [vmem:[#allocation4 + $0x26] sm:$0x3] %vm417, %v440
      %445 = vrot.lane.b32.xlu0 %v413, 114
      %v446 = vpop.permute.xlu0 %445
      %447 = vrot.lane.b32.xlu0 %v414, 114
      %v448 = vpop.permute.xlu0 %447
      %451 = vst.msk [vmem:[#allocation4 + $0x28] sm:$0xff] %vm415, %v446
      %452 = vst.msk [vmem:[#allocation4 + $0x30] sm:$0x3] %vm417, %v448
      %453 = vrot.lane.b32.xlu0 %v413, 102
      %v454 = vpop.permute.xlu0 %453
      %455 = vrot.lane.b32.xlu0 %v414, 102
      %v456 = vpop.permute.xlu0 %455
      %459 = vst.msk [vmem:[#allocation4 + $0x32] sm:$0xff] %vm415, %v454
      %460 = vst.msk [vmem:[#allocation4 + $0x3a] sm:$0x3] %vm417, %v456
      %461 = vrot.lane.b32.xlu0 %v413, 126
      %v462 = vpop.permute.xlu0 %461
      %463 = vrot.lane.b32.xlu0 %v414, 126
      %v464 = vpop.permute.xlu0 %463
      %467 = vst.msk [vmem:[#allocation4 + $0x3c] sm:$0xff] %vm415, %v462
      %468 = vst.msk [vmem:[#allocation4 + $0x44] sm:$0x3] %vm417, %v464
      %469 = vrot.lane.b32.xlu0 %v413, 113
      %v470 = vpop.permute.xlu0 %469
      %471 = vrot.lane.b32.xlu0 %v414, 113
      %v472 = vpop.permute.xlu0 %471
      %475 = vst.msk [vmem:[#allocation4 + $0x46] sm:$0xff] %vm415, %v470
      %476 = vst.msk [vmem:[#allocation4 + $0x4e] sm:$0x3] %vm417, %v472
      %477 = vrot.lane.b32.xlu0 %v413, 101
      %v478 = vpop.permute.xlu0 %477
      %479 = vrot.lane.b32.xlu0 %v414, 101
      %v480 = vpop.permute.xlu0 %479
      %483 = vst.msk [vmem:[#allocation4 + $0x50] sm:$0xff] %vm415, %v478
      %484 = vst.msk [vmem:[#allocation4 + $0x58] sm:$0x3] %vm417, %v480
      %485 = vrot.lane.b32.xlu0 %v413, 125
      %v486 = vpop.permute.xlu0 %485
      %487 = vrot.lane.b32.xlu0 %v414, 125
      %v488 = vpop.permute.xlu0 %487
      %491 = vst.msk [vmem:[#allocation4 + $0x5a] sm:$0xff] %vm415, %v486
      %492 = vst.msk [vmem:[#allocation4 + $0x62] sm:$0x3] %vm417, %v488
      %493 = vrot.lane.b32.xlu0 %v413, 112
      %v494 = vpop.permute.xlu0 %493
      %495 = vrot.lane.b32.xlu0 %v414, 112
      %v496 = vpop.permute.xlu0 %495
      %499 = vst.msk [vmem:[#allocation4 + $0x64] sm:$0xff] %vm415, %v494
      %500 = vst.msk [vmem:[#allocation4 + $0x6c] sm:$0x3] %vm417, %v496
      %501 = vrot.lane.b32.xlu0 %v413, 100
      %v502 = vpop.permute.xlu0 %501
      %503 = vrot.lane.b32.xlu0 %v414, 100
      %v504 = vpop.permute.xlu0 %503
      %507 = vst.msk [vmem:[#allocation4 + $0x6e] sm:$0xff] %vm415, %v502
      %508 = vst.msk [vmem:[#allocation4 + $0x76] sm:$0x3] %vm417, %v504
      %509 = vrot.lane.b32.xlu0 %v413, 124
      %v510 = vpop.permute.xlu0 %509
      %511 = vrot.lane.b32.xlu0 %v414, 124
      %v512 = vpop.permute.xlu0 %511
      %515 = vst.msk [vmem:[#allocation4 + $0x78] sm:$0xff] %vm415, %v510
      %516 = vst.msk [vmem:[#allocation4 + $0x80] sm:$0x3] %vm417, %v512
      %517 = vrot.lane.b32.xlu0 %v413, 111
      %v518 = vpop.permute.xlu0 %517
      %519 = vrot.lane.b32.xlu0 %v414, 111
      %v520 = vpop.permute.xlu0 %519
      %523 = vst.msk [vmem:[#allocation4 + $0x82] sm:$0xff] %vm415, %v518
      %524 = vst.msk [vmem:[#allocation4 + $0x8a] sm:$0x3] %vm417, %v520
      %525 = vrot.lane.b32.xlu0 %v413, 99
      %v526 = vpop.permute.xlu0 %525
      %527 = vrot.lane.b32.xlu0 %v414, 99
      %v528 = vpop.permute.xlu0 %527
      %531 = vst.msk [vmem:[#allocation4 + $0x8c] sm:$0xff] %vm415, %v526
      %532 = vst.msk [vmem:[#allocation4 + $0x94] sm:$0x3] %vm417, %v528
      %533 = vrot.lane.b32.xlu0 %v413, 123
      %v534 = vpop.permute.xlu0 %533
      %535 = vrot.lane.b32.xlu0 %v414, 123
      %v536 = vpop.permute.xlu0 %535
      %539 = vst.msk [vmem:[#allocation4 + $0x96] sm:$0xff] %vm415, %v534
      %540 = vst.msk [vmem:[#allocation4 + $0x9e] sm:$0x3] %vm417, %v536
      %541 = vrot.lane.b32.xlu0 %v413, 110
      %v542 = vpop.permute.xlu0 %541
      %543 = vrot.lane.b32.xlu0 %v414, 110
      %v544 = vpop.permute.xlu0 %543
      %547 = vst.msk [vmem:[#allocation4 + $0xa0] sm:$0xff] %vm415, %v542
      %548 = vst.msk [vmem:[#allocation4 + $0xa8] sm:$0x3] %vm417, %v544
      %549 = vrot.lane.b32.xlu0 %v413, 98
      %v550 = vpop.permute.xlu0 %549
      %551 = vrot.lane.b32.xlu0 %v414, 98
      %v552 = vpop.permute.xlu0 %551
      %555 = vst.msk [vmem:[#allocation4 + $0xaa] sm:$0xff] %vm415, %v550
      %556 = vst.msk [vmem:[#allocation4 + $0xb2] sm:$0x3] %vm417, %v552
      %557 = vrot.lane.b32.xlu0 %v413, 122
      %v558 = vpop.permute.xlu0 %557
      %559 = vrot.lane.b32.xlu0 %v414, 122
      %v560 = vpop.permute.xlu0 %559
      %563 = vst.msk [vmem:[#allocation4 + $0xb4] sm:$0xff] %vm415, %v558
      %564 = vst.msk [vmem:[#allocation4 + $0xbc] sm:$0x3] %vm417, %v560
      %565 = vrot.lane.b32.xlu0 %v413, 109
      %v566 = vpop.permute.xlu0 %565
      %567 = vrot.lane.b32.xlu0 %v414, 109
      %v568 = vpop.permute.xlu0 %567
      %571 = vst.msk [vmem:[#allocation4 + $0xbe] sm:$0xff] %vm415, %v566
      %572 = vst.msk [vmem:[#allocation4 + $0xc6] sm:$0x3] %vm417, %v568
      %v573 = vld [vmem:[#allocation4] sm:$0xff]
      %v574 = vld [vmem:[#allocation4 + $0x8] sm:$0xff]
      %v575 = vld [vmem:[#allocation4 + $0x10] sm:$0xff]
      %v576 = vld [vmem:[#allocation4 + $0x18] sm:$0xff]
      %v577 = vld [vmem:[#allocation4 + $0x20] sm:$0xff]
      %v578 = vld [vmem:[#allocation4 + $0x28] sm:$0xff]
      %v579 = vld [vmem:[#allocation4 + $0x30] sm:$0xff]
      %v580 = vld [vmem:[#allocation4 + $0x38] sm:$0xff]
      %v581 = vld [vmem:[#allocation4 + $0x40] sm:$0xff]
      %v582 = vld [vmem:[#allocation4 + $0x48] sm:$0xff]
      %v583 = vld [vmem:[#allocation4 + $0x50] sm:$0xff]
      %v584 = vld [vmem:[#allocation4 + $0x58] sm:$0xff]
      %v585 = vld [vmem:[#allocation4 + $0x60] sm:$0xff]
      %v586 = vld [vmem:[#allocation4 + $0x68] sm:$0xff]
      %v587 = vld [vmem:[#allocation4 + $0x70] sm:$0xff]
      %v588 = vld [vmem:[#allocation4 + $0x78] sm:$0xff]
      %v589 = vld [vmem:[#allocation4 + $0x80] sm:$0xff]
      %v590 = vld [vmem:[#allocation4 + $0x88] sm:$0xff]
      %v591 = vld [vmem:[#allocation4 + $0x90] sm:$0xff]
      %v592 = vld [vmem:[#allocation4 + $0x98] sm:$0xff]
      %v593 = vld [vmem:[#allocation4 + $0xa0] sm:$0xff]
      %v594 = vld [vmem:[#allocation4 + $0xa8] sm:$0xff]
      %v595 = vld [vmem:[#allocation4 + $0xb0] sm:$0xff]
      %v596 = vld [vmem:[#allocation4 + $0xb8] sm:$0xff]
      %v597 = vld [vmem:[#allocation4 + $0xc0] sm:$0xff]
      %598 = vset.pattern.permute.xlu0 1
      %599 = vperm.xlu0 %598, %v182
      %v600 = vpop.permute.xlu0 %599
      %603 = vset.pattern.permute.xlu0 1
      %604 = vperm.xlu0 %603, %v184
      %v605 = vpop.permute.xlu0 %604
      %610 = vrot.lane.b32.xlu0 %v169, 108
      %v611 = vpop.permute.xlu0 %610
      %612 = vrot.lane.b32.xlu0 %v171, 108
      %v613 = vpop.permute.xlu0 %612
      %614 = vrot.lane.b32.xlu0 %v172, 108
      %v615 = vpop.permute.xlu0 %614
      %616 = vrot.lane.b32.xlu0 %v173, 108
      %v617 = vpop.permute.xlu0 %616
      %vm618 = vcmask 883712
      %v619 = vsel %vm618, %v611, %v613
      %v620 = vsel %vm618, %v615, %v617
      %vm623 = vcmask 588800
      %v624 = vsel %vm623, %v613, 0
      %v626 = vsel %vm623, %v617, 0
      %v628 = vand.u32 %v588, 4294901760
      %629 = vmatpush.msra.mxu0 %v628
      %v630 = vand.u32 %v587, 4294901760
      %631 = vmatpush.msra.mxu0 %v630
      %v632 = vand.u32 %v586, 4294901760
      %633 = vmatpush.msra.mxu0 %v632
      %v634 = vand.u32 %v585, 4294901760
      %635 = vmatpush.msra.mxu0 %v634
      %v636 = vand.u32 %v584, 4294901760
      %637 = vmatpush.msra.mxu0 %v636
      %v638 = vand.u32 %v583, 4294901760
      %639 = vmatpush.msra.mxu0 %v638
      %v640 = vand.u32 %v582, 4294901760
      %641 = vmatpush.msra.mxu0 %v640
      %v642 = vand.u32 %v581, 4294901760
      %643 = vmatpush.msra.mxu0 %v642
      %v644 = vand.u32 %v580, 4294901760
      %645 = vmatpush.msra.mxu0 %v644
      %v646 = vand.u32 %v579, 4294901760
      %647 = vmatpush.msra.mxu0 %v646
      %v648 = vand.u32 %v578, 4294901760
      %649 = vmatpush.msra.mxu0 %v648
      %v650 = vand.u32 %v577, 4294901760
      %651 = vmatpush.msra.mxu0 %v650
      %v652 = vand.u32 %v576, 4294901760
      %653 = vmatpush.msra.mxu0 %v652
      %v654 = vand.u32 %v575, 4294901760
      %655 = vmatpush.msra.mxu0 %v654
      %v656 = vand.u32 %v574, 4294901760
      %657 = vmatpush.msra.mxu0 %v656
      %v658 = vand.u32 %v573, 4294901760
      %659 = vmatpush.msra.mxu0 %v658
      %v660 = vand.u32 %v619, 4294901760
      %v661 = vsub.f32 %v619, %v660
      %v662 = vand.u32 %v661, 4294901760
      %v663 = vsub.f32 %v661, %v662
      %v664 = vand.u32 %v663, 4294901760
      %665 = vmatmul.f32.gmra.mxu0 %v664
      %v666 = vpop.f32.mrf.mxu0
      %v667 = vadd.f32 %v600, %v666
      %v668 = vand.u32 %v620, 4294901760
      %v669 = vsub.f32 %v620, %v668
      %v670 = vand.u32 %v669, 4294901760
      %v671 = vsub.f32 %v669, %v670
      %v672 = vand.u32 %v671, 4294901760
      %673 = vmatmul.f32.gmra.mxu0 %v672
      %v674 = vpop.f32.mrf.mxu0
      %v675 = vadd.f32 %v605, %v674
      %676 = vdwg.mxu0
      %v677 = vand.u32 %v588, 4294901760
      %v678 = vsub.f32 %v588, %v677
      %v679 = vand.u32 %v678, 4294901760
      %v680 = vsub.f32 %v678, %v679
      %v681 = vand.u32 %v680, 4294901760
      %682 = vmatpush.msra.mxu0 %v681
      %v683 = vand.u32 %v587, 4294901760
      %v684 = vsub.f32 %v587, %v683
      %v685 = vand.u32 %v684, 4294901760
      %v686 = vsub.f32 %v684, %v685
      %v687 = vand.u32 %v686, 4294901760
      %688 = vmatpush.msra.mxu0 %v687
      %v689 = vand.u32 %v586, 4294901760
      %v690 = vsub.f32 %v586, %v689
      %v691 = vand.u32 %v690, 4294901760
      %v692 = vsub.f32 %v690, %v691
      %v693 = vand.u32 %v692, 4294901760
      %694 = vmatpush.msra.mxu0 %v693
      %v695 = vand.u32 %v585, 4294901760
      %v696 = vsub.f32 %v585, %v695
      %v697 = vand.u32 %v696, 4294901760
      %v698 = vsub.f32 %v696, %v697
      %v699 = vand.u32 %v698, 4294901760
      %700 = vmatpush.msra.mxu0 %v699
      %v701 = vand.u32 %v584, 4294901760
      %v702 = vsub.f32 %v584, %v701
      %v703 = vand.u32 %v702, 4294901760
      %v704 = vsub.f32 %v702, %v703
      %v705 = vand.u32 %v704, 4294901760
      %706 = vmatpush.msra.mxu0 %v705
      %v707 = vand.u32 %v583, 4294901760
      %v708 = vsub.f32 %v583, %v707
      %v709 = vand.u32 %v708, 4294901760
      %v710 = vsub.f32 %v708, %v709
      %v711 = vand.u32 %v710, 4294901760
      %712 = vmatpush.msra.mxu0 %v711
      %v713 = vand.u32 %v582, 4294901760
      %v714 = vsub.f32 %v582, %v713
      %v715 = vand.u32 %v714, 4294901760
      %v716 = vsub.f32 %v714, %v715
      %v717 = vand.u32 %v716, 4294901760
      %718 = vmatpush.msra.mxu0 %v717
      %v719 = vand.u32 %v581, 4294901760
      %v720 = vsub.f32 %v581, %v719
      %v721 = vand.u32 %v720, 4294901760
      %v722 = vsub.f32 %v720, %v721
      %v723 = vand.u32 %v722, 4294901760
      %724 = vmatpush.msra.mxu0 %v723
      %v725 = vand.u32 %v580, 4294901760
      %v726 = vsub.f32 %v580, %v725
      %v727 = vand.u32 %v726, 4294901760
      %v728 = vsub.f32 %v726, %v727
      %v729 = vand.u32 %v728, 4294901760
      %730 = vmatpush.msra.mxu0 %v729
      %v731 = vand.u32 %v579, 4294901760
      %v732 = vsub.f32 %v579, %v731
      %v733 = vand.u32 %v732, 4294901760
      %v734 = vsub.f32 %v732, %v733
      %v735 = vand.u32 %v734, 4294901760
      %736 = vmatpush.msra.mxu0 %v735
      %v737 = vand.u32 %v578, 4294901760
      %v738 = vsub.f32 %v578, %v737
      %v739 = vand.u32 %v738, 4294901760
      %v740 = vsub.f32 %v738, %v739
      %v741 = vand.u32 %v740, 4294901760
      %742 = vmatpush.msra.mxu0 %v741
      %v743 = vand.u32 %v577, 4294901760
      %v744 = vsub.f32 %v577, %v743
      %v745 = vand.u32 %v744, 4294901760
      %v746 = vsub.f32 %v744, %v745
      %v747 = vand.u32 %v746, 4294901760
      %748 = vmatpush.msra.mxu0 %v747
      %v749 = vand.u32 %v576, 4294901760
      %v750 = vsub.f32 %v576, %v749
      %v751 = vand.u32 %v750, 4294901760
      %v752 = vsub.f32 %v750, %v751
      %v753 = vand.u32 %v752, 4294901760
      %754 = vmatpush.msra.mxu0 %v753
      %v755 = vand.u32 %v575, 4294901760
      %v756 = vsub.f32 %v575, %v755
      %v757 = vand.u32 %v756, 4294901760
      %v758 = vsub.f32 %v756, %v757
      %v759 = vand.u32 %v758, 4294901760
      %760 = vmatpush.msra.mxu0 %v759
      %v761 = vand.u32 %v574, 4294901760
      %v762 = vsub.f32 %v574, %v761
      %v763 = vand.u32 %v762, 4294901760
      %v764 = vsub.f32 %v762, %v763
      %v765 = vand.u32 %v764, 4294901760
      %766 = vmatpush.msra.mxu0 %v765
      %v767 = vand.u32 %v573, 4294901760
      %v768 = vsub.f32 %v573, %v767
      %v769 = vand.u32 %v768, 4294901760
      %v770 = vsub.f32 %v768, %v769
      %v771 = vand.u32 %v770, 4294901760
      %772 = vmatpush.msra.mxu0 %v771
      %v773 = vand.u32 %v619, 4294901760
      %774 = vmatmul.f32.gmra.mxu0 %v773
      %v775 = vpop.f32.mrf.mxu0
      %v776 = vadd.f32 %v667, %v775
      %v777 = vand.u32 %v620, 4294901760
      %778 = vmatmul.f32.gmra.mxu0 %v777
      %v779 = vpop.f32.mrf.mxu0
      %v780 = vadd.f32 %v675, %v779
      %781 = vdwg.mxu0
      %v782 = vand.u32 %v588, 4294901760
      %v783 = vsub.f32 %v588, %v782
      %784 = vmatpush.msra.mxu0 %v783
      %v785 = vand.u32 %v587, 4294901760
      %v786 = vsub.f32 %v587, %v785
      %787 = vmatpush.msra.mxu0 %v786
      %v788 = vand.u32 %v586, 4294901760
      %v789 = vsub.f32 %v586, %v788
      %790 = vmatpush.msra.mxu0 %v789
      %v791 = vand.u32 %v585, 4294901760
      %v792 = vsub.f32 %v585, %v791
      %793 = vmatpush.msra.mxu0 %v792
      %v794 = vand.u32 %v584, 4294901760
      %v795 = vsub.f32 %v584, %v794
      %796 = vmatpush.msra.mxu0 %v795
      %v797 = vand.u32 %v583, 4294901760
      %v798 = vsub.f32 %v583, %v797
      %799 = vmatpush.msra.mxu0 %v798
      %v800 = vand.u32 %v582, 4294901760
      %v801 = vsub.f32 %v582, %v800
      %802 = vmatpush.msra.mxu0 %v801
      %v803 = vand.u32 %v581, 4294901760
      %v804 = vsub.f32 %v581, %v803
      %805 = vmatpush.msra.mxu0 %v804
      %v806 = vand.u32 %v580, 4294901760
      %v807 = vsub.f32 %v580, %v806
      %808 = vmatpush.msra.mxu0 %v807
      %v809 = vand.u32 %v579, 4294901760
      %v810 = vsub.f32 %v579, %v809
      %811 = vmatpush.msra.mxu0 %v810
      %v812 = vand.u32 %v578, 4294901760
      %v813 = vsub.f32 %v578, %v812
      %814 = vmatpush.msra.mxu0 %v813
      %v815 = vand.u32 %v577, 4294901760
      %v816 = vsub.f32 %v577, %v815
      %817 = vmatpush.msra.mxu0 %v816
      %v818 = vand.u32 %v576, 4294901760
      %v819 = vsub.f32 %v576, %v818
      %820 = vmatpush.msra.mxu0 %v819
      %v821 = vand.u32 %v575, 4294901760
      %v822 = vsub.f32 %v575, %v821
      %823 = vmatpush.msra.mxu0 %v822
      %v824 = vand.u32 %v574, 4294901760
      %v825 = vsub.f32 %v574, %v824
      %826 = vmatpush.msra.mxu0 %v825
      %v827 = vand.u32 %v573, 4294901760
      %v828 = vsub.f32 %v573, %v827
      %829 = vmatpush.msra.mxu0 %v828
      %v830 = vand.u32 %v619, 4294901760
      %v831 = vsub.f32 %v619, %v830
      %832 = vmatmul.f32.gmra.mxu0 %v831
      %v833 = vpop.f32.mrf.mxu0
      %v834 = vadd.f32 %v776, %v833
      %v835 = vand.u32 %v620, 4294901760
      %v836 = vsub.f32 %v620, %v835
      %837 = vmatmul.f32.gmra.mxu0 %v836
      %v838 = vpop.f32.mrf.mxu0
      %v839 = vadd.f32 %v780, %v838
      %840 = vdwg.mxu0
      %v841 = vand.u32 %v588, 4294901760
      %842 = vmatpush.msra.mxu0 %v841
      %v843 = vand.u32 %v587, 4294901760
      %844 = vmatpush.msra.mxu0 %v843
      %v845 = vand.u32 %v586, 4294901760
      %846 = vmatpush.msra.mxu0 %v845
      %v847 = vand.u32 %v585, 4294901760
      %848 = vmatpush.msra.mxu0 %v847
      %v849 = vand.u32 %v584, 4294901760
      %850 = vmatpush.msra.mxu0 %v849
      %v851 = vand.u32 %v583, 4294901760
      %852 = vmatpush.msra.mxu0 %v851
      %v853 = vand.u32 %v582, 4294901760
      %854 = vmatpush.msra.mxu0 %v853
      %v855 = vand.u32 %v581, 4294901760
      %856 = vmatpush.msra.mxu0 %v855
      %v857 = vand.u32 %v580, 4294901760
      %858 = vmatpush.msra.mxu0 %v857
      %v859 = vand.u32 %v579, 4294901760
      %860 = vmatpush.msra.mxu0 %v859
      %v861 = vand.u32 %v578, 4294901760
      %862 = vmatpush.msra.mxu0 %v861
      %v863 = vand.u32 %v577, 4294901760
      %864 = vmatpush.msra.mxu0 %v863
      %v865 = vand.u32 %v576, 4294901760
      %866 = vmatpush.msra.mxu0 %v865
      %v867 = vand.u32 %v575, 4294901760
      %868 = vmatpush.msra.mxu0 %v867
      %v869 = vand.u32 %v574, 4294901760
      %870 = vmatpush.msra.mxu0 %v869
      %v871 = vand.u32 %v573, 4294901760
      %872 = vmatpush.msra.mxu0 %v871
      %v873 = vand.u32 %v619, 4294901760
      %v874 = vsub.f32 %v619, %v873
      %v875 = vand.u32 %v874, 4294901760
      %876 = vmatmul.f32.gmra.mxu0 %v875
      %v877 = vpop.f32.mrf.mxu0
      %v878 = vadd.f32 %v834, %v877
      %v879 = vand.u32 %v620, 4294901760
      %v880 = vsub.f32 %v620, %v879
      %v881 = vand.u32 %v880, 4294901760
      %882 = vmatmul.f32.gmra.mxu0 %v881
      %v883 = vpop.f32.mrf.mxu0
      %v884 = vadd.f32 %v839, %v883
      %885 = vdwg.mxu0
      %v886 = vand.u32 %v588, 4294901760
      %v887 = vsub.f32 %v588, %v886
      %v888 = vand.u32 %v887, 4294901760
      %889 = vmatpush.msra.mxu0 %v888
      %v890 = vand.u32 %v587, 4294901760
      %v891 = vsub.f32 %v587, %v890
      %v892 = vand.u32 %v891, 4294901760
      %893 = vmatpush.msra.mxu0 %v892
      %v894 = vand.u32 %v586, 4294901760
      %v895 = vsub.f32 %v586, %v894
      %v896 = vand.u32 %v895, 4294901760
      %897 = vmatpush.msra.mxu0 %v896
      %v898 = vand.u32 %v585, 4294901760
      %v899 = vsub.f32 %v585, %v898
      %v900 = vand.u32 %v899, 4294901760
      %901 = vmatpush.msra.mxu0 %v900
      %v902 = vand.u32 %v584, 4294901760
      %v903 = vsub.f32 %v584, %v902
      %v904 = vand.u32 %v903, 4294901760
      %905 = vmatpush.msra.mxu0 %v904
      %v906 = vand.u32 %v583, 4294901760
      %v907 = vsub.f32 %v583, %v906
      %v908 = vand.u32 %v907, 4294901760
      %909 = vmatpush.msra.mxu0 %v908
      %v910 = vand.u32 %v582, 4294901760
      %v911 = vsub.f32 %v582, %v910
      %v912 = vand.u32 %v911, 4294901760
      %913 = vmatpush.msra.mxu0 %v912
      %v914 = vand.u32 %v581, 4294901760
      %v915 = vsub.f32 %v581, %v914
      %v916 = vand.u32 %v915, 4294901760
      %917 = vmatpush.msra.mxu0 %v916
      %v918 = vand.u32 %v580, 4294901760
      %v919 = vsub.f32 %v580, %v918
      %v920 = vand.u32 %v919, 4294901760
      %921 = vmatpush.msra.mxu0 %v920
      %v922 = vand.u32 %v579, 4294901760
      %v923 = vsub.f32 %v579, %v922
      %v924 = vand.u32 %v923, 4294901760
      %925 = vmatpush.msra.mxu0 %v924
      %v926 = vand.u32 %v578, 4294901760
      %v927 = vsub.f32 %v578, %v926
      %v928 = vand.u32 %v927, 4294901760
      %929 = vmatpush.msra.mxu0 %v928
      %v930 = vand.u32 %v577, 4294901760
      %v931 = vsub.f32 %v577, %v930
      %v932 = vand.u32 %v931, 4294901760
      %933 = vmatpush.msra.mxu0 %v932
      %v934 = vand.u32 %v576, 4294901760
      %v935 = vsub.f32 %v576, %v934
      %v936 = vand.u32 %v935, 4294901760
      %937 = vmatpush.msra.mxu0 %v936
      %v938 = vand.u32 %v575, 4294901760
      %v939 = vsub.f32 %v575, %v938
      %v940 = vand.u32 %v939, 4294901760
      %941 = vmatpush.msra.mxu0 %v940
      %v942 = vand.u32 %v574, 4294901760
      %v943 = vsub.f32 %v574, %v942
      %v944 = vand.u32 %v943, 4294901760
      %945 = vmatpush.msra.mxu0 %v944
      %v946 = vand.u32 %v573, 4294901760
      %v947 = vsub.f32 %v573, %v946
      %v948 = vand.u32 %v947, 4294901760
      %949 = vmatpush.msra.mxu0 %v948
      %v950 = vand.u32 %v619, 4294901760
      %951 = vmatmul.f32.gmra.mxu0 %v950
      %v952 = vpop.f32.mrf.mxu0
      %v953 = vadd.f32 %v878, %v952
      %v954 = vand.u32 %v620, 4294901760
      %955 = vmatmul.f32.gmra.mxu0 %v954
      %v956 = vpop.f32.mrf.mxu0
      %v957 = vadd.f32 %v884, %v956
      %958 = vdwg.mxu0
      %v959 = vand.u32 %v588, 4294901760
      %960 = vmatpush.msra.mxu0 %v959
      %v961 = vand.u32 %v587, 4294901760
      %962 = vmatpush.msra.mxu0 %v961
      %v963 = vand.u32 %v586, 4294901760
      %964 = vmatpush.msra.mxu0 %v963
      %v965 = vand.u32 %v585, 4294901760
      %966 = vmatpush.msra.mxu0 %v965
      %v967 = vand.u32 %v584, 4294901760
      %968 = vmatpush.msra.mxu0 %v967
      %v969 = vand.u32 %v583, 4294901760
      %970 = vmatpush.msra.mxu0 %v969
      %v971 = vand.u32 %v582, 4294901760
      %972 = vmatpush.msra.mxu0 %v971
      %v973 = vand.u32 %v581, 4294901760
      %974 = vmatpush.msra.mxu0 %v973
      %v975 = vand.u32 %v580, 4294901760
      %976 = vmatpush.msra.mxu0 %v975
      %v977 = vand.u32 %v579, 4294901760
      %978 = vmatpush.msra.mxu0 %v977
      %v979 = vand.u32 %v578, 4294901760
      %980 = vmatpush.msra.mxu0 %v979
      %v981 = vand.u32 %v577, 4294901760
      %982 = vmatpush.msra.mxu0 %v981
      %v983 = vand.u32 %v576, 4294901760
      %984 = vmatpush.msra.mxu0 %v983
      %v985 = vand.u32 %v575, 4294901760
      %986 = vmatpush.msra.mxu0 %v985
      %v987 = vand.u32 %v574, 4294901760
      %988 = vmatpush.msra.mxu0 %v987
      %v989 = vand.u32 %v573, 4294901760
      %990 = vmatpush.msra.mxu0 %v989
      %v991 = vand.u32 %v619, 4294901760
      %992 = vmatmul.f32.gmra.mxu0 %v991
      %v993 = vpop.f32.mrf.mxu0
      %v994 = vadd.f32 %v953, %v993
      %v995 = vand.u32 %v620, 4294901760
      %996 = vmatmul.f32.gmra.mxu0 %v995
      %v997 = vpop.f32.mrf.mxu0
      %v998 = vadd.f32 %v957, %v997
      %999 = vdwg.mxu0
      %1000 = vmatpush.msra.mxu0 0.0
      %1001 = vmatpush.msra.mxu0 0.0
      %1002 = vmatpush.msra.mxu0 0.0
      %1003 = vmatpush.msra.mxu0 0.0
      %1004 = vmatpush.msra.mxu0 0.0
      %1005 = vmatpush.msra.mxu0 0.0
      %1006 = vmatpush.msra.mxu0 0.0
      %v1007 = vand.u32 %v597, 4294901760
      %1008 = vmatpush.msra.mxu0 %v1007
      %v1009 = vand.u32 %v596, 4294901760
      %1010 = vmatpush.msra.mxu0 %v1009
      %v1011 = vand.u32 %v595, 4294901760
      %1012 = vmatpush.msra.mxu0 %v1011
      %v1013 = vand.u32 %v594, 4294901760
      %1014 = vmatpush.msra.mxu0 %v1013
      %v1015 = vand.u32 %v593, 4294901760
      %1016 = vmatpush.msra.mxu0 %v1015
      %v1017 = vand.u32 %v592, 4294901760
      %1018 = vmatpush.msra.mxu0 %v1017
      %v1019 = vand.u32 %v591, 4294901760
      %1020 = vmatpush.msra.mxu0 %v1019
      %v1021 = vand.u32 %v590, 4294901760
      %1022 = vmatpush.msra.mxu0 %v1021
      %v1023 = vand.u32 %v589, 4294901760
      %1024 = vmatpush.msra.mxu0 %v1023
      %v1025 = vand.u32 %v624, 4294901760
      %v1026 = vsub.f32 %v624, %v1025
      %v1027 = vand.u32 %v1026, 4294901760
      %v1028 = vsub.f32 %v1026, %v1027
      %v1029 = vand.u32 %v1028, 4294901760
      %1030 = vmatmul.f32.gmra.mxu0 %v1029
      %v1031 = vpop.f32.mrf.mxu0
      %v1032 = vadd.f32 %v994, %v1031
      %v1033 = vand.u32 %v626, 4294901760
      %v1034 = vsub.f32 %v626, %v1033
      %v1035 = vand.u32 %v1034, 4294901760
      %v1036 = vsub.f32 %v1034, %v1035
      %v1037 = vand.u32 %v1036, 4294901760
      %1038 = vmatmul.f32.gmra.mxu0 %v1037
      %v1039 = vpop.f32.mrf.mxu0
      %v1040 = vadd.f32 %v998, %v1039
      %1041 = vdwg.mxu0
      %1042 = vmatpush.msra.mxu0 0.0
      %1043 = vmatpush.msra.mxu0 0.0
      %1044 = vmatpush.msra.mxu0 0.0
      %1045 = vmatpush.msra.mxu0 0.0
      %1046 = vmatpush.msra.mxu0 0.0
      %1047 = vmatpush.msra.mxu0 0.0
      %1048 = vmatpush.msra.mxu0 0.0
      %v1049 = vand.u32 %v597, 4294901760
      %v1050 = vsub.f32 %v597, %v1049
      %v1051 = vand.u32 %v1050, 4294901760
      %v1052 = vsub.f32 %v1050, %v1051
      %v1053 = vand.u32 %v1052, 4294901760
      %1054 = vmatpush.msra.mxu0 %v1053
      %v1055 = vand.u32 %v596, 4294901760
      %v1056 = vsub.f32 %v596, %v1055
      %v1057 = vand.u32 %v1056, 4294901760
      %v1058 = vsub.f32 %v1056, %v1057
      %v1059 = vand.u32 %v1058, 4294901760
      %1060 = vmatpush.msra.mxu0 %v1059
      %v1061 = vand.u32 %v595, 4294901760
      %v1062 = vsub.f32 %v595, %v1061
      %v1063 = vand.u32 %v1062, 4294901760
      %v1064 = vsub.f32 %v1062, %v1063
      %v1065 = vand.u32 %v1064, 4294901760
      %1066 = vmatpush.msra.mxu0 %v1065
      %v1067 = vand.u32 %v594, 4294901760
      %v1068 = vsub.f32 %v594, %v1067
      %v1069 = vand.u32 %v1068, 4294901760
      %v1070 = vsub.f32 %v1068, %v1069
      %v1071 = vand.u32 %v1070, 4294901760
      %1072 = vmatpush.msra.mxu0 %v1071
      %v1073 = vand.u32 %v593, 4294901760
      %v1074 = vsub.f32 %v593, %v1073
      %v1075 = vand.u32 %v1074, 4294901760
      %v1076 = vsub.f32 %v1074, %v1075
      %v1077 = vand.u32 %v1076, 4294901760
      %1078 = vmatpush.msra.mxu0 %v1077
      %v1079 = vand.u32 %v592, 4294901760
      %v1080 = vsub.f32 %v592, %v1079
      %v1081 = vand.u32 %v1080, 4294901760
      %v1082 = vsub.f32 %v1080, %v1081
      %v1083 = vand.u32 %v1082, 4294901760
      %1084 = vmatpush.msra.mxu0 %v1083
      %v1085 = vand.u32 %v591, 4294901760
      %v1086 = vsub.f32 %v591, %v1085
      %v1087 = vand.u32 %v1086, 4294901760
      %v1088 = vsub.f32 %v1086, %v1087
      %v1089 = vand.u32 %v1088, 4294901760
      %1090 = vmatpush.msra.mxu0 %v1089
      %v1091 = vand.u32 %v590, 4294901760
      %v1092 = vsub.f32 %v590, %v1091
      %v1093 = vand.u32 %v1092, 4294901760
      %v1094 = vsub.f32 %v1092, %v1093
      %v1095 = vand.u32 %v1094, 4294901760
      %1096 = vmatpush.msra.mxu0 %v1095
      %v1097 = vand.u32 %v589, 4294901760
      %v1098 = vsub.f32 %v589, %v1097
      %v1099 = vand.u32 %v1098, 4294901760
      %v1100 = vsub.f32 %v1098, %v1099
      %v1101 = vand.u32 %v1100, 4294901760
      %1102 = vmatpush.msra.mxu0 %v1101
      %v1103 = vand.u32 %v624, 4294901760
      %1104 = vmatmul.f32.gmra.mxu0 %v1103
      %v1105 = vpop.f32.mrf.mxu0
      %v1106 = vadd.f32 %v1032, %v1105
      %v1107 = vand.u32 %v626, 4294901760
      %1108 = vmatmul.f32.gmra.mxu0 %v1107
      %v1109 = vpop.f32.mrf.mxu0
      %v1110 = vadd.f32 %v1040, %v1109
      %1111 = vdwg.mxu0
      %1112 = vmatpush.msra.mxu0 0.0
      %1113 = vmatpush.msra.mxu0 0.0
      %1114 = vmatpush.msra.mxu0 0.0
      %1115 = vmatpush.msra.mxu0 0.0
      %1116 = vmatpush.msra.mxu0 0.0
      %1117 = vmatpush.msra.mxu0 0.0
      %1118 = vmatpush.msra.mxu0 0.0
      %v1119 = vand.u32 %v597, 4294901760
      %v1120 = vsub.f32 %v597, %v1119
      %1121 = vmatpush.msra.mxu0 %v1120
      %v1122 = vand.u32 %v596, 4294901760
      %v1123 = vsub.f32 %v596, %v1122
      %1124 = vmatpush.msra.mxu0 %v1123
      %v1125 = vand.u32 %v595, 4294901760
      %v1126 = vsub.f32 %v595, %v1125
      %1127 = vmatpush.msra.mxu0 %v1126
      %v1128 = vand.u32 %v594, 4294901760
      %v1129 = vsub.f32 %v594, %v1128
      %1130 = vmatpush.msra.mxu0 %v1129
      %v1131 = vand.u32 %v593, 4294901760
      %v1132 = vsub.f32 %v593, %v1131
      %1133 = vmatpush.msra.mxu0 %v1132
      %v1134 = vand.u32 %v592, 4294901760
      %v1135 = vsub.f32 %v592, %v1134
      %1136 = vmatpush.msra.mxu0 %v1135
      %v1137 = vand.u32 %v591, 4294901760
      %v1138 = vsub.f32 %v591, %v1137
      %1139 = vmatpush.msra.mxu0 %v1138
      %v1140 = vand.u32 %v590, 4294901760
      %v1141 = vsub.f32 %v590, %v1140
      %1142 = vmatpush.msra.mxu0 %v1141
      %v1143 = vand.u32 %v589, 4294901760
      %v1144 = vsub.f32 %v589, %v1143
      %1145 = vmatpush.msra.mxu0 %v1144
      %v1146 = vand.u32 %v624, 4294901760
      %v1147 = vsub.f32 %v624, %v1146
      %1148 = vmatmul.f32.gmra.mxu0 %v1147
      %v1149 = vpop.f32.mrf.mxu0
      %v1150 = vadd.f32 %v1106, %v1149
      %v1151 = vand.u32 %v626, 4294901760
      %v1152 = vsub.f32 %v626, %v1151
      %1153 = vmatmul.f32.gmra.mxu0 %v1152
      %v1154 = vpop.f32.mrf.mxu0
      %v1155 = vadd.f32 %v1110, %v1154
      %1156 = vdwg.mxu0
      %1157 = vmatpush.msra.mxu0 0.0
      %1158 = vmatpush.msra.mxu0 0.0
      %1159 = vmatpush.msra.mxu0 0.0
      %1160 = vmatpush.msra.mxu0 0.0
      %1161 = vmatpush.msra.mxu0 0.0
      %1162 = vmatpush.msra.mxu0 0.0
      %1163 = vmatpush.msra.mxu0 0.0
      %v1164 = vand.u32 %v597, 4294901760
      %1165 = vmatpush.msra.mxu0 %v1164
      %v1166 = vand.u32 %v596, 4294901760
      %1167 = vmatpush.msra.mxu0 %v1166
      %v1168 = vand.u32 %v595, 4294901760
      %1169 = vmatpush.msra.mxu0 %v1168
      %v1170 = vand.u32 %v594, 4294901760
      %1171 = vmatpush.msra.mxu0 %v1170
      %v1172 = vand.u32 %v593, 4294901760
      %1173 = vmatpush.msra.mxu0 %v1172
      %v1174 = vand.u32 %v592, 4294901760
      %1175 = vmatpush.msra.mxu0 %v1174
      %v1176 = vand.u32 %v591, 4294901760
      %1177 = vmatpush.msra.mxu0 %v1176
      %v1178 = vand.u32 %v590, 4294901760
      %1179 = vmatpush.msra.mxu0 %v1178
      %v1180 = vand.u32 %v589, 4294901760
      %1181 = vmatpush.msra.mxu0 %v1180
      %v1182 = vand.u32 %v624, 4294901760
      %v1183 = vsub.f32 %v624, %v1182
      %v1184 = vand.u32 %v1183, 4294901760
      %1185 = vmatmul.f32.gmra.mxu0 %v1184
      %v1186 = vpop.f32.mrf.mxu0
      %v1187 = vadd.f32 %v1150, %v1186
      %v1188 = vand.u32 %v626, 4294901760
      %v1189 = vsub.f32 %v626, %v1188
      %v1190 = vand.u32 %v1189, 4294901760
      %1191 = vmatmul.f32.gmra.mxu0 %v1190
      %v1192 = vpop.f32.mrf.mxu0
      %v1193 = vadd.f32 %v1155, %v1192
      %1194 = vdwg.mxu0
      %1195 = vmatpush.msra.mxu0 0.0
      %1196 = vmatpush.msra.mxu0 0.0
      %1197 = vmatpush.msra.mxu0 0.0
      %1198 = vmatpush.msra.mxu0 0.0
      %1199 = vmatpush.msra.mxu0 0.0
      %1200 = vmatpush.msra.mxu0 0.0
      %1201 = vmatpush.msra.mxu0 0.0
      %v1202 = vand.u32 %v597, 4294901760
      %v1203 = vsub.f32 %v597, %v1202
      %v1204 = vand.u32 %v1203, 4294901760
      %1205 = vmatpush.msra.mxu0 %v1204
      %v1206 = vand.u32 %v596, 4294901760
      %v1207 = vsub.f32 %v596, %v1206
      %v1208 = vand.u32 %v1207, 4294901760
      %1209 = vmatpush.msra.mxu0 %v1208
      %v1210 = vand.u32 %v595, 4294901760
      %v1211 = vsub.f32 %v595, %v1210
      %v1212 = vand.u32 %v1211, 4294901760
      %1213 = vmatpush.msra.mxu0 %v1212
      %v1214 = vand.u32 %v594, 4294901760
      %v1215 = vsub.f32 %v594, %v1214
      %v1216 = vand.u32 %v1215, 4294901760
      %1217 = vmatpush.msra.mxu0 %v1216
      %v1218 = vand.u32 %v593, 4294901760
      %v1219 = vsub.f32 %v593, %v1218
      %v1220 = vand.u32 %v1219, 4294901760
      %1221 = vmatpush.msra.mxu0 %v1220
      %v1222 = vand.u32 %v592, 4294901760
      %v1223 = vsub.f32 %v592, %v1222
      %v1224 = vand.u32 %v1223, 4294901760
      %1225 = vmatpush.msra.mxu0 %v1224
      %v1226 = vand.u32 %v591, 4294901760
      %v1227 = vsub.f32 %v591, %v1226
      %v1228 = vand.u32 %v1227, 4294901760
      %1229 = vmatpush.msra.mxu0 %v1228
      %v1230 = vand.u32 %v590, 4294901760
      %v1231 = vsub.f32 %v590, %v1230
      %v1232 = vand.u32 %v1231, 4294901760
      %1233 = vmatpush.msra.mxu0 %v1232
      %v1234 = vand.u32 %v589, 4294901760
      %v1235 = vsub.f32 %v589, %v1234
      %v1236 = vand.u32 %v1235, 4294901760
      %1237 = vmatpush.msra.mxu0 %v1236
      %v1238 = vand.u32 %v624, 4294901760
      %1239 = vmatmul.f32.gmra.mxu0 %v1238
      %v1240 = vpop.f32.mrf.mxu0
      %v1241 = vadd.f32 %v1187, %v1240
      %v1242 = vand.u32 %v626, 4294901760
      %1243 = vmatmul.f32.gmra.mxu0 %v1242
      %v1244 = vpop.f32.mrf.mxu0
      %v1245 = vadd.f32 %v1193, %v1244
      %1246 = vdwg.mxu0
      %1247 = vmatpush.msra.mxu0 0.0
      %1248 = vmatpush.msra.mxu0 0.0
      %1249 = vmatpush.msra.mxu0 0.0
      %1250 = vmatpush.msra.mxu0 0.0
      %1251 = vmatpush.msra.mxu0 0.0
      %1252 = vmatpush.msra.mxu0 0.0
      %1253 = vmatpush.msra.mxu0 0.0
      %v1254 = vand.u32 %v597, 4294901760
      %1255 = vmatpush.msra.mxu0 %v1254
      %v1256 = vand.u32 %v596, 4294901760
      %1257 = vmatpush.msra.mxu0 %v1256
      %v1258 = vand.u32 %v595, 4294901760
      %1259 = vmatpush.msra.mxu0 %v1258
      %v1260 = vand.u32 %v594, 4294901760
      %1261 = vmatpush.msra.mxu0 %v1260
      %v1262 = vand.u32 %v593, 4294901760
      %1263 = vmatpush.msra.mxu0 %v1262
      %v1264 = vand.u32 %v592, 4294901760
      %1265 = vmatpush.msra.mxu0 %v1264
      %v1266 = vand.u32 %v591, 4294901760
      %1267 = vmatpush.msra.mxu0 %v1266
      %v1268 = vand.u32 %v590, 4294901760
      %1269 = vmatpush.msra.mxu0 %v1268
      %v1270 = vand.u32 %v589, 4294901760
      %1271 = vmatpush.msra.mxu0 %v1270
      %v1272 = vand.u32 %v624, 4294901760
      %1273 = vmatmul.f32.gmra.mxu0 %v1272
      %v1274 = vpop.f32.mrf.mxu0
      %v1275 = vadd.f32 %v1241, %v1274
      %v1276 = vand.u32 %v626, 4294901760
      %1277 = vmatmul.f32.gmra.mxu0 %v1276
      %v1278 = vpop.f32.mrf.mxu0
      %v1279 = vadd.f32 %v1245, %v1278
      %1280 = vdwg.mxu0
      %v1281 = vtanh.pop %v1275
      %v1282 = vtanh.pop %v1279
      %vm1283 = vcmask 441344
      %1284 = vst.msk [vmem:[#allocation2] sm:$0xff] %vm1283, 0.0
      %vm1285 = vcmask 440320
      %1286 = vst.msk [vmem:[#allocation2 + $0x8] sm:$0x7f] %vm1285, 0.0
      %1289 = vrot.lane.b32.xlu0 %v1281, 19
      %v1290 = vpop.permute.xlu0 %1289
      %1291 = vrot.lane.b32.xlu0 %v1282, 19
      %v1292 = vpop.permute.xlu0 %1291
      %vm1295 = vcmask 162968
      %1296 = vst.msk [vmem:[#allocation2] sm:$0xff] %vm1295, %v1290
      %vm1297 = vcmask 161944
      %1298 = vst.msk [vmem:[#allocation2 + $0x8] sm:$0x7f] %vm1297, %v1292
      %1299 = vrot.lane.b32.xlu0 %v1281, 21
      %v1300 = vpop.permute.xlu0 %1299
      %1301 = vrot.lane.b32.xlu0 %v1282, 21
      %v1302 = vpop.permute.xlu0 %1301
      %vm1305 = vcmask 187568
      %1306 = vst.msk [vmem:[#allocation2] sm:$0xff] %vm1305, %v1300
      %vm1307 = vcmask 186544
      %1308 = vst.msk [vmem:[#allocation2 + $0x8] sm:$0x7f] %vm1307, %v1302
      %1309 = vrot.lane.b32.xlu0 %v1281, 23
      %v1310 = vpop.permute.xlu0 %1309
      %1311 = vrot.lane.b32.xlu0 %v1282, 23
      %v1312 = vpop.permute.xlu0 %1311
      %vm1315 = vcmask 212168
      %1316 = vst.msk [vmem:[#allocation2] sm:$0xff] %vm1315, %v1310
      %vm1317 = vcmask 211144
      %1318 = vst.msk [vmem:[#allocation2 + $0x8] sm:$0x7f] %vm1317, %v1312
      %1319 = vrot.lane.b32.xlu0 %v1281, 25
      %v1320 = vpop.permute.xlu0 %1319
      %1321 = vrot.lane.b32.xlu0 %v1282, 25
      %v1322 = vpop.permute.xlu0 %1321
      %vm1325 = vcmask 236768
      %1326 = vst.msk [vmem:[#allocation2] sm:$0xff] %vm1325, %v1320
      %vm1327 = vcmask 235744
      %1328 = vst.msk [vmem:[#allocation2 + $0x8] sm:$0x7f] %vm1327, %v1322
      %1329 = vrot.lane.b32.xlu0 %v1281, 27
      %v1330 = vpop.permute.xlu0 %1329
      %1331 = vrot.lane.b32.xlu0 %v1282, 27
      %v1332 = vpop.permute.xlu0 %1331
      %vm1335 = vcmask 261368
      %1336 = vst.msk [vmem:[#allocation2] sm:$0xff] %vm1335, %v1330
      %vm1337 = vcmask 260344
      %1338 = vst.msk [vmem:[#allocation2 + $0x8] sm:$0x7f] %vm1337, %v1332
      %1339 = vrot.lane.b32.xlu0 %v1281, 29
      %v1340 = vpop.permute.xlu0 %1339
      %1341 = vrot.lane.b32.xlu0 %v1282, 29
      %v1342 = vpop.permute.xlu0 %1341
      %vm1345 = vcmask 285968
      %1346 = vst.msk [vmem:[#allocation2] sm:$0xff] %vm1345, %v1340
      %vm1347 = vcmask 284944
      %1348 = vst.msk [vmem:[#allocation2 + $0x8] sm:$0x7f] %vm1347, %v1342
      %v1349 = vld [vmem:[#allocation2] sm:$0xff]
      %v1350 = vld [vmem:[#allocation2 + $0x8] sm:$0x7f]
      %vm1351 = vcmask 285696
      %1352 = vst.msk [vmem:[#allocation5] sm:$0xff] %vm1351, %v1349
      %vm1353 = vcmask 284672
      %1354 = vst.msk [vmem:[#allocation5 + $0x8] sm:$0x7f] %vm1353, %v1350
      %v1355 = vld [vmem:[#allocation2] sm:$0xff]
      %v1356 = vld [vmem:[#allocation2 + $0x8] sm:$0x7f]
      %1359 = vrot.lane.b32.xlu0 %v1355, 127
      %v1360 = vpop.permute.xlu0 %1359
      %1361 = vrot.lane.b32.xlu0 %v1356, 127
      %v1362 = vpop.permute.xlu0 %1361
      %1365 = vst.msk [vmem:[#allocation5 + $0xf] sm:$0xff] %vm1351, %v1360
      %1366 = vst.msk [vmem:[#allocation5 + $0x17] sm:$0x7f] %vm1353, %v1362
      %v1367 = vld [vmem:[#allocation2] sm:$0xff]
      %v1368 = vld [vmem:[#allocation2 + $0x8] sm:$0x7f]
      %1371 = vrot.lane.b32.xlu0 %v1367, 126
      %v1372 = vpop.permute.xlu0 %1371
      %1373 = vrot.lane.b32.xlu0 %v1368, 126
      %v1374 = vpop.permute.xlu0 %1373
      %1377 = vst.msk [vmem:[#allocation5 + $0x1e] sm:$0xff] %vm1351, %v1372
      %1378 = vst.msk [vmem:[#allocation5 + $0x26] sm:$0x7f] %vm1353, %v1374
      %v1379 = vld [vmem:[#allocation2] sm:$0xff]
      %v1380 = vld [vmem:[#allocation2 + $0x8] sm:$0x7f]
      %1383 = vrot.lane.b32.xlu0 %v1379, 125
      %v1384 = vpop.permute.xlu0 %1383
      %1385 = vrot.lane.b32.xlu0 %v1380, 125
      %v1386 = vpop.permute.xlu0 %1385
      %1389 = vst.msk [vmem:[#allocation5 + $0x2d] sm:$0xff] %vm1351, %v1384
      %1390 = vst.msk [vmem:[#allocation5 + $0x35] sm:$0x7f] %vm1353, %v1386
      %v1391 = vld [vmem:[#allocation2] sm:$0xff]
      %v1392 = vld [vmem:[#allocation2 + $0x8] sm:$0x7f]
      %1395 = vrot.lane.b32.xlu0 %v1391, 124
      %v1396 = vpop.permute.xlu0 %1395
      %1397 = vrot.lane.b32.xlu0 %v1392, 124
      %v1398 = vpop.permute.xlu0 %1397
      %1401 = vst.msk [vmem:[#allocation5 + $0x3c] sm:$0xff] %vm1351, %v1396
      %1402 = vst.msk [vmem:[#allocation5 + $0x44] sm:$0x7f] %vm1353, %v1398
      %v1403 = vld [vmem:[#allocation2] sm:$0xff]
      %v1404 = vld [vmem:[#allocation2 + $0x8] sm:$0x7f]
      %1407 = vrot.lane.b32.xlu0 %v1403, 123
      %v1408 = vpop.permute.xlu0 %1407
      %1409 = vrot.lane.b32.xlu0 %v1404, 123
      %v1410 = vpop.permute.xlu0 %1409
      %1413 = vst.msk [vmem:[#allocation5 + $0x4b] sm:$0xff] %vm1351, %v1408
      %1414 = vst.msk [vmem:[#allocation5 + $0x53] sm:$0x7f] %vm1353, %v1410
      %v1415 = vld [vmem:[#allocation2] sm:$0xff]
      %v1416 = vld [vmem:[#allocation2 + $0x8] sm:$0x7f]
      %1419 = vrot.lane.b32.xlu0 %v1415, 122
      %v1420 = vpop.permute.xlu0 %1419
      %1421 = vrot.lane.b32.xlu0 %v1416, 122
      %v1422 = vpop.permute.xlu0 %1421
      %1425 = vst.msk [vmem:[#allocation5 + $0x5a] sm:$0xff] %vm1351, %v1420
      %1426 = vst.msk [vmem:[#allocation5 + $0x62] sm:$0x7f] %vm1353, %v1422
      %v1427 = vld [vmem:[#allocation2] sm:$0xff]
      %v1428 = vld [vmem:[#allocation2 + $0x8] sm:$0x7f]
      %1431 = vrot.lane.b32.xlu0 %v1427, 121
      %v1432 = vpop.permute.xlu0 %1431
      %1433 = vrot.lane.b32.xlu0 %v1428, 121
      %v1434 = vpop.permute.xlu0 %1433
      %1437 = vst.msk [vmem:[#allocation5 + $0x69] sm:$0xff] %vm1351, %v1432
      %1438 = vst.msk [vmem:[#allocation5 + $0x71] sm:$0x7f] %vm1353, %v1434
      %v1439 = vld [vmem:[#allocation2] sm:$0xff]
      %v1440 = vld [vmem:[#allocation2 + $0x8] sm:$0x7f]
      %1443 = vrot.lane.b32.xlu0 %v1439, 120
      %v1444 = vpop.permute.xlu0 %1443
      %1445 = vrot.lane.b32.xlu0 %v1440, 120
      %v1446 = vpop.permute.xlu0 %1445
      %1449 = vst.msk [vmem:[#allocation5 + $0x78] sm:$0xff] %vm1351, %v1444
      %1450 = vst.msk [vmem:[#allocation5 + $0x80] sm:$0x7f] %vm1353, %v1446
      %v1451 = vld [vmem:[#allocation2] sm:$0xff]
      %v1452 = vld [vmem:[#allocation2 + $0x8] sm:$0x7f]
      %1455 = vrot.lane.b32.xlu0 %v1451, 119
      %v1456 = vpop.permute.xlu0 %1455
      %1457 = vrot.lane.b32.xlu0 %v1452, 119
      %v1458 = vpop.permute.xlu0 %1457
      %1461 = vst.msk [vmem:[#allocation5 + $0x87] sm:$0xff] %vm1351, %v1456
      %1462 = vst.msk [vmem:[#allocation5 + $0x8f] sm:$0x7f] %vm1353, %v1458
      %v1463 = vld [vmem:[#allocation2] sm:$0xff]
      %v1464 = vld [vmem:[#allocation2 + $0x8] sm:$0x7f]
      %1467 = vrot.lane.b32.xlu0 %v1463, 118
      %v1468 = vpop.permute.xlu0 %1467
      %1469 = vrot.lane.b32.xlu0 %v1464, 118
      %v1470 = vpop.permute.xlu0 %1469
      %1473 = vst.msk [vmem:[#allocation5 + $0x96] sm:$0xff] %vm1351, %v1468
      %1474 = vst.msk [vmem:[#allocation5 + $0x9e] sm:$0x7f] %vm1353, %v1470
      %v1475 = vld [vmem:[#allocation2] sm:$0xff]
      %v1476 = vld [vmem:[#allocation2 + $0x8] sm:$0x7f]
      %1479 = vrot.lane.b32.xlu0 %v1475, 117
      %v1480 = vpop.permute.xlu0 %1479
      %1481 = vrot.lane.b32.xlu0 %v1476, 117
      %v1482 = vpop.permute.xlu0 %1481
      %1485 = vst.msk [vmem:[#allocation5 + $0xa5] sm:$0xff] %vm1351, %v1480
      %1486 = vst.msk [vmem:[#allocation5 + $0xad] sm:$0x7f] %vm1353, %v1482
      %v1487 = vld [vmem:[#allocation2] sm:$0xff]
      %v1488 = vld [vmem:[#allocation2 + $0x8] sm:$0x7f]
      %1491 = vrot.lane.b32.xlu0 %v1487, 116
      %v1492 = vpop.permute.xlu0 %1491
      %1493 = vrot.lane.b32.xlu0 %v1488, 116
      %v1494 = vpop.permute.xlu0 %1493
      %1497 = vst.msk [vmem:[#allocation5 + $0xb4] sm:$0xff] %vm1351, %v1492
      %1498 = vst.msk [vmem:[#allocation5 + $0xbc] sm:$0x7f] %vm1353, %v1494
      %v1499 = vld [vmem:[#allocation2] sm:$0xff]
      %v1500 = vld [vmem:[#allocation2 + $0x8] sm:$0x7f]
      %1503 = vrot.lane.b32.xlu0 %v1499, 115
      %v1504 = vpop.permute.xlu0 %1503
      %1505 = vrot.lane.b32.xlu0 %v1500, 115
      %v1506 = vpop.permute.xlu0 %1505
      %1509 = vst.msk [vmem:[#allocation5 + $0xc3] sm:$0xff] %vm1351, %v1504
      %1510 = vst.msk [vmem:[#allocation5 + $0xcb] sm:$0x7f] %vm1353, %v1506
      %v1511 = vld [vmem:[#allocation2] sm:$0xff]
      %v1512 = vld [vmem:[#allocation2 + $0x8] sm:$0x7f]
      %1515 = vrot.lane.b32.xlu0 %v1511, 114
      %v1516 = vpop.permute.xlu0 %1515
      %1517 = vrot.lane.b32.xlu0 %v1512, 114
      %v1518 = vpop.permute.xlu0 %1517
      %1521 = vst.msk [vmem:[#allocation5 + $0xd2] sm:$0xff] %vm1351, %v1516
      %1522 = vst.msk [vmem:[#allocation5 + $0xda] sm:$0x7f] %vm1353, %v1518
      %v1523 = vld [vmem:[#allocation2] sm:$0xff]
      %v1524 = vld [vmem:[#allocation2 + $0x8] sm:$0x7f]
      %1527 = vrot.lane.b32.xlu0 %v1523, 113
      %v1528 = vpop.permute.xlu0 %1527
      %1529 = vrot.lane.b32.xlu0 %v1524, 113
      %v1530 = vpop.permute.xlu0 %1529
      %1533 = vst.msk [vmem:[#allocation5 + $0xe1] sm:$0xff] %vm1351, %v1528
      %1534 = vst.msk [vmem:[#allocation5 + $0xe9] sm:$0x7f] %vm1353, %v1530
      %v1535 = vld [vmem:[#allocation2] sm:$0xff]
      %v1536 = vld [vmem:[#allocation2 + $0x8] sm:$0x7f]
      %1539 = vrot.lane.b32.xlu0 %v1535, 112
      %v1540 = vpop.permute.xlu0 %1539
      %1541 = vrot.lane.b32.xlu0 %v1536, 112
      %v1542 = vpop.permute.xlu0 %1541
      %1545 = vst.msk [vmem:[#allocation5 + $0xf0] sm:$0xff] %vm1351, %v1540
      %1546 = vst.msk [vmem:[#allocation5 + $0xf8] sm:$0x7f] %vm1353, %v1542
      %v1547 = vld [vmem:[#allocation2] sm:$0xff]
      %v1548 = vld [vmem:[#allocation2 + $0x8] sm:$0x7f]
      %1551 = vrot.lane.b32.xlu0 %v1547, 111
      %v1552 = vpop.permute.xlu0 %1551
      %1553 = vrot.lane.b32.xlu0 %v1548, 111
      %v1554 = vpop.permute.xlu0 %1553
      %1557 = vst.msk [vmem:[#allocation5 + $0xff] sm:$0xff] %vm1351, %v1552
      %1558 = vst.msk [vmem:[#allocation5 + $0x107] sm:$0x7f] %vm1353, %v1554
      %v1559 = vld [vmem:[#allocation2] sm:$0xff]
      %v1560 = vld [vmem:[#allocation2 + $0x8] sm:$0x7f]
      %1563 = vrot.lane.b32.xlu0 %v1559, 110
      %v1564 = vpop.permute.xlu0 %1563
      %1565 = vrot.lane.b32.xlu0 %v1560, 110
      %v1566 = vpop.permute.xlu0 %1565
      %1569 = vst.msk [vmem:[#allocation5 + $0x10e] sm:$0xff] %vm1351, %v1564
      %1570 = vst.msk [vmem:[#allocation5 + $0x116] sm:$0x7f] %vm1353, %v1566
      %v1571 = vld [vmem:[#allocation2] sm:$0xff]
      %v1572 = vld [vmem:[#allocation2 + $0x8] sm:$0x7f]
      %1575 = vrot.lane.b32.xlu0 %v1571, 109
      %v1576 = vpop.permute.xlu0 %1575
      %1577 = vrot.lane.b32.xlu0 %v1572, 109
      %v1578 = vpop.permute.xlu0 %1577
      %1581 = vst.msk [vmem:[#allocation5 + $0x11d] sm:$0xff] %vm1351, %v1576
      %1582 = vst.msk [vmem:[#allocation5 + $0x125] sm:$0x7f] %vm1353, %v1578
      %v1583 = vld [vmem:[#allocation5] sm:$0xff]
      %v1584 = vld [vmem:[#allocation5 + $0x8] sm:$0xff]
      %v1585 = vld [vmem:[#allocation5 + $0x10] sm:$0xff]
      %v1586 = vld [vmem:[#allocation5 + $0x18] sm:$0xff]
      %v1587 = vld [vmem:[#allocation5 + $0x20] sm:$0xff]
      %v1588 = vld [vmem:[#allocation5 + $0x28] sm:$0xff]
      %v1589 = vld [vmem:[#allocation5 + $0x30] sm:$0xff]
      %v1590 = vld [vmem:[#allocation5 + $0x38] sm:$0xff]
      %v1591 = vld [vmem:[#allocation5 + $0x40] sm:$0xff]
      %v1592 = vld [vmem:[#allocation5 + $0x48] sm:$0xff]
      %v1593 = vld [vmem:[#allocation5 + $0x50] sm:$0xff]
      %v1594 = vld [vmem:[#allocation5 + $0x58] sm:$0xff]
      %v1595 = vld [vmem:[#allocation5 + $0x60] sm:$0xff]
      %v1596 = vld [vmem:[#allocation5 + $0x68] sm:$0xff]
      %v1597 = vld [vmem:[#allocation5 + $0x70] sm:$0xff]
      %v1598 = vld [vmem:[#allocation5 + $0x78] sm:$0xff]
      %v1599 = vld [vmem:[#allocation5 + $0x80] sm:$0xff]
      %v1600 = vld [vmem:[#allocation5 + $0x88] sm:$0xff]
      %v1601 = vld [vmem:[#allocation5 + $0x90] sm:$0xff]
      %v1602 = vld [vmem:[#allocation5 + $0x98] sm:$0xff]
      %v1603 = vld [vmem:[#allocation5 + $0xa0] sm:$0xff]
      %v1604 = vld [vmem:[#allocation5 + $0xa8] sm:$0xff]
      %v1605 = vld [vmem:[#allocation5 + $0xb0] sm:$0xff]
      %v1606 = vld [vmem:[#allocation5 + $0xb8] sm:$0xff]
      %v1607 = vld [vmem:[#allocation5 + $0xc0] sm:$0xff]
      %v1608 = vld [vmem:[#allocation5 + $0xc8] sm:$0xff]
      %v1609 = vld [vmem:[#allocation5 + $0xd0] sm:$0xff]
      %v1610 = vld [vmem:[#allocation5 + $0xd8] sm:$0xff]
      %v1611 = vld [vmem:[#allocation5 + $0xe0] sm:$0xff]
      %v1612 = vld [vmem:[#allocation5 + $0xe8] sm:$0xff]
      %v1613 = vld [vmem:[#allocation5 + $0xf0] sm:$0xff]
      %v1614 = vld [vmem:[#allocation5 + $0xf8] sm:$0xff]
      %v1615 = vld [vmem:[#allocation5 + $0x100] sm:$0xff]
      %v1616 = vld [vmem:[#allocation5 + $0x108] sm:$0xff]
      %v1617 = vld [vmem:[#allocation5 + $0x110] sm:$0xff]
      %v1618 = vld [vmem:[#allocation5 + $0x118] sm:$0xff]
      %v1619 = vld [vmem:[#allocation5 + $0x120] sm:$0xff]
      %v1620 = vld [vmem:[#allocation5 + $0x128] sm:$0xf]
      %1621 = vset.pattern.permute.xlu0 2
      %1622 = vperm.xlu0 %1621, %v182
      %v1623 = vpop.permute.xlu0 %1622
      %1625 = vset.pattern.permute.xlu0 2
      %1626 = vperm.xlu0 %1625, %v183
      %v1627 = vpop.permute.xlu0 %1626
      %1636 = vrot.lane.b32.xlu0 %v171, 36
      %v1637 = vpop.permute.xlu0 %1636
      %1638 = vrot.lane.b32.xlu0 %v174, 36
      %v1639 = vpop.permute.xlu0 %1638
      %1640 = vrot.lane.b32.xlu0 %v175, 36
      %v1641 = vpop.permute.xlu0 %1640
      %1642 = vrot.lane.b32.xlu0 %v176, 36
      %v1643 = vpop.permute.xlu0 %1642
      %1644 = vrot.lane.b32.xlu0 %v177, 36
      %v1645 = vpop.permute.xlu0 %1644
      %1646 = vrot.lane.b32.xlu0 %v178, 36
      %v1647 = vpop.permute.xlu0 %1646
      %1648 = vrot.lane.b32.xlu0 %v179, 36
      %v1649 = vpop.permute.xlu0 %1648
      %1650 = vrot.lane.b32.xlu0 %v180, 36
      %v1651 = vpop.permute.xlu0 %1650
      %vm1652 = vcmask 293888
      %v1653 = vsel %vm1652, %v1637, %v1639
      %v1654 = vsel %vm1652, %v1639, %v1641
      %v1655 = vsel %vm1652, %v1641, %v1643
      %v1656 = vsel %vm1652, %v1645, %v1647
      %v1657 = vsel %vm1652, %v1647, %v1649
      %v1658 = vsel %vm1652, %v1649, %v1651
      %vm1663 = vcmask 359424
      %v1664 = vsel %vm1663, %v1655, 0
      %v1666 = vsel %vm1663, %v1658, 0
      %v1669 = vsel %vm206, %v1620, 0
      %v1671 = vand.u32 %v1598, 4294901760
      %1672 = vmatpush.msra.mxu0 %v1671
      %v1673 = vand.u32 %v1597, 4294901760
      %1674 = vmatpush.msra.mxu0 %v1673
      %v1675 = vand.u32 %v1596, 4294901760
      %1676 = vmatpush.msra.mxu0 %v1675
      %v1677 = vand.u32 %v1595, 4294901760
      %1678 = vmatpush.msra.mxu0 %v1677
      %v1679 = vand.u32 %v1594, 4294901760
      %1680 = vmatpush.msra.mxu0 %v1679
      %v1681 = vand.u32 %v1593, 4294901760
      %1682 = vmatpush.msra.mxu0 %v1681
      %v1683 = vand.u32 %v1592, 4294901760
      %1684 = vmatpush.msra.mxu0 %v1683
      %v1685 = vand.u32 %v1591, 4294901760
      %1686 = vmatpush.msra.mxu0 %v1685
      %v1687 = vand.u32 %v1590, 4294901760
      %1688 = vmatpush.msra.mxu0 %v1687
      %v1689 = vand.u32 %v1589, 4294901760
      %1690 = vmatpush.msra.mxu0 %v1689
      %v1691 = vand.u32 %v1588, 4294901760
      %1692 = vmatpush.msra.mxu0 %v1691
      %v1693 = vand.u32 %v1587, 4294901760
      %1694 = vmatpush.msra.mxu0 %v1693
      %v1695 = vand.u32 %v1586, 4294901760
      %1696 = vmatpush.msra.mxu0 %v1695
      %v1697 = vand.u32 %v1585, 4294901760
      %1698 = vmatpush.msra.mxu0 %v1697
      %v1699 = vand.u32 %v1584, 4294901760
      %1700 = vmatpush.msra.mxu0 %v1699
      %v1701 = vand.u32 %v1583, 4294901760
      %1702 = vmatpush.msra.mxu0 %v1701
      %v1703 = vand.u32 %v1653, 4294901760
      %v1704 = vsub.f32 %v1653, %v1703
      %v1705 = vand.u32 %v1704, 4294901760
      %v1706 = vsub.f32 %v1704, %v1705
      %v1707 = vand.u32 %v1706, 4294901760
      %1708 = vmatmul.f32.gmra.mxu0 %v1707
      %v1709 = vpop.f32.mrf.mxu0
      %v1710 = vadd.f32 %v1623, %v1709
      %v1711 = vand.u32 %v1656, 4294901760
      %v1712 = vsub.f32 %v1656, %v1711
      %v1713 = vand.u32 %v1712, 4294901760
      %v1714 = vsub.f32 %v1712, %v1713
      %v1715 = vand.u32 %v1714, 4294901760
      %1716 = vmatmul.f32.gmra.mxu0 %v1715
      %v1717 = vpop.f32.mrf.mxu0
      %v1718 = vadd.f32 %v1627, %v1717
      %1719 = vdwg.mxu0
      %v1720 = vand.u32 %v1598, 4294901760
      %v1721 = vsub.f32 %v1598, %v1720
      %v1722 = vand.u32 %v1721, 4294901760
      %v1723 = vsub.f32 %v1721, %v1722
      %v1724 = vand.u32 %v1723, 4294901760
      %1725 = vmatpush.msra.mxu0 %v1724
      %v1726 = vand.u32 %v1597, 4294901760
      %v1727 = vsub.f32 %v1597, %v1726
      %v1728 = vand.u32 %v1727, 4294901760
      %v1729 = vsub.f32 %v1727, %v1728
      %v1730 = vand.u32 %v1729, 4294901760
      %1731 = vmatpush.msra.mxu0 %v1730
      %v1732 = vand.u32 %v1596, 4294901760
      %v1733 = vsub.f32 %v1596, %v1732
      %v1734 = vand.u32 %v1733, 4294901760
      %v1735 = vsub.f32 %v1733, %v1734
      %v1736 = vand.u32 %v1735, 4294901760
      %1737 = vmatpush.msra.mxu0 %v1736
      %v1738 = vand.u32 %v1595, 4294901760
      %v1739 = vsub.f32 %v1595, %v1738
      %v1740 = vand.u32 %v1739, 4294901760
      %v1741 = vsub.f32 %v1739, %v1740
      %v1742 = vand.u32 %v1741, 4294901760
      %1743 = vmatpush.msra.mxu0 %v1742
      %v1744 = vand.u32 %v1594, 4294901760
      %v1745 = vsub.f32 %v1594, %v1744
      %v1746 = vand.u32 %v1745, 4294901760
      %v1747 = vsub.f32 %v1745, %v1746
      %v1748 = vand.u32 %v1747, 4294901760
      %1749 = vmatpush.msra.mxu0 %v1748
      %v1750 = vand.u32 %v1593, 4294901760
      %v1751 = vsub.f32 %v1593, %v1750
      %v1752 = vand.u32 %v1751, 4294901760
      %v1753 = vsub.f32 %v1751, %v1752
      %v1754 = vand.u32 %v1753, 4294901760
      %1755 = vmatpush.msra.mxu0 %v1754
      %v1756 = vand.u32 %v1592, 4294901760
      %v1757 = vsub.f32 %v1592, %v1756
      %v1758 = vand.u32 %v1757, 4294901760
      %v1759 = vsub.f32 %v1757, %v1758
      %v1760 = vand.u32 %v1759, 4294901760
      %1761 = vmatpush.msra.mxu0 %v1760
      %v1762 = vand.u32 %v1591, 4294901760
      %v1763 = vsub.f32 %v1591, %v1762
      %v1764 = vand.u32 %v1763, 4294901760
      %v1765 = vsub.f32 %v1763, %v1764
      %v1766 = vand.u32 %v1765, 4294901760
      %1767 = vmatpush.msra.mxu0 %v1766
      %v1768 = vand.u32 %v1590, 4294901760
      %v1769 = vsub.f32 %v1590, %v1768
      %v1770 = vand.u32 %v1769, 4294901760
      %v1771 = vsub.f32 %v1769, %v1770
      %v1772 = vand.u32 %v1771, 4294901760
      %1773 = vmatpush.msra.mxu0 %v1772
      %v1774 = vand.u32 %v1589, 4294901760
      %v1775 = vsub.f32 %v1589, %v1774
      %v1776 = vand.u32 %v1775, 4294901760
      %v1777 = vsub.f32 %v1775, %v1776
      %v1778 = vand.u32 %v1777, 4294901760
      %1779 = vmatpush.msra.mxu0 %v1778
      %v1780 = vand.u32 %v1588, 4294901760
      %v1781 = vsub.f32 %v1588, %v1780
      %v1782 = vand.u32 %v1781, 4294901760
      %v1783 = vsub.f32 %v1781, %v1782
      %v1784 = vand.u32 %v1783, 4294901760
      %1785 = vmatpush.msra.mxu0 %v1784
      %v1786 = vand.u32 %v1587, 4294901760
      %v1787 = vsub.f32 %v1587, %v1786
      %v1788 = vand.u32 %v1787, 4294901760
      %v1789 = vsub.f32 %v1787, %v1788
      %v1790 = vand.u32 %v1789, 4294901760
      %1791 = vmatpush.msra.mxu0 %v1790
      %v1792 = vand.u32 %v1586, 4294901760
      %v1793 = vsub.f32 %v1586, %v1792
      %v1794 = vand.u32 %v1793, 4294901760
      %v1795 = vsub.f32 %v1793, %v1794
      %v1796 = vand.u32 %v1795, 4294901760
      %1797 = vmatpush.msra.mxu0 %v1796
      %v1798 = vand.u32 %v1585, 4294901760
      %v1799 = vsub.f32 %v1585, %v1798
      %v1800 = vand.u32 %v1799, 4294901760
      %v1801 = vsub.f32 %v1799, %v1800
      %v1802 = vand.u32 %v1801, 4294901760
      %1803 = vmatpush.msra.mxu0 %v1802
      %v1804 = vand.u32 %v1584, 4294901760
      %v1805 = vsub.f32 %v1584, %v1804
      %v1806 = vand.u32 %v1805, 4294901760
      %v1807 = vsub.f32 %v1805, %v1806
      %v1808 = vand.u32 %v1807, 4294901760
      %1809 = vmatpush.msra.mxu0 %v1808
      %v1810 = vand.u32 %v1583, 4294901760
      %v1811 = vsub.f32 %v1583, %v1810
      %v1812 = vand.u32 %v1811, 4294901760
      %v1813 = vsub.f32 %v1811, %v1812
      %v1814 = vand.u32 %v1813, 4294901760
      %1815 = vmatpush.msra.mxu0 %v1814
      %v1816 = vand.u32 %v1653, 4294901760
      %1817 = vmatmul.f32.gmra.mxu0 %v1816
      %v1818 = vpop.f32.mrf.mxu0
      %v1819 = vadd.f32 %v1710, %v1818
      %v1820 = vand.u32 %v1656, 4294901760
      %1821 = vmatmul.f32.gmra.mxu0 %v1820
      %v1822 = vpop.f32.mrf.mxu0
      %v1823 = vadd.f32 %v1718, %v1822
      %1824 = vdwg.mxu0
      %v1825 = vand.u32 %v1598, 4294901760
      %v1826 = vsub.f32 %v1598, %v1825
      %1827 = vmatpush.msra.mxu0 %v1826
      %v1828 = vand.u32 %v1597, 4294901760
      %v1829 = vsub.f32 %v1597, %v1828
      %1830 = vmatpush.msra.mxu0 %v1829
      %v1831 = vand.u32 %v1596, 4294901760
      %v1832 = vsub.f32 %v1596, %v1831
      %1833 = vmatpush.msra.mxu0 %v1832
      %v1834 = vand.u32 %v1595, 4294901760
      %v1835 = vsub.f32 %v1595, %v1834
      %1836 = vmatpush.msra.mxu0 %v1835
      %v1837 = vand.u32 %v1594, 4294901760
      %v1838 = vsub.f32 %v1594, %v1837
      %1839 = vmatpush.msra.mxu0 %v1838
      %v1840 = vand.u32 %v1593, 4294901760
      %v1841 = vsub.f32 %v1593, %v1840
      %1842 = vmatpush.msra.mxu0 %v1841
      %v1843 = vand.u32 %v1592, 4294901760
      %v1844 = vsub.f32 %v1592, %v1843
      %1845 = vmatpush.msra.mxu0 %v1844
      %v1846 = vand.u32 %v1591, 4294901760
      %v1847 = vsub.f32 %v1591, %v1846
      %1848 = vmatpush.msra.mxu0 %v1847
      %v1849 = vand.u32 %v1590, 4294901760
      %v1850 = vsub.f32 %v1590, %v1849
      %1851 = vmatpush.msra.mxu0 %v1850
      %v1852 = vand.u32 %v1589, 4294901760
      %v1853 = vsub.f32 %v1589, %v1852
      %1854 = vmatpush.msra.mxu0 %v1853
      %v1855 = vand.u32 %v1588, 4294901760
      %v1856 = vsub.f32 %v1588, %v1855
      %1857 = vmatpush.msra.mxu0 %v1856
      %v1858 = vand.u32 %v1587, 4294901760
      %v1859 = vsub.f32 %v1587, %v1858
      %1860 = vmatpush.msra.mxu0 %v1859
      %v1861 = vand.u32 %v1586, 4294901760
      %v1862 = vsub.f32 %v1586, %v1861
      %1863 = vmatpush.msra.mxu0 %v1862
      %v1864 = vand.u32 %v1585, 4294901760
      %v1865 = vsub.f32 %v1585, %v1864
      %1866 = vmatpush.msra.mxu0 %v1865
      %v1867 = vand.u32 %v1584, 4294901760
      %v1868 = vsub.f32 %v1584, %v1867
      %1869 = vmatpush.msra.mxu0 %v1868
      %v1870 = vand.u32 %v1583, 4294901760
      %v1871 = vsub.f32 %v1583, %v1870
      %1872 = vmatpush.msra.mxu0 %v1871
      %v1873 = vand.u32 %v1653, 4294901760
      %v1874 = vsub.f32 %v1653, %v1873
      %1875 = vmatmul.f32.gmra.mxu0 %v1874
      %v1876 = vpop.f32.mrf.mxu0
      %v1877 = vadd.f32 %v1819, %v1876
      %v1878 = vand.u32 %v1656, 4294901760
      %v1879 = vsub.f32 %v1656, %v1878
      %1880 = vmatmul.f32.gmra.mxu0 %v1879
      %v1881 = vpop.f32.mrf.mxu0
      %v1882 = vadd.f32 %v1823, %v1881
      %1883 = vdwg.mxu0
      %v1884 = vand.u32 %v1598, 4294901760
      %1885 = vmatpush.msra.mxu0 %v1884
      %v1886 = vand.u32 %v1597, 4294901760
      %1887 = vmatpush.msra.mxu0 %v1886
      %v1888 = vand.u32 %v1596, 4294901760
      %1889 = vmatpush.msra.mxu0 %v1888
      %v1890 = vand.u32 %v1595, 4294901760
      %1891 = vmatpush.msra.mxu0 %v1890
      %v1892 = vand.u32 %v1594, 4294901760
      %1893 = vmatpush.msra.mxu0 %v1892
      %v1894 = vand.u32 %v1593, 4294901760
      %1895 = vmatpush.msra.mxu0 %v1894
      %v1896 = vand.u32 %v1592, 4294901760
      %1897 = vmatpush.msra.mxu0 %v1896
      %v1898 = vand.u32 %v1591, 4294901760
      %1899 = vmatpush.msra.mxu0 %v1898
      %v1900 = vand.u32 %v1590, 4294901760
      %1901 = vmatpush.msra.mxu0 %v1900
      %v1902 = vand.u32 %v1589, 4294901760
      %1903 = vmatpush.msra.mxu0 %v1902
      %v1904 = vand.u32 %v1588, 4294901760
      %1905 = vmatpush.msra.mxu0 %v1904
      %v1906 = vand.u32 %v1587, 4294901760
      %1907 = vmatpush.msra.mxu0 %v1906
      %v1908 = vand.u32 %v1586, 4294901760
      %1909 = vmatpush.msra.mxu0 %v1908
      %v1910 = vand.u32 %v1585, 4294901760
      %1911 = vmatpush.msra.mxu0 %v1910
      %v1912 = vand.u32 %v1584, 4294901760
      %1913 = vmatpush.msra.mxu0 %v1912
      %v1914 = vand.u32 %v1583, 4294901760
      %1915 = vmatpush.msra.mxu0 %v1914
      %v1916 = vand.u32 %v1653, 4294901760
      %v1917 = vsub.f32 %v1653, %v1916
      %v1918 = vand.u32 %v1917, 4294901760
      %1919 = vmatmul.f32.gmra.mxu0 %v1918
      %v1920 = vpop.f32.mrf.mxu0
      %v1921 = vadd.f32 %v1877, %v1920
      %v1922 = vand.u32 %v1656, 4294901760
      %v1923 = vsub.f32 %v1656, %v1922
      %v1924 = vand.u32 %v1923, 4294901760
      %1925 = vmatmul.f32.gmra.mxu0 %v1924
      %v1926 = vpop.f32.mrf.mxu0
      %v1927 = vadd.f32 %v1882, %v1926
      %1928 = vdwg.mxu0
      %v1929 = vand.u32 %v1598, 4294901760
      %v1930 = vsub.f32 %v1598, %v1929
      %v1931 = vand.u32 %v1930, 4294901760
      %1932 = vmatpush.msra.mxu0 %v1931
      %v1933 = vand.u32 %v1597, 4294901760
      %v1934 = vsub.f32 %v1597, %v1933
      %v1935 = vand.u32 %v1934, 4294901760
      %1936 = vmatpush.msra.mxu0 %v1935
      %v1937 = vand.u32 %v1596, 4294901760
      %v1938 = vsub.f32 %v1596, %v1937
      %v1939 = vand.u32 %v1938, 4294901760
      %1940 = vmatpush.msra.mxu0 %v1939
      %v1941 = vand.u32 %v1595, 4294901760
      %v1942 = vsub.f32 %v1595, %v1941
      %v1943 = vand.u32 %v1942, 4294901760
      %1944 = vmatpush.msra.mxu0 %v1943
      %v1945 = vand.u32 %v1594, 4294901760
      %v1946 = vsub.f32 %v1594, %v1945
      %v1947 = vand.u32 %v1946, 4294901760
      %1948 = vmatpush.msra.mxu0 %v1947
      %v1949 = vand.u32 %v1593, 4294901760
      %v1950 = vsub.f32 %v1593, %v1949
      %v1951 = vand.u32 %v1950, 4294901760
      %1952 = vmatpush.msra.mxu0 %v1951
      %v1953 = vand.u32 %v1592, 4294901760
      %v1954 = vsub.f32 %v1592, %v1953
      %v1955 = vand.u32 %v1954, 4294901760
      %1956 = vmatpush.msra.mxu0 %v1955
      %v1957 = vand.u32 %v1591, 4294901760
      %v1958 = vsub.f32 %v1591, %v1957
      %v1959 = vand.u32 %v1958, 4294901760
      %1960 = vmatpush.msra.mxu0 %v1959
      %v1961 = vand.u32 %v1590, 4294901760
      %v1962 = vsub.f32 %v1590, %v1961
      %v1963 = vand.u32 %v1962, 4294901760
      %1964 = vmatpush.msra.mxu0 %v1963
      %v1965 = vand.u32 %v1589, 4294901760
      %v1966 = vsub.f32 %v1589, %v1965
      %v1967 = vand.u32 %v1966, 4294901760
      %1968 = vmatpush.msra.mxu0 %v1967
      %v1969 = vand.u32 %v1588, 4294901760
      %v1970 = vsub.f32 %v1588, %v1969
      %v1971 = vand.u32 %v1970, 4294901760
      %1972 = vmatpush.msra.mxu0 %v1971
      %v1973 = vand.u32 %v1587, 4294901760
      %v1974 = vsub.f32 %v1587, %v1973
      %v1975 = vand.u32 %v1974, 4294901760
      %1976 = vmatpush.msra.mxu0 %v1975
      %v1977 = vand.u32 %v1586, 4294901760
      %v1978 = vsub.f32 %v1586, %v1977
      %v1979 = vand.u32 %v1978, 4294901760
      %1980 = vmatpush.msra.mxu0 %v1979
      %v1981 = vand.u32 %v1585, 4294901760
      %v1982 = vsub.f32 %v1585, %v1981
      %v1983 = vand.u32 %v1982, 4294901760
      %1984 = vmatpush.msra.mxu0 %v1983
      %v1985 = vand.u32 %v1584, 4294901760
      %v1986 = vsub.f32 %v1584, %v1985
      %v1987 = vand.u32 %v1986, 4294901760
      %1988 = vmatpush.msra.mxu0 %v1987
      %v1989 = vand.u32 %v1583, 4294901760
      %v1990 = vsub.f32 %v1583, %v1989
      %v1991 = vand.u32 %v1990, 4294901760
      %1992 = vmatpush.msra.mxu0 %v1991
      %v1993 = vand.u32 %v1653, 4294901760
      %1994 = vmatmul.f32.gmra.mxu0 %v1993
      %v1995 = vpop.f32.mrf.mxu0
      %v1996 = vadd.f32 %v1921, %v1995
      %v1997 = vand.u32 %v1656, 4294901760
      %1998 = vmatmul.f32.gmra.mxu0 %v1997
      %v1999 = vpop.f32.mrf.mxu0
      %v2000 = vadd.f32 %v1927, %v1999
      %2001 = vdwg.mxu0
      %v2002 = vand.u32 %v1598, 4294901760
      %2003 = vmatpush.msra.mxu0 %v2002
      %v2004 = vand.u32 %v1597, 4294901760
      %2005 = vmatpush.msra.mxu0 %v2004
      %v2006 = vand.u32 %v1596, 4294901760
      %2007 = vmatpush.msra.mxu0 %v2006
      %v2008 = vand.u32 %v1595, 4294901760
      %2009 = vmatpush.msra.mxu0 %v2008
      %v2010 = vand.u32 %v1594, 4294901760
      %2011 = vmatpush.msra.mxu0 %v2010
      %v2012 = vand.u32 %v1593, 4294901760
      %2013 = vmatpush.msra.mxu0 %v2012
      %v2014 = vand.u32 %v1592, 4294901760
      %2015 = vmatpush.msra.mxu0 %v2014
      %v2016 = vand.u32 %v1591, 4294901760
      %2017 = vmatpush.msra.mxu0 %v2016
      %v2018 = vand.u32 %v1590, 4294901760
      %2019 = vmatpush.msra.mxu0 %v2018
      %v2020 = vand.u32 %v1589, 4294901760
      %2021 = vmatpush.msra.mxu0 %v2020
      %v2022 = vand.u32 %v1588, 4294901760
      %2023 = vmatpush.msra.mxu0 %v2022
      %v2024 = vand.u32 %v1587, 4294901760
      %2025 = vmatpush.msra.mxu0 %v2024
      %v2026 = vand.u32 %v1586, 4294901760
      %2027 = vmatpush.msra.mxu0 %v2026
      %v2028 = vand.u32 %v1585, 4294901760
      %2029 = vmatpush.msra.mxu0 %v2028
      %v2030 = vand.u32 %v1584, 4294901760
      %2031 = vmatpush.msra.mxu0 %v2030
      %v2032 = vand.u32 %v1583, 4294901760
      %2033 = vmatpush.msra.mxu0 %v2032
      %v2034 = vand.u32 %v1653, 4294901760
      %2035 = vmatmul.f32.gmra.mxu0 %v2034
      %v2036 = vpop.f32.mrf.mxu0
      %v2037 = vadd.f32 %v1996, %v2036
      %v2038 = vand.u32 %v1656, 4294901760
      %2039 = vmatmul.f32.gmra.mxu0 %v2038
      %v2040 = vpop.f32.mrf.mxu0
      %v2041 = vadd.f32 %v2000, %v2040
      %2042 = vdwg.mxu0
      %v2043 = vand.u32 %v1614, 4294901760
      %2044 = vmatpush.msra.mxu0 %v2043
      %v2045 = vand.u32 %v1613, 4294901760
      %2046 = vmatpush.msra.mxu0 %v2045
      %v2047 = vand.u32 %v1612, 4294901760
      %2048 = vmatpush.msra.mxu0 %v2047
      %v2049 = vand.u32 %v1611, 4294901760
      %2050 = vmatpush.msra.mxu0 %v2049
      %v2051 = vand.u32 %v1610, 4294901760
      %2052 = vmatpush.msra.mxu0 %v2051
      %v2053 = vand.u32 %v1609, 4294901760
      %2054 = vmatpush.msra.mxu0 %v2053
      %v2055 = vand.u32 %v1608, 4294901760
      %2056 = vmatpush.msra.mxu0 %v2055
      %v2057 = vand.u32 %v1607, 4294901760
      %2058 = vmatpush.msra.mxu0 %v2057
      %v2059 = vand.u32 %v1606, 4294901760
      %2060 = vmatpush.msra.mxu0 %v2059
      %v2061 = vand.u32 %v1605, 4294901760
      %2062 = vmatpush.msra.mxu0 %v2061
      %v2063 = vand.u32 %v1604, 4294901760
      %2064 = vmatpush.msra.mxu0 %v2063
      %v2065 = vand.u32 %v1603, 4294901760
      %2066 = vmatpush.msra.mxu0 %v2065
      %v2067 = vand.u32 %v1602, 4294901760
      %2068 = vmatpush.msra.mxu0 %v2067
      %v2069 = vand.u32 %v1601, 4294901760
      %2070 = vmatpush.msra.mxu0 %v2069
      %v2071 = vand.u32 %v1600, 4294901760
      %2072 = vmatpush.msra.mxu0 %v2071
      %v2073 = vand.u32 %v1599, 4294901760
      %2074 = vmatpush.msra.mxu0 %v2073
      %v2075 = vand.u32 %v1654, 4294901760
      %v2076 = vsub.f32 %v1654, %v2075
      %v2077 = vand.u32 %v2076, 4294901760
      %v2078 = vsub.f32 %v2076, %v2077
      %v2079 = vand.u32 %v2078, 4294901760
      %2080 = vmatmul.f32.gmra.mxu0 %v2079
      %v2081 = vpop.f32.mrf.mxu0
      %v2082 = vadd.f32 %v2037, %v2081
      %v2083 = vand.u32 %v1657, 4294901760
      %v2084 = vsub.f32 %v1657, %v2083
      %v2085 = vand.u32 %v2084, 4294901760
      %v2086 = vsub.f32 %v2084, %v2085
      %v2087 = vand.u32 %v2086, 4294901760
      %2088 = vmatmul.f32.gmra.mxu0 %v2087
      %v2089 = vpop.f32.mrf.mxu0
      %v2090 = vadd.f32 %v2041, %v2089
      %2091 = vdwg.mxu0
      %v2092 = vand.u32 %v1614, 4294901760
      %v2093 = vsub.f32 %v1614, %v2092
      %v2094 = vand.u32 %v2093, 4294901760
      %v2095 = vsub.f32 %v2093, %v2094
      %v2096 = vand.u32 %v2095, 4294901760
      %2097 = vmatpush.msra.mxu0 %v2096
      %v2098 = vand.u32 %v1613, 4294901760
      %v2099 = vsub.f32 %v1613, %v2098
      %v2100 = vand.u32 %v2099, 4294901760
      %v2101 = vsub.f32 %v2099, %v2100
      %v2102 = vand.u32 %v2101, 4294901760
      %2103 = vmatpush.msra.mxu0 %v2102
      %v2104 = vand.u32 %v1612, 4294901760
      %v2105 = vsub.f32 %v1612, %v2104
      %v2106 = vand.u32 %v2105, 4294901760
      %v2107 = vsub.f32 %v2105, %v2106
      %v2108 = vand.u32 %v2107, 4294901760
      %2109 = vmatpush.msra.mxu0 %v2108
      %v2110 = vand.u32 %v1611, 4294901760
      %v2111 = vsub.f32 %v1611, %v2110
      %v2112 = vand.u32 %v2111, 4294901760
      %v2113 = vsub.f32 %v2111, %v2112
      %v2114 = vand.u32 %v2113, 4294901760
      %2115 = vmatpush.msra.mxu0 %v2114
      %v2116 = vand.u32 %v1610, 4294901760
      %v2117 = vsub.f32 %v1610, %v2116
      %v2118 = vand.u32 %v2117, 4294901760
      %v2119 = vsub.f32 %v2117, %v2118
      %v2120 = vand.u32 %v2119, 4294901760
      %2121 = vmatpush.msra.mxu0 %v2120
      %v2122 = vand.u32 %v1609, 4294901760
      %v2123 = vsub.f32 %v1609, %v2122
      %v2124 = vand.u32 %v2123, 4294901760
      %v2125 = vsub.f32 %v2123, %v2124
      %v2126 = vand.u32 %v2125, 4294901760
      %2127 = vmatpush.msra.mxu0 %v2126
      %v2128 = vand.u32 %v1608, 4294901760
      %v2129 = vsub.f32 %v1608, %v2128
      %v2130 = vand.u32 %v2129, 4294901760
      %v2131 = vsub.f32 %v2129, %v2130
      %v2132 = vand.u32 %v2131, 4294901760
      %2133 = vmatpush.msra.mxu0 %v2132
      %v2134 = vand.u32 %v1607, 4294901760
      %v2135 = vsub.f32 %v1607, %v2134
      %v2136 = vand.u32 %v2135, 4294901760
      %v2137 = vsub.f32 %v2135, %v2136
      %v2138 = vand.u32 %v2137, 4294901760
      %2139 = vmatpush.msra.mxu0 %v2138
      %v2140 = vand.u32 %v1606, 4294901760
      %v2141 = vsub.f32 %v1606, %v2140
      %v2142 = vand.u32 %v2141, 4294901760
      %v2143 = vsub.f32 %v2141, %v2142
      %v2144 = vand.u32 %v2143, 4294901760
      %2145 = vmatpush.msra.mxu0 %v2144
      %v2146 = vand.u32 %v1605, 4294901760
      %v2147 = vsub.f32 %v1605, %v2146
      %v2148 = vand.u32 %v2147, 4294901760
      %v2149 = vsub.f32 %v2147, %v2148
      %v2150 = vand.u32 %v2149, 4294901760
      %2151 = vmatpush.msra.mxu0 %v2150
      %v2152 = vand.u32 %v1604, 4294901760
      %v2153 = vsub.f32 %v1604, %v2152
      %v2154 = vand.u32 %v2153, 4294901760
      %v2155 = vsub.f32 %v2153, %v2154
      %v2156 = vand.u32 %v2155, 4294901760
      %2157 = vmatpush.msra.mxu0 %v2156
      %v2158 = vand.u32 %v1603, 4294901760
      %v2159 = vsub.f32 %v1603, %v2158
      %v2160 = vand.u32 %v2159, 4294901760
      %v2161 = vsub.f32 %v2159, %v2160
      %v2162 = vand.u32 %v2161, 4294901760
      %2163 = vmatpush.msra.mxu0 %v2162
      %v2164 = vand.u32 %v1602, 4294901760
      %v2165 = vsub.f32 %v1602, %v2164
      %v2166 = vand.u32 %v2165, 4294901760
      %v2167 = vsub.f32 %v2165, %v2166
      %v2168 = vand.u32 %v2167, 4294901760
      %2169 = vmatpush.msra.mxu0 %v2168
      %v2170 = vand.u32 %v1601, 4294901760
      %v2171 = vsub.f32 %v1601, %v2170
      %v2172 = vand.u32 %v2171, 4294901760
      %v2173 = vsub.f32 %v2171, %v2172
      %v2174 = vand.u32 %v2173, 4294901760
      %2175 = vmatpush.msra.mxu0 %v2174
      %v2176 = vand.u32 %v1600, 4294901760
      %v2177 = vsub.f32 %v1600, %v2176
      %v2178 = vand.u32 %v2177, 4294901760
      %v2179 = vsub.f32 %v2177, %v2178
      %v2180 = vand.u32 %v2179, 4294901760
      %2181 = vmatpush.msra.mxu0 %v2180
      %v2182 = vand.u32 %v1599, 4294901760
      %v2183 = vsub.f32 %v1599, %v2182
      %v2184 = vand.u32 %v2183, 4294901760
      %v2185 = vsub.f32 %v2183, %v2184
      %v2186 = vand.u32 %v2185, 4294901760
      %2187 = vmatpush.msra.mxu0 %v2186
      %v2188 = vand.u32 %v1654, 4294901760
      %2189 = vmatmul.f32.gmra.mxu0 %v2188
      %v2190 = vpop.f32.mrf.mxu0
      %v2191 = vadd.f32 %v2082, %v2190
      %v2192 = vand.u32 %v1657, 4294901760
      %2193 = vmatmul.f32.gmra.mxu0 %v2192
      %v2194 = vpop.f32.mrf.mxu0
      %v2195 = vadd.f32 %v2090, %v2194
      %2196 = vdwg.mxu0
      %v2197 = vand.u32 %v1614, 4294901760
      %v2198 = vsub.f32 %v1614, %v2197
      %2199 = vmatpush.msra.mxu0 %v2198
      %v2200 = vand.u32 %v1613, 4294901760
      %v2201 = vsub.f32 %v1613, %v2200
      %2202 = vmatpush.msra.mxu0 %v2201
      %v2203 = vand.u32 %v1612, 4294901760
      %v2204 = vsub.f32 %v1612, %v2203
      %2205 = vmatpush.msra.mxu0 %v2204
      %v2206 = vand.u32 %v1611, 4294901760
      %v2207 = vsub.f32 %v1611, %v2206
      %2208 = vmatpush.msra.mxu0 %v2207
      %v2209 = vand.u32 %v1610, 4294901760
      %v2210 = vsub.f32 %v1610, %v2209
      %2211 = vmatpush.msra.mxu0 %v2210
      %v2212 = vand.u32 %v1609, 4294901760
      %v2213 = vsub.f32 %v1609, %v2212
      %2214 = vmatpush.msra.mxu0 %v2213
      %v2215 = vand.u32 %v1608, 4294901760
      %v2216 = vsub.f32 %v1608, %v2215
      %2217 = vmatpush.msra.mxu0 %v2216
      %v2218 = vand.u32 %v1607, 4294901760
      %v2219 = vsub.f32 %v1607, %v2218
      %2220 = vmatpush.msra.mxu0 %v2219
      %v2221 = vand.u32 %v1606, 4294901760
      %v2222 = vsub.f32 %v1606, %v2221
      %2223 = vmatpush.msra.mxu0 %v2222
      %v2224 = vand.u32 %v1605, 4294901760
      %v2225 = vsub.f32 %v1605, %v2224
      %2226 = vmatpush.msra.mxu0 %v2225
      %v2227 = vand.u32 %v1604, 4294901760
      %v2228 = vsub.f32 %v1604, %v2227
      %2229 = vmatpush.msra.mxu0 %v2228
      %v2230 = vand.u32 %v1603, 4294901760
      %v2231 = vsub.f32 %v1603, %v2230
      %2232 = vmatpush.msra.mxu0 %v2231
      %v2233 = vand.u32 %v1602, 4294901760
      %v2234 = vsub.f32 %v1602, %v2233
      %2235 = vmatpush.msra.mxu0 %v2234
      %v2236 = vand.u32 %v1601, 4294901760
      %v2237 = vsub.f32 %v1601, %v2236
      %2238 = vmatpush.msra.mxu0 %v2237
      %v2239 = vand.u32 %v1600, 4294901760
      %v2240 = vsub.f32 %v1600, %v2239
      %2241 = vmatpush.msra.mxu0 %v2240
      %v2242 = vand.u32 %v1599, 4294901760
      %v2243 = vsub.f32 %v1599, %v2242
      %2244 = vmatpush.msra.mxu0 %v2243
      %v2245 = vand.u32 %v1654, 4294901760
      %v2246 = vsub.f32 %v1654, %v2245
      %2247 = vmatmul.f32.gmra.mxu0 %v2246
      %v2248 = vpop.f32.mrf.mxu0
      %v2249 = vadd.f32 %v2191, %v2248
      %v2250 = vand.u32 %v1657, 4294901760
      %v2251 = vsub.f32 %v1657, %v2250
      %2252 = vmatmul.f32.gmra.mxu0 %v2251
      %v2253 = vpop.f32.mrf.mxu0
      %v2254 = vadd.f32 %v2195, %v2253
      %2255 = vdwg.mxu0
      %v2256 = vand.u32 %v1614, 4294901760
      %2257 = vmatpush.msra.mxu0 %v2256
      %v2258 = vand.u32 %v1613, 4294901760
      %2259 = vmatpush.msra.mxu0 %v2258
      %v2260 = vand.u32 %v1612, 4294901760
      %2261 = vmatpush.msra.mxu0 %v2260
      %v2262 = vand.u32 %v1611, 4294901760
      %2263 = vmatpush.msra.mxu0 %v2262
      %v2264 = vand.u32 %v1610, 4294901760
      %2265 = vmatpush.msra.mxu0 %v2264
      %v2266 = vand.u32 %v1609, 4294901760
      %2267 = vmatpush.msra.mxu0 %v2266
      %v2268 = vand.u32 %v1608, 4294901760
      %2269 = vmatpush.msra.mxu0 %v2268
      %v2270 = vand.u32 %v1607, 4294901760
      %2271 = vmatpush.msra.mxu0 %v2270
      %v2272 = vand.u32 %v1606, 4294901760
      %2273 = vmatpush.msra.mxu0 %v2272
      %v2274 = vand.u32 %v1605, 4294901760
      %2275 = vmatpush.msra.mxu0 %v2274
      %v2276 = vand.u32 %v1604, 4294901760
      %2277 = vmatpush.msra.mxu0 %v2276
      %v2278 = vand.u32 %v1603, 4294901760
      %2279 = vmatpush.msra.mxu0 %v2278
      %v2280 = vand.u32 %v1602, 4294901760
      %2281 = vmatpush.msra.mxu0 %v2280
      %v2282 = vand.u32 %v1601, 4294901760
      %2283 = vmatpush.msra.mxu0 %v2282
      %v2284 = vand.u32 %v1600, 4294901760
      %2285 = vmatpush.msra.mxu0 %v2284
      %v2286 = vand.u32 %v1599, 4294901760
      %2287 = vmatpush.msra.mxu0 %v2286
      %v2288 = vand.u32 %v1654, 4294901760
      %v2289 = vsub.f32 %v1654, %v2288
      %v2290 = vand.u32 %v2289, 4294901760
      %2291 = vmatmul.f32.gmra.mxu0 %v2290
      %v2292 = vpop.f32.mrf.mxu0
      %v2293 = vadd.f32 %v2249, %v2292
      %v2294 = vand.u32 %v1657, 4294901760
      %v2295 = vsub.f32 %v1657, %v2294
      %v2296 = vand.u32 %v2295, 4294901760
      %2297 = vmatmul.f32.gmra.mxu0 %v2296
      %v2298 = vpop.f32.mrf.mxu0
      %v2299 = vadd.f32 %v2254, %v2298
      %2300 = vdwg.mxu0
      %v2301 = vand.u32 %v1614, 4294901760
      %v2302 = vsub.f32 %v1614, %v2301
      %v2303 = vand.u32 %v2302, 4294901760
      %2304 = vmatpush.msra.mxu0 %v2303
      %v2305 = vand.u32 %v1613, 4294901760
      %v2306 = vsub.f32 %v1613, %v2305
      %v2307 = vand.u32 %v2306, 4294901760
      %2308 = vmatpush.msra.mxu0 %v2307
      %v2309 = vand.u32 %v1612, 4294901760
      %v2310 = vsub.f32 %v1612, %v2309
      %v2311 = vand.u32 %v2310, 4294901760
      %2312 = vmatpush.msra.mxu0 %v2311
      %v2313 = vand.u32 %v1611, 4294901760
      %v2314 = vsub.f32 %v1611, %v2313
      %v2315 = vand.u32 %v2314, 4294901760
      %2316 = vmatpush.msra.mxu0 %v2315
      %v2317 = vand.u32 %v1610, 4294901760
      %v2318 = vsub.f32 %v1610, %v2317
      %v2319 = vand.u32 %v2318, 4294901760
      %2320 = vmatpush.msra.mxu0 %v2319
      %v2321 = vand.u32 %v1609, 4294901760
      %v2322 = vsub.f32 %v1609, %v2321
      %v2323 = vand.u32 %v2322, 4294901760
      %2324 = vmatpush.msra.mxu0 %v2323
      %v2325 = vand.u32 %v1608, 4294901760
      %v2326 = vsub.f32 %v1608, %v2325
      %v2327 = vand.u32 %v2326, 4294901760
      %2328 = vmatpush.msra.mxu0 %v2327
      %v2329 = vand.u32 %v1607, 4294901760
      %v2330 = vsub.f32 %v1607, %v2329
      %v2331 = vand.u32 %v2330, 4294901760
      %2332 = vmatpush.msra.mxu0 %v2331
      %v2333 = vand.u32 %v1606, 4294901760
      %v2334 = vsub.f32 %v1606, %v2333
      %v2335 = vand.u32 %v2334, 4294901760
      %2336 = vmatpush.msra.mxu0 %v2335
      %v2337 = vand.u32 %v1605, 4294901760
      %v2338 = vsub.f32 %v1605, %v2337
      %v2339 = vand.u32 %v2338, 4294901760
      %2340 = vmatpush.msra.mxu0 %v2339
      %v2341 = vand.u32 %v1604, 4294901760
      %v2342 = vsub.f32 %v1604, %v2341
      %v2343 = vand.u32 %v2342, 4294901760
      %2344 = vmatpush.msra.mxu0 %v2343
      %v2345 = vand.u32 %v1603, 4294901760
      %v2346 = vsub.f32 %v1603, %v2345
      %v2347 = vand.u32 %v2346, 4294901760
      %2348 = vmatpush.msra.mxu0 %v2347
      %v2349 = vand.u32 %v1602, 4294901760
      %v2350 = vsub.f32 %v1602, %v2349
      %v2351 = vand.u32 %v2350, 4294901760
      %2352 = vmatpush.msra.mxu0 %v2351
      %v2353 = vand.u32 %v1601, 4294901760
      %v2354 = vsub.f32 %v1601, %v2353
      %v2355 = vand.u32 %v2354, 4294901760
      %2356 = vmatpush.msra.mxu0 %v2355
      %v2357 = vand.u32 %v1600, 4294901760
      %v2358 = vsub.f32 %v1600, %v2357
      %v2359 = vand.u32 %v2358, 4294901760
      %2360 = vmatpush.msra.mxu0 %v2359
      %v2361 = vand.u32 %v1599, 4294901760
      %v2362 = vsub.f32 %v1599, %v2361
      %v2363 = vand.u32 %v2362, 4294901760
      %2364 = vmatpush.msra.mxu0 %v2363
      %v2365 = vand.u32 %v1654, 4294901760
      %2366 = vmatmul.f32.gmra.mxu0 %v2365
      %v2367 = vpop.f32.mrf.mxu0
      %v2368 = vadd.f32 %v2293, %v2367
      %v2369 = vand.u32 %v1657, 4294901760
      %2370 = vmatmul.f32.gmra.mxu0 %v2369
      %v2371 = vpop.f32.mrf.mxu0
      %v2372 = vadd.f32 %v2299, %v2371
      %2373 = vdwg.mxu0
      %v2374 = vand.u32 %v1614, 4294901760
      %2375 = vmatpush.msra.mxu0 %v2374
      %v2376 = vand.u32 %v1613, 4294901760
      %2377 = vmatpush.msra.mxu0 %v2376
      %v2378 = vand.u32 %v1612, 4294901760
      %2379 = vmatpush.msra.mxu0 %v2378
      %v2380 = vand.u32 %v1611, 4294901760
      %2381 = vmatpush.msra.mxu0 %v2380
      %v2382 = vand.u32 %v1610, 4294901760
      %2383 = vmatpush.msra.mxu0 %v2382
      %v2384 = vand.u32 %v1609, 4294901760
      %2385 = vmatpush.msra.mxu0 %v2384
      %v2386 = vand.u32 %v1608, 4294901760
      %2387 = vmatpush.msra.mxu0 %v2386
      %v2388 = vand.u32 %v1607, 4294901760
      %2389 = vmatpush.msra.mxu0 %v2388
      %v2390 = vand.u32 %v1606, 4294901760
      %2391 = vmatpush.msra.mxu0 %v2390
      %v2392 = vand.u32 %v1605, 4294901760
      %2393 = vmatpush.msra.mxu0 %v2392
      %v2394 = vand.u32 %v1604, 4294901760
      %2395 = vmatpush.msra.mxu0 %v2394
      %v2396 = vand.u32 %v1603, 4294901760
      %2397 = vmatpush.msra.mxu0 %v2396
      %v2398 = vand.u32 %v1602, 4294901760
      %2399 = vmatpush.msra.mxu0 %v2398
      %v2400 = vand.u32 %v1601, 4294901760
      %2401 = vmatpush.msra.mxu0 %v2400
      %v2402 = vand.u32 %v1600, 4294901760
      %2403 = vmatpush.msra.mxu0 %v2402
      %v2404 = vand.u32 %v1599, 4294901760
      %2405 = vmatpush.msra.mxu0 %v2404
      %v2406 = vand.u32 %v1654, 4294901760
      %2407 = vmatmul.f32.gmra.mxu0 %v2406
      %v2408 = vpop.f32.mrf.mxu0
      %v2409 = vadd.f32 %v2368, %v2408
      %v2410 = vand.u32 %v1657, 4294901760
      %2411 = vmatmul.f32.gmra.mxu0 %v2410
      %v2412 = vpop.f32.mrf.mxu0
      %v2413 = vadd.f32 %v2372, %v2412
      %2414 = vdwg.mxu0
      %2415 = vmatpush.msra.mxu0 0.0
      %2416 = vmatpush.msra.mxu0 0.0
      %2417 = vmatpush.msra.mxu0 0.0
      %2418 = vmatpush.msra.mxu0 0.0
      %2419 = vmatpush.msra.mxu0 0.0
      %2420 = vmatpush.msra.mxu0 0.0
      %2421 = vmatpush.msra.mxu0 0.0
      %2422 = vmatpush.msra.mxu0 0.0
      %2423 = vmatpush.msra.mxu0 0.0
      %2424 = vmatpush.msra.mxu0 0.0
      %v2425 = vand.u32 %v1669, 4294901760
      %2426 = vmatpush.msra.mxu0 %v2425
      %v2427 = vand.u32 %v1619, 4294901760
      %2428 = vmatpush.msra.mxu0 %v2427
      %v2429 = vand.u32 %v1618, 4294901760
      %2430 = vmatpush.msra.mxu0 %v2429
      %v2431 = vand.u32 %v1617, 4294901760
      %2432 = vmatpush.msra.mxu0 %v2431
      %v2433 = vand.u32 %v1616, 4294901760
      %2434 = vmatpush.msra.mxu0 %v2433
      %v2435 = vand.u32 %v1615, 4294901760
      %2436 = vmatpush.msra.mxu0 %v2435
      %v2437 = vand.u32 %v1664, 4294901760
      %v2438 = vsub.f32 %v1664, %v2437
      %v2439 = vand.u32 %v2438, 4294901760
      %v2440 = vsub.f32 %v2438, %v2439
      %v2441 = vand.u32 %v2440, 4294901760
      %2442 = vmatmul.f32.gmra.mxu0 %v2441
      %v2443 = vpop.f32.mrf.mxu0
      %v2444 = vadd.f32 %v2409, %v2443
      %v2445 = vand.u32 %v1666, 4294901760
      %v2446 = vsub.f32 %v1666, %v2445
      %v2447 = vand.u32 %v2446, 4294901760
      %v2448 = vsub.f32 %v2446, %v2447
      %v2449 = vand.u32 %v2448, 4294901760
      %2450 = vmatmul.f32.gmra.mxu0 %v2449
      %v2451 = vpop.f32.mrf.mxu0
      %v2452 = vadd.f32 %v2413, %v2451
      %2453 = vdwg.mxu0
      %2454 = vmatpush.msra.mxu0 0.0
      %2455 = vmatpush.msra.mxu0 0.0
      %2456 = vmatpush.msra.mxu0 0.0
      %2457 = vmatpush.msra.mxu0 0.0
      %2458 = vmatpush.msra.mxu0 0.0
      %2459 = vmatpush.msra.mxu0 0.0
      %2460 = vmatpush.msra.mxu0 0.0
      %2461 = vmatpush.msra.mxu0 0.0
      %2462 = vmatpush.msra.mxu0 0.0
      %2463 = vmatpush.msra.mxu0 0.0
      %v2464 = vand.u32 %v1669, 4294901760
      %v2465 = vsub.f32 %v1669, %v2464
      %v2466 = vand.u32 %v2465, 4294901760
      %v2467 = vsub.f32 %v2465, %v2466
      %v2468 = vand.u32 %v2467, 4294901760
      %2469 = vmatpush.msra.mxu0 %v2468
      %v2470 = vand.u32 %v1619, 4294901760
      %v2471 = vsub.f32 %v1619, %v2470
      %v2472 = vand.u32 %v2471, 4294901760
      %v2473 = vsub.f32 %v2471, %v2472
      %v2474 = vand.u32 %v2473, 4294901760
      %2475 = vmatpush.msra.mxu0 %v2474
      %v2476 = vand.u32 %v1618, 4294901760
      %v2477 = vsub.f32 %v1618, %v2476
      %v2478 = vand.u32 %v2477, 4294901760
      %v2479 = vsub.f32 %v2477, %v2478
      %v2480 = vand.u32 %v2479, 4294901760
      %2481 = vmatpush.msra.mxu0 %v2480
      %v2482 = vand.u32 %v1617, 4294901760
      %v2483 = vsub.f32 %v1617, %v2482
      %v2484 = vand.u32 %v2483, 4294901760
      %v2485 = vsub.f32 %v2483, %v2484
      %v2486 = vand.u32 %v2485, 4294901760
      %2487 = vmatpush.msra.mxu0 %v2486
      %v2488 = vand.u32 %v1616, 4294901760
      %v2489 = vsub.f32 %v1616, %v2488
      %v2490 = vand.u32 %v2489, 4294901760
      %v2491 = vsub.f32 %v2489, %v2490
      %v2492 = vand.u32 %v2491, 4294901760
      %2493 = vmatpush.msra.mxu0 %v2492
      %v2494 = vand.u32 %v1615, 4294901760
      %v2495 = vsub.f32 %v1615, %v2494
      %v2496 = vand.u32 %v2495, 4294901760
      %v2497 = vsub.f32 %v2495, %v2496
      %v2498 = vand.u32 %v2497, 4294901760
      %2499 = vmatpush.msra.mxu0 %v2498
      %v2500 = vand.u32 %v1664, 4294901760
      %2501 = vmatmul.f32.gmra.mxu0 %v2500
      %v2502 = vpop.f32.mrf.mxu0
      %v2503 = vadd.f32 %v2444, %v2502
      %v2504 = vand.u32 %v1666, 4294901760
      %2505 = vmatmul.f32.gmra.mxu0 %v2504
      %v2506 = vpop.f32.mrf.mxu0
      %v2507 = vadd.f32 %v2452, %v2506
      %2508 = vdwg.mxu0
      %2509 = vmatpush.msra.mxu0 0.0
      %2510 = vmatpush.msra.mxu0 0.0
      %2511 = vmatpush.msra.mxu0 0.0
      %2512 = vmatpush.msra.mxu0 0.0
      %2513 = vmatpush.msra.mxu0 0.0
      %2514 = vmatpush.msra.mxu0 0.0
      %2515 = vmatpush.msra.mxu0 0.0
      %2516 = vmatpush.msra.mxu0 0.0
      %2517 = vmatpush.msra.mxu0 0.0
      %2518 = vmatpush.msra.mxu0 0.0
      %v2519 = vand.u32 %v1669, 4294901760
      %v2520 = vsub.f32 %v1669, %v2519
      %2521 = vmatpush.msra.mxu0 %v2520
      %v2522 = vand.u32 %v1619, 4294901760
      %v2523 = vsub.f32 %v1619, %v2522
      %2524 = vmatpush.msra.mxu0 %v2523
      %v2525 = vand.u32 %v1618, 4294901760
      %v2526 = vsub.f32 %v1618, %v2525
      %2527 = vmatpush.msra.mxu0 %v2526
      %v2528 = vand.u32 %v1617, 4294901760
      %v2529 = vsub.f32 %v1617, %v2528
      %2530 = vmatpush.msra.mxu0 %v2529
      %v2531 = vand.u32 %v1616, 4294901760
      %v2532 = vsub.f32 %v1616, %v2531
      %2533 = vmatpush.msra.mxu0 %v2532
      %v2534 = vand.u32 %v1615, 4294901760
      %v2535 = vsub.f32 %v1615, %v2534
      %2536 = vmatpush.msra.mxu0 %v2535
      %v2537 = vand.u32 %v1664, 4294901760
      %v2538 = vsub.f32 %v1664, %v2537
      %2539 = vmatmul.f32.gmra.mxu0 %v2538
      %v2540 = vpop.f32.mrf.mxu0
      %v2541 = vadd.f32 %v2503, %v2540
      %v2542 = vand.u32 %v1666, 4294901760
      %v2543 = vsub.f32 %v1666, %v2542
      %2544 = vmatmul.f32.gmra.mxu0 %v2543
      %v2545 = vpop.f32.mrf.mxu0
      %v2546 = vadd.f32 %v2507, %v2545
      %2547 = vdwg.mxu0
      %2548 = vmatpush.msra.mxu0 0.0
      %2549 = vmatpush.msra.mxu0 0.0
      %2550 = vmatpush.msra.mxu0 0.0
      %2551 = vmatpush.msra.mxu0 0.0
      %2552 = vmatpush.msra.mxu0 0.0
      %2553 = vmatpush.msra.mxu0 0.0
      %2554 = vmatpush.msra.mxu0 0.0
      %2555 = vmatpush.msra.mxu0 0.0
      %2556 = vmatpush.msra.mxu0 0.0
      %2557 = vmatpush.msra.mxu0 0.0
      %v2558 = vand.u32 %v1669, 4294901760
      %2559 = vmatpush.msra.mxu0 %v2558
      %v2560 = vand.u32 %v1619, 4294901760
      %2561 = vmatpush.msra.mxu0 %v2560
      %v2562 = vand.u32 %v1618, 4294901760
      %2563 = vmatpush.msra.mxu0 %v2562
      %v2564 = vand.u32 %v1617, 4294901760
      %2565 = vmatpush.msra.mxu0 %v2564
      %v2566 = vand.u32 %v1616, 4294901760
      %2567 = vmatpush.msra.mxu0 %v2566
      %v2568 = vand.u32 %v1615, 4294901760
      %2569 = vmatpush.msra.mxu0 %v2568
      %v2570 = vand.u32 %v1664, 4294901760
      %v2571 = vsub.f32 %v1664, %v2570
      %v2572 = vand.u32 %v2571, 4294901760
      %2573 = vmatmul.f32.gmra.mxu0 %v2572
      %v2574 = vpop.f32.mrf.mxu0
      %v2575 = vadd.f32 %v2541, %v2574
      %v2576 = vand.u32 %v1666, 4294901760
      %v2577 = vsub.f32 %v1666, %v2576
      %v2578 = vand.u32 %v2577, 4294901760
      %2579 = vmatmul.f32.gmra.mxu0 %v2578
      %v2580 = vpop.f32.mrf.mxu0
      %v2581 = vadd.f32 %v2546, %v2580
      %2582 = vdwg.mxu0
      %2583 = vmatpush.msra.mxu0 0.0
      %2584 = vmatpush.msra.mxu0 0.0
      %2585 = vmatpush.msra.mxu0 0.0
      %2586 = vmatpush.msra.mxu0 0.0
      %2587 = vmatpush.msra.mxu0 0.0
      %2588 = vmatpush.msra.mxu0 0.0
      %2589 = vmatpush.msra.mxu0 0.0
      %2590 = vmatpush.msra.mxu0 0.0
      %2591 = vmatpush.msra.mxu0 0.0
      %2592 = vmatpush.msra.mxu0 0.0
      %v2593 = vand.u32 %v1669, 4294901760
      %v2594 = vsub.f32 %v1669, %v2593
      %v2595 = vand.u32 %v2594, 4294901760
      %2596 = vmatpush.msra.mxu0 %v2595
      %v2597 = vand.u32 %v1619, 4294901760
      %v2598 = vsub.f32 %v1619, %v2597
      %v2599 = vand.u32 %v2598, 4294901760
      %2600 = vmatpush.msra.mxu0 %v2599
      %v2601 = vand.u32 %v1618, 4294901760
      %v2602 = vsub.f32 %v1618, %v2601
      %v2603 = vand.u32 %v2602, 4294901760
      %2604 = vmatpush.msra.mxu0 %v2603
      %v2605 = vand.u32 %v1617, 4294901760
      %v2606 = vsub.f32 %v1617, %v2605
      %v2607 = vand.u32 %v2606, 4294901760
      %2608 = vmatpush.msra.mxu0 %v2607
      %v2609 = vand.u32 %v1616, 4294901760
      %v2610 = vsub.f32 %v1616, %v2609
      %v2611 = vand.u32 %v2610, 4294901760
      %2612 = vmatpush.msra.mxu0 %v2611
      %v2613 = vand.u32 %v1615, 4294901760
      %v2614 = vsub.f32 %v1615, %v2613
      %v2615 = vand.u32 %v2614, 4294901760
      %2616 = vmatpush.msra.mxu0 %v2615
      %v2617 = vand.u32 %v1664, 4294901760
      %2618 = vmatmul.f32.gmra.mxu0 %v2617
      %v2619 = vpop.f32.mrf.mxu0
      %v2620 = vadd.f32 %v2575, %v2619
      %v2621 = vand.u32 %v1666, 4294901760
      %2622 = vmatmul.f32.gmra.mxu0 %v2621
      %v2623 = vpop.f32.mrf.mxu0
      %v2624 = vadd.f32 %v2581, %v2623
      %2625 = vdwg.mxu0
      %2626 = vmatpush.msra.mxu0 0.0
      %2627 = vmatpush.msra.mxu0 0.0
      %2628 = vmatpush.msra.mxu0 0.0
      %2629 = vmatpush.msra.mxu0 0.0
      %2630 = vmatpush.msra.mxu0 0.0
      %2631 = vmatpush.msra.mxu0 0.0
      %2632 = vmatpush.msra.mxu0 0.0
      %2633 = vmatpush.msra.mxu0 0.0
      %2634 = vmatpush.msra.mxu0 0.0
      %2635 = vmatpush.msra.mxu0 0.0
      %v2636 = vand.u32 %v1669, 4294901760
      %2637 = vmatpush.msra.mxu0 %v2636
      %v2638 = vand.u32 %v1619, 4294901760
      %2639 = vmatpush.msra.mxu0 %v2638
      %v2640 = vand.u32 %v1618, 4294901760
      %2641 = vmatpush.msra.mxu0 %v2640
      %v2642 = vand.u32 %v1617, 4294901760
      %2643 = vmatpush.msra.mxu0 %v2642
      %v2644 = vand.u32 %v1616, 4294901760
      %2645 = vmatpush.msra.mxu0 %v2644
      %v2646 = vand.u32 %v1615, 4294901760
      %2647 = vmatpush.msra.mxu0 %v2646
      %v2648 = vand.u32 %v1664, 4294901760
      %2649 = vmatmul.f32.gmra.mxu0 %v2648
      %v2650 = vpop.f32.mrf.mxu0
      %v2651 = vadd.f32 %v2620, %v2650
      %v2652 = vand.u32 %v1666, 4294901760
      %2653 = vmatmul.f32.gmra.mxu0 %v2652
      %v2654 = vpop.f32.mrf.mxu0
      %v2655 = vadd.f32 %v2624, %v2654
      %2656 = vdwg.mxu0
      %v2657 = vmax.f32 %v2651, 0.0
      %v2658 = vmax.f32 %v2655, 0.0
      %vm2659 = vcmask 416768
      %2660 = vst.msk [vmem:[#allocation3] sm:$0xff] %vm2659, 0.0
      %vm2661 = vcmask 410624
      %2662 = vst.msk [vmem:[#allocation3 + $0x8] sm:$0x3] %vm2661, 0.0
      %2665 = vrot.lane.b32.xlu0 %v2657, 8
      %v2666 = vpop.permute.xlu0 %2665
      %2667 = vrot.lane.b32.xlu0 %v2658, 8
      %v2668 = vpop.permute.xlu0 %2667
      %vm2671 = vcmask 351296
      %2672 = vst.msk [vmem:[#allocation3] sm:$0xff] %vm2671, %v2666
      %vm2673 = vcmask 345152
      %2674 = vst.msk [vmem:[#allocation3 + $0x8] sm:$0x3] %vm2673, %v2668
      %v2675 = vld [vmem:[#allocation3] sm:$0xff]
      %v2676 = vld [vmem:[#allocation3 + $0x8] sm:$0x3]
      %2679 = vrot.lane.b32.xlu0 %v2675, 120
      %v2680 = vpop.permute.xlu0 %2679
      %2681 = vrot.lane.b32.xlu0 %v2676, 120
      %v2682 = vpop.permute.xlu0 %2681
      %vm2685 = vcmask 351232
      %2686 = vst.msk [vmem:[#allocation6] sm:$0xff] %vm2685, %v2680
      %vm2687 = vcmask 345088
      %2688 = vst.msk [vmem:[#allocation6 + $0x8] sm:$0x3] %vm2687, %v2682
      %v2689 = vld [vmem:[#allocation3] sm:$0xff]
      %v2690 = vld [vmem:[#allocation3 + $0x8] sm:$0x3]
      %2693 = vrot.lane.b32.xlu0 %v2689, 121
      %v2694 = vpop.permute.xlu0 %2693
      %2695 = vrot.lane.b32.xlu0 %v2690, 121
      %v2696 = vpop.permute.xlu0 %2695
      %2699 = vst.msk [vmem:[#allocation6 + $0xa] sm:$0xff] %vm2685, %v2694
      %2700 = vst.msk [vmem:[#allocation6 + $0x12] sm:$0x3] %vm2687, %v2696
      %v2701 = vld [vmem:[#allocation3] sm:$0xff]
      %v2702 = vld [vmem:[#allocation3 + $0x8] sm:$0x3]
      %2705 = vrot.lane.b32.xlu0 %v2701, 122
      %v2706 = vpop.permute.xlu0 %2705
      %2707 = vrot.lane.b32.xlu0 %v2702, 122
      %v2708 = vpop.permute.xlu0 %2707
      %2711 = vst.msk [vmem:[#allocation6 + $0x14] sm:$0xff] %vm2685, %v2706
      %2712 = vst.msk [vmem:[#allocation6 + $0x1c] sm:$0x3] %vm2687, %v2708
      %v2713 = vld [vmem:[#allocation3] sm:$0xff]
      %v2714 = vld [vmem:[#allocation3 + $0x8] sm:$0x3]
      %2717 = vrot.lane.b32.xlu0 %v2713, 123
      %v2718 = vpop.permute.xlu0 %2717
      %2719 = vrot.lane.b32.xlu0 %v2714, 123
      %v2720 = vpop.permute.xlu0 %2719
      %2723 = vst.msk [vmem:[#allocation6 + $0x1e] sm:$0xff] %vm2685, %v2718
      %2724 = vst.msk [vmem:[#allocation6 + $0x26] sm:$0x3] %vm2687, %v2720
      %v2725 = vld [vmem:[#allocation3] sm:$0xff]
      %v2726 = vld [vmem:[#allocation3 + $0x8] sm:$0x3]
      %2729 = vrot.lane.b32.xlu0 %v2725, 124
      %v2730 = vpop.permute.xlu0 %2729
      %2731 = vrot.lane.b32.xlu0 %v2726, 124
      %v2732 = vpop.permute.xlu0 %2731
      %2735 = vst.msk [vmem:[#allocation6 + $0x28] sm:$0xff] %vm2685, %v2730
      %2736 = vst.msk [vmem:[#allocation6 + $0x30] sm:$0x3] %vm2687, %v2732
      %v2737 = vld [vmem:[#allocation3] sm:$0xff]
      %v2738 = vld [vmem:[#allocation3 + $0x8] sm:$0x3]
      %2741 = vrot.lane.b32.xlu0 %v2737, 125
      %v2742 = vpop.permute.xlu0 %2741
      %2743 = vrot.lane.b32.xlu0 %v2738, 125
      %v2744 = vpop.permute.xlu0 %2743
      %2747 = vst.msk [vmem:[#allocation6 + $0x32] sm:$0xff] %vm2685, %v2742
      %2748 = vst.msk [vmem:[#allocation6 + $0x3a] sm:$0x3] %vm2687, %v2744
      %v2749 = vld [vmem:[#allocation3] sm:$0xff]
      %v2750 = vld [vmem:[#allocation3 + $0x8] sm:$0x3]
      %2753 = vrot.lane.b32.xlu0 %v2749, 126
      %v2754 = vpop.permute.xlu0 %2753
      %2755 = vrot.lane.b32.xlu0 %v2750, 126
      %v2756 = vpop.permute.xlu0 %2755
      %2759 = vst.msk [vmem:[#allocation6 + $0x3c] sm:$0xff] %vm2685, %v2754
      %2760 = vst.msk [vmem:[#allocation6 + $0x44] sm:$0x3] %vm2687, %v2756
      %v2761 = vld [vmem:[#allocation3] sm:$0xff]
      %v2762 = vld [vmem:[#allocation3 + $0x8] sm:$0x3]
      %2765 = vrot.lane.b32.xlu0 %v2761, 127
      %v2766 = vpop.permute.xlu0 %2765
      %2767 = vrot.lane.b32.xlu0 %v2762, 127
      %v2768 = vpop.permute.xlu0 %2767
      %2771 = vst.msk [vmem:[#allocation6 + $0x46] sm:$0xff] %vm2685, %v2766
      %2772 = vst.msk [vmem:[#allocation6 + $0x4e] sm:$0x3] %vm2687, %v2768
      %v2773 = vld [vmem:[#allocation3] sm:$0xff]
      %v2774 = vld [vmem:[#allocation3 + $0x8] sm:$0x3]
      %2775 = vst.msk [vmem:[#allocation6 + $0x50] sm:$0xff] %vm2685, %v2773
      %2776 = vst.msk [vmem:[#allocation6 + $0x58] sm:$0x3] %vm2687, %v2774
      %v2777 = vld [vmem:[#allocation6] sm:$0xff]
      %v2778 = vld [vmem:[#allocation6 + $0x8] sm:$0xff]
      %v2779 = vld [vmem:[#allocation6 + $0x10] sm:$0xff]
      %v2780 = vld [vmem:[#allocation6 + $0x18] sm:$0xff]
      %v2781 = vld [vmem:[#allocation6 + $0x20] sm:$0xff]
      %v2782 = vld [vmem:[#allocation6 + $0x28] sm:$0xff]
      %v2783 = vld [vmem:[#allocation6 + $0x30] sm:$0xff]
      %v2784 = vld [vmem:[#allocation6 + $0x38] sm:$0xff]
      %v2785 = vld [vmem:[#allocation6 + $0x40] sm:$0xff]
      %v2786 = vld [vmem:[#allocation6 + $0x48] sm:$0xff]
      %v2787 = vld [vmem:[#allocation6 + $0x50] sm:$0xff]
      %v2788 = vld [vmem:[#allocation6 + $0x58] sm:$0x3]
      %2790 = vset.pattern.permute.xlu0 3
      %2791 = vperm.xlu0 %2790, %v185
      %v2792 = vpop.permute.xlu0 %2791
      %2795 = vrot.lane.b32.xlu0 %v181, 120
      %v2796 = vpop.permute.xlu0 %2795
      %vm2797 = vcmask 736256
      %v2798 = vsel %vm2797, %v2796, 0
      %vm2800 = vcmask 1041408
      %v2802 = vsel %vm2800, %v2788, 0
      %2804 = vmatpush.msra.mxu0 0.0
      %2805 = vmatpush.msra.mxu0 0.0
      %2806 = vmatpush.msra.mxu0 0.0
      %2807 = vmatpush.msra.mxu0 0.0
      %v2808 = vand.u32 %v2802, 4294901760
      %2809 = vmatpush.msra.mxu0 %v2808
      %v2810 = vand.u32 %v2787, 4294901760
      %2811 = vmatpush.msra.mxu0 %v2810
      %v2812 = vand.u32 %v2786, 4294901760
      %2813 = vmatpush.msra.mxu0 %v2812
      %v2814 = vand.u32 %v2785, 4294901760
      %2815 = vmatpush.msra.mxu0 %v2814
      %v2816 = vand.u32 %v2784, 4294901760
      %2817 = vmatpush.msra.mxu0 %v2816
      %v2818 = vand.u32 %v2783, 4294901760
      %2819 = vmatpush.msra.mxu0 %v2818
      %v2820 = vand.u32 %v2782, 4294901760
      %2821 = vmatpush.msra.mxu0 %v2820
      %v2822 = vand.u32 %v2781, 4294901760
      %2823 = vmatpush.msra.mxu0 %v2822
      %v2824 = vand.u32 %v2780, 4294901760
      %2825 = vmatpush.msra.mxu0 %v2824
      %v2826 = vand.u32 %v2779, 4294901760
      %2827 = vmatpush.msra.mxu0 %v2826
      %v2828 = vand.u32 %v2778, 4294901760
      %2829 = vmatpush.msra.mxu0 %v2828
      %v2830 = vand.u32 %v2777, 4294901760
      %2831 = vmatpush.msra.mxu0 %v2830
      %v2832 = vand.u32 %v2798, 4294901760
      %v2833 = vsub.f32 %v2798, %v2832
      %v2834 = vand.u32 %v2833, 4294901760
      %v2835 = vsub.f32 %v2833, %v2834
      %v2836 = vand.u32 %v2835, 4294901760
      %2837 = vmatmul.f32.gmra.mxu0 %v2836
      %v2838 = vpop.f32.mrf.mxu0
      %v2839 = vadd.f32 %v2792, %v2838
      %2840 = vdwg.mxu0
      %2841 = vmatpush.msra.mxu0 0.0
      %2842 = vmatpush.msra.mxu0 0.0
      %2843 = vmatpush.msra.mxu0 0.0
      %2844 = vmatpush.msra.mxu0 0.0
      %v2845 = vand.u32 %v2802, 4294901760
      %v2846 = vsub.f32 %v2802, %v2845
      %v2847 = vand.u32 %v2846, 4294901760
      %v2848 = vsub.f32 %v2846, %v2847
      %v2849 = vand.u32 %v2848, 4294901760
      %2850 = vmatpush.msra.mxu0 %v2849
      %v2851 = vand.u32 %v2787, 4294901760
      %v2852 = vsub.f32 %v2787, %v2851
      %v2853 = vand.u32 %v2852, 4294901760
      %v2854 = vsub.f32 %v2852, %v2853
      %v2855 = vand.u32 %v2854, 4294901760
      %2856 = vmatpush.msra.mxu0 %v2855
      %v2857 = vand.u32 %v2786, 4294901760
      %v2858 = vsub.f32 %v2786, %v2857
      %v2859 = vand.u32 %v2858, 4294901760
      %v2860 = vsub.f32 %v2858, %v2859
      %v2861 = vand.u32 %v2860, 4294901760
      %2862 = vmatpush.msra.mxu0 %v2861
      %v2863 = vand.u32 %v2785, 4294901760
      %v2864 = vsub.f32 %v2785, %v2863
      %v2865 = vand.u32 %v2864, 4294901760
      %v2866 = vsub.f32 %v2864, %v2865
      %v2867 = vand.u32 %v2866, 4294901760
      %2868 = vmatpush.msra.mxu0 %v2867
      %v2869 = vand.u32 %v2784, 4294901760
      %v2870 = vsub.f32 %v2784, %v2869
      %v2871 = vand.u32 %v2870, 4294901760
      %v2872 = vsub.f32 %v2870, %v2871
      %v2873 = vand.u32 %v2872, 4294901760
      %2874 = vmatpush.msra.mxu0 %v2873
      %v2875 = vand.u32 %v2783, 4294901760
      %v2876 = vsub.f32 %v2783, %v2875
      %v2877 = vand.u32 %v2876, 4294901760
      %v2878 = vsub.f32 %v2876, %v2877
      %v2879 = vand.u32 %v2878, 4294901760
      %2880 = vmatpush.msra.mxu0 %v2879
      %v2881 = vand.u32 %v2782, 4294901760
      %v2882 = vsub.f32 %v2782, %v2881
      %v2883 = vand.u32 %v2882, 4294901760
      %v2884 = vsub.f32 %v2882, %v2883
      %v2885 = vand.u32 %v2884, 4294901760
      %2886 = vmatpush.msra.mxu0 %v2885
      %v2887 = vand.u32 %v2781, 4294901760
      %v2888 = vsub.f32 %v2781, %v2887
      %v2889 = vand.u32 %v2888, 4294901760
      %v2890 = vsub.f32 %v2888, %v2889
      %v2891 = vand.u32 %v2890, 4294901760
      %2892 = vmatpush.msra.mxu0 %v2891
      %v2893 = vand.u32 %v2780, 4294901760
      %v2894 = vsub.f32 %v2780, %v2893
      %v2895 = vand.u32 %v2894, 4294901760
      %v2896 = vsub.f32 %v2894, %v2895
      %v2897 = vand.u32 %v2896, 4294901760
      %2898 = vmatpush.msra.mxu0 %v2897
      %v2899 = vand.u32 %v2779, 4294901760
      %v2900 = vsub.f32 %v2779, %v2899
      %v2901 = vand.u32 %v2900, 4294901760
      %v2902 = vsub.f32 %v2900, %v2901
      %v2903 = vand.u32 %v2902, 4294901760
      %2904 = vmatpush.msra.mxu0 %v2903
      %v2905 = vand.u32 %v2778, 4294901760
      %v2906 = vsub.f32 %v2778, %v2905
      %v2907 = vand.u32 %v2906, 4294901760
      %v2908 = vsub.f32 %v2906, %v2907
      %v2909 = vand.u32 %v2908, 4294901760
      %2910 = vmatpush.msra.mxu0 %v2909
      %v2911 = vand.u32 %v2777, 4294901760
      %v2912 = vsub.f32 %v2777, %v2911
      %v2913 = vand.u32 %v2912, 4294901760
      %v2914 = vsub.f32 %v2912, %v2913
      %v2915 = vand.u32 %v2914, 4294901760
      %2916 = vmatpush.msra.mxu0 %v2915
      %v2917 = vand.u32 %v2798, 4294901760
      %2918 = vmatmul.f32.gmra.mxu0 %v2917
      %v2919 = vpop.f32.mrf.mxu0
      %v2920 = vadd.f32 %v2839, %v2919
      %2921 = vdwg.mxu0
      %2922 = vmatpush.msra.mxu0 0.0
      %2923 = vmatpush.msra.mxu0 0.0
      %2924 = vmatpush.msra.mxu0 0.0
      %2925 = vmatpush.msra.mxu0 0.0
      %v2926 = vand.u32 %v2802, 4294901760
      %v2927 = vsub.f32 %v2802, %v2926
      %2928 = vmatpush.msra.mxu0 %v2927
      %v2929 = vand.u32 %v2787, 4294901760
      %v2930 = vsub.f32 %v2787, %v2929
      %2931 = vmatpush.msra.mxu0 %v2930
      %v2932 = vand.u32 %v2786, 4294901760
      %v2933 = vsub.f32 %v2786, %v2932
      %2934 = vmatpush.msra.mxu0 %v2933
      %v2935 = vand.u32 %v2785, 4294901760
      %v2936 = vsub.f32 %v2785, %v2935
      %2937 = vmatpush.msra.mxu0 %v2936
      %v2938 = vand.u32 %v2784, 4294901760
      %v2939 = vsub.f32 %v2784, %v2938
      %2940 = vmatpush.msra.mxu0 %v2939
      %v2941 = vand.u32 %v2783, 4294901760
      %v2942 = vsub.f32 %v2783, %v2941
      %2943 = vmatpush.msra.mxu0 %v2942
      %v2944 = vand.u32 %v2782, 4294901760
      %v2945 = vsub.f32 %v2782, %v2944
      %2946 = vmatpush.msra.mxu0 %v2945
      %v2947 = vand.u32 %v2781, 4294901760
      %v2948 = vsub.f32 %v2781, %v2947
      %2949 = vmatpush.msra.mxu0 %v2948
      %v2950 = vand.u32 %v2780, 4294901760
      %v2951 = vsub.f32 %v2780, %v2950
      %2952 = vmatpush.msra.mxu0 %v2951
      %v2953 = vand.u32 %v2779, 4294901760
      %v2954 = vsub.f32 %v2779, %v2953
      %2955 = vmatpush.msra.mxu0 %v2954
      %v2956 = vand.u32 %v2778, 4294901760
      %v2957 = vsub.f32 %v2778, %v2956
      %2958 = vmatpush.msra.mxu0 %v2957
      %v2959 = vand.u32 %v2777, 4294901760
      %v2960 = vsub.f32 %v2777, %v2959
      %2961 = vmatpush.msra.mxu0 %v2960
      %v2962 = vand.u32 %v2798, 4294901760
      %v2963 = vsub.f32 %v2798, %v2962
      %2964 = vmatmul.f32.gmra.mxu0 %v2963
      %v2965 = vpop.f32.mrf.mxu0
      %v2966 = vadd.f32 %v2920, %v2965
      %2967 = vdwg.mxu0
      %2968 = vmatpush.msra.mxu0 0.0
      %2969 = vmatpush.msra.mxu0 0.0
      %2970 = vmatpush.msra.mxu0 0.0
      %2971 = vmatpush.msra.mxu0 0.0
      %v2972 = vand.u32 %v2802, 4294901760
      %2973 = vmatpush.msra.mxu0 %v2972
      %v2974 = vand.u32 %v2787, 4294901760
      %2975 = vmatpush.msra.mxu0 %v2974
      %v2976 = vand.u32 %v2786, 4294901760
      %2977 = vmatpush.msra.mxu0 %v2976
      %v2978 = vand.u32 %v2785, 4294901760
      %2979 = vmatpush.msra.mxu0 %v2978
      %v2980 = vand.u32 %v2784, 4294901760
      %2981 = vmatpush.msra.mxu0 %v2980
      %v2982 = vand.u32 %v2783, 4294901760
      %2983 = vmatpush.msra.mxu0 %v2982
      %v2984 = vand.u32 %v2782, 4294901760
      %2985 = vmatpush.msra.mxu0 %v2984
      %v2986 = vand.u32 %v2781, 4294901760
      %2987 = vmatpush.msra.mxu0 %v2986
      %v2988 = vand.u32 %v2780, 4294901760
      %2989 = vmatpush.msra.mxu0 %v2988
      %v2990 = vand.u32 %v2779, 4294901760
      %2991 = vmatpush.msra.mxu0 %v2990
      %v2992 = vand.u32 %v2778, 4294901760
      %2993 = vmatpush.msra.mxu0 %v2992
      %v2994 = vand.u32 %v2777, 4294901760
      %2995 = vmatpush.msra.mxu0 %v2994
      %v2996 = vand.u32 %v2798, 4294901760
      %v2997 = vsub.f32 %v2798, %v2996
      %v2998 = vand.u32 %v2997, 4294901760
      %2999 = vmatmul.f32.gmra.mxu0 %v2998
      %v3000 = vpop.f32.mrf.mxu0
      %v3001 = vadd.f32 %v2966, %v3000
      %3002 = vdwg.mxu0
      %3003 = vmatpush.msra.mxu0 0.0
      %3004 = vmatpush.msra.mxu0 0.0
      %3005 = vmatpush.msra.mxu0 0.0
      %3006 = vmatpush.msra.mxu0 0.0
      %v3007 = vand.u32 %v2802, 4294901760
      %v3008 = vsub.f32 %v2802, %v3007
      %v3009 = vand.u32 %v3008, 4294901760
      %3010 = vmatpush.msra.mxu0 %v3009
      %v3011 = vand.u32 %v2787, 4294901760
      %v3012 = vsub.f32 %v2787, %v3011
      %v3013 = vand.u32 %v3012, 4294901760
      %3014 = vmatpush.msra.mxu0 %v3013
      %v3015 = vand.u32 %v2786, 4294901760
      %v3016 = vsub.f32 %v2786, %v3015
      %v3017 = vand.u32 %v3016, 4294901760
      %3018 = vmatpush.msra.mxu0 %v3017
      %v3019 = vand.u32 %v2785, 4294901760
      %v3020 = vsub.f32 %v2785, %v3019
      %v3021 = vand.u32 %v3020, 4294901760
      %3022 = vmatpush.msra.mxu0 %v3021
      %v3023 = vand.u32 %v2784, 4294901760
      %v3024 = vsub.f32 %v2784, %v3023
      %v3025 = vand.u32 %v3024, 4294901760
      %3026 = vmatpush.msra.mxu0 %v3025
      %v3027 = vand.u32 %v2783, 4294901760
      %v3028 = vsub.f32 %v2783, %v3027
      %v3029 = vand.u32 %v3028, 4294901760
      %3030 = vmatpush.msra.mxu0 %v3029
      %v3031 = vand.u32 %v2782, 4294901760
      %v3032 = vsub.f32 %v2782, %v3031
      %v3033 = vand.u32 %v3032, 4294901760
      %3034 = vmatpush.msra.mxu0 %v3033
      %v3035 = vand.u32 %v2781, 4294901760
      %v3036 = vsub.f32 %v2781, %v3035
      %v3037 = vand.u32 %v3036, 4294901760
      %3038 = vmatpush.msra.mxu0 %v3037
      %v3039 = vand.u32 %v2780, 4294901760
      %v3040 = vsub.f32 %v2780, %v3039
      %v3041 = vand.u32 %v3040, 4294901760
      %3042 = vmatpush.msra.mxu0 %v3041
      %v3043 = vand.u32 %v2779, 4294901760
      %v3044 = vsub.f32 %v2779, %v3043
      %v3045 = vand.u32 %v3044, 4294901760
      %3046 = vmatpush.msra.mxu0 %v3045
      %v3047 = vand.u32 %v2778, 4294901760
      %v3048 = vsub.f32 %v2778, %v3047
      %v3049 = vand.u32 %v3048, 4294901760
      %3050 = vmatpush.msra.mxu0 %v3049
      %v3051 = vand.u32 %v2777, 4294901760
      %v3052 = vsub.f32 %v2777, %v3051
      %v3053 = vand.u32 %v3052, 4294901760
      %3054 = vmatpush.msra.mxu0 %v3053
      %v3055 = vand.u32 %v2798, 4294901760
      %3056 = vmatmul.f32.gmra.mxu0 %v3055
      %v3057 = vpop.f32.mrf.mxu0
      %v3058 = vadd.f32 %v3001, %v3057
      %3059 = vdwg.mxu0
      %3060 = vmatpush.msra.mxu0 0.0
      %3061 = vmatpush.msra.mxu0 0.0
      %3062 = vmatpush.msra.mxu0 0.0
      %3063 = vmatpush.msra.mxu0 0.0
      %v3064 = vand.u32 %v2802, 4294901760
      %3065 = vmatpush.msra.mxu0 %v3064
      %v3066 = vand.u32 %v2787, 4294901760
      %3067 = vmatpush.msra.mxu0 %v3066
      %v3068 = vand.u32 %v2786, 4294901760
      %3069 = vmatpush.msra.mxu0 %v3068
      %v3070 = vand.u32 %v2785, 4294901760
      %3071 = vmatpush.msra.mxu0 %v3070
      %v3072 = vand.u32 %v2784, 4294901760
      %3073 = vmatpush.msra.mxu0 %v3072
      %v3074 = vand.u32 %v2783, 4294901760
      %3075 = vmatpush.msra.mxu0 %v3074
      %v3076 = vand.u32 %v2782, 4294901760
      %3077 = vmatpush.msra.mxu0 %v3076
      %v3078 = vand.u32 %v2781, 4294901760
      %3079 = vmatpush.msra.mxu0 %v3078
      %v3080 = vand.u32 %v2780, 4294901760
      %3081 = vmatpush.msra.mxu0 %v3080
      %v3082 = vand.u32 %v2779, 4294901760
      %3083 = vmatpush.msra.mxu0 %v3082
      %v3084 = vand.u32 %v2778, 4294901760
      %3085 = vmatpush.msra.mxu0 %v3084
      %v3086 = vand.u32 %v2777, 4294901760
      %3087 = vmatpush.msra.mxu0 %v3086
      %v3088 = vand.u32 %v2798, 4294901760
      %3089 = vmatmul.f32.gmra.mxu0 %v3088
      %v3090 = vpop.f32.mrf.mxu0
      %v3091 = vadd.f32 %v3058, %v3090
      %3092 = vdwg.mxu0
      %v3093 = vtanh.pop %v3091
      %vm3094 = vcmask 346112
      %3095 = vst.msk [vmem:[%s168] sm:$0x7] %vm3094, %v3093
      %p3096 = scmp.lt.s32.totalorder %s14, 1
      %s3097 = scalar_select %p3096, %s14, 1
      %s3098 = smul.addr %s3097, 4
      %s3099 = scalar_lea.vmem %s3, %s3098
      // Predicated region
      $region33: #{ae_forward.1} parent=31 // pred_check
        %p3100 = pneg %p100
      $region34: #{ae_forward.1} parent=31 // pred_check_branch
        %3102 = sbr.rel (%p3100) target = $region36
      $region35: #{ae_forward.1} parent=31 // pred_region
        _
      $region36: #{ae_forward.1} parent=31 // pred_fallthru
        _
    $region32: #{ae_forward.1} parent=5 // pred_fallthru
      _
    %p3103 = scmp.le.s32.totalorder 2, %s9
    // Predicated region
    $region37: #{ae_forward.1} parent=5 // pred_check
      %p3104 = pneg %p3103
    $region38: #{ae_forward.1} parent=5 // pred_check_branch
      %3106 = sbr.rel (%p3104) target = $region40
    $region39: #{ae_forward.1} parent=5 // pred_region
      %s3107 = ssub.s32 %s9, 2
      // Predicated region
      $region41: #{ae_forward.1} parent=39 // pred_check
        %p3108 = pneg %p106
      $region42: #{ae_forward.1} parent=39 // pred_check_branch
        %3110 = sbr.rel (%p3108) target = $region44
      $region43: #{ae_forward.1} parent=39 // pred_region
        %p3111 = scmp.lt.s32.totalorder %s15, 1
        %s3112 = scalar_select %p3111, %s15, 1
        %s3113 = smul.addr %s3112, 4
        %s3114 = scalar_lea.vmem %s3, %s3113
      $region44: #{ae_forward.1} parent=39 // pred_fallthru
        _
    $region40: #{ae_forward.1} parent=5 // pred_fallthru
      _
  $region6: #{ae_forward.1} parent=0 // loop_footer
    %s13 = sadd.s32 1, %s9
  $region7: #{ae_forward.1} parent=0 // loop_footer_branch
    %8 = sbr.rel target = $region3
  $region8: #{ae_forward.1} parent=0 // loop_exit
    _

</llo_original>
